<compile_context>
chip_gen: v7x
topology: tpu7x:2x2x1
jax: 0.10.0
libtpu: 0.0.40
codegen_flags: <defaults>
</compile_context>

<pallas_src>
import jax
import jax.numpy as jnp
from jax import lax
from jax.experimental import pallas as pl
from jax.experimental.pallas import tpu as pltpu


_SQRT_2_OVER_PI = 0.7978845608028654
_VMEM_LIMIT = 32 * 1024 * 1024


def _gelu_f32(y):
    # tanh-approx GELU: 0.5*x*(1+tanh(sqrt(2/pi)*(x+0.044715*x^3)))
    return 0.5 * y * (1.0 + jnp.tanh(_SQRT_2_OVER_PI * (y + 0.044715 * y * y * y)))


# ----------------------------------------------------------------------------
# Fused Conv2d(3x3, pad=1) + bias + GELU kernels (im2col built in VMEM)
# ----------------------------------------------------------------------------
def _conv_s1_kernel(x_ref, w_ref, b_ref, o_ref):
    """stride=1.  x_ref: (1, H+2, W+2, Cin)  w_ref: (9, Cin, Cout)
    b_ref: (1, Cout) f32  o_ref: (1, Ho, Wo, Cout) bf16."""
    Ho, Wo = o_ref.shape[1], o_ref.shape[2]
    bias = b_ref[...]                                     # (1, Cout) f32

    @pl.loop(0, Ho)
    def _(oy):
        acc = None
        for dy in range(3):
            for dx in range(3):
                patch = x_ref[0, oy + dy, pl.ds(dx, Wo), :]          # (Wo, Cin)
                p = jnp.dot(patch, w_ref[3 * dy + dx],
                            preferred_element_type=jnp.float32)      # (Wo, Cout) f32
                acc = p if acc is None else acc + p
        o_ref[0, oy] = _gelu_f32(acc + bias).astype(o_ref.dtype)


def _conv_s2_kernel(xe_ref, xo_ref, w_ref, b_ref, o_ref):
    """stride=2.  xe_ref/xo_ref: even/odd padded columns, (1, H+2, W//2+1, Cin)."""
    Ho, Wo = o_ref.shape[1], o_ref.shape[2]
    bias = b_ref[...]                                     # (1, Cout) f32

    @pl.loop(0, Ho)
    def _(oy):
        acc = None
        for dy in range(3):
            for dx in range(3):
                # padded column 2*ox + dx  ->  even phase (dx=0,2) / odd phase (dx=1)
                src = xo_ref if dx == 1 else xe_ref
                off = 1 if dx == 2 else 0
                patch = src[0, 2 * oy + dy, pl.ds(off, Wo), :]       # (Wo, Cin)
                p = jnp.dot(patch, w_ref[3 * dy + dx],
                            preferred_element_type=jnp.float32)      # (Wo, Cout) f32
                acc = p if acc is None else acc + p
        o_ref[0, oy] = _gelu_f32(acc + bias).astype(o_ref.dtype)


def conv3x3_gelu(x, w, b, *, stride):
    """GELU(conv2d(x, w, stride, pad=1) + b).  x: (B,H,W,Cin) bf16 NHWC,
    w: (3,3,Cin,Cout), b: (Cout,).  Returns (B,Ho,Wo,Cout) bf16."""
    assert stride in (1, 2)
    B, H, W, Cin = x.shape
    kh, kw, cin_w, Cout = w.shape
    assert (kh, kw) == (3, 3) and cin_w == Cin
    Ho = (H - 1) // stride + 1
    Wo = (W - 1) // stride + 1

    # Pad Cin to a sublane multiple (folded into the same pad op as the halo);
    # only layer 1 (Cin=3) is affected and the extra channels are zero.
    cpad = (-Cin) % 8
    Cin_p = Cin + cpad
    xp = jnp.pad(x, ((0, 0), (1, 1), (1, 1), (0, cpad)))          # (B,H+2,W+2,Cin_p)
    if cpad:
        w = jnp.pad(w, ((0, 0), (0, 0), (0, cpad), (0, 0)))
    wt = w.reshape(9, Cin_p, Cout).astype(jnp.bfloat16)           # tap-major
    bb = b.astype(jnp.float32).reshape(1, Cout)

    cparams = pltpu.CompilerParams(dimension_semantics=("parallel",),
                                   vmem_limit_bytes=_VMEM_LIMIT)
    out_shape = jax.ShapeDtypeStruct((B, Ho, Wo, Cout), jnp.bfloat16)
    out_spec = pl.BlockSpec((1, Ho, Wo, Cout), lambda b_: (b_, 0, 0, 0))
    w_spec = pl.BlockSpec((9, Cin_p, Cout), lambda b_: (0, 0, 0))
    b_spec = pl.BlockSpec((1, Cout), lambda b_: (0, 0))

    if stride == 1:
        return pl.pallas_call(
            _conv_s1_kernel,
            out_shape=out_shape,
            grid_spec=pltpu.PrefetchScalarGridSpec(
                num_scalar_prefetch=0, grid=(B,),
                in_specs=[
                    pl.BlockSpec((1, H + 2, W + 2, Cin_p), lambda b_: (b_, 0, 0, 0)),
                    w_spec, b_spec,
                ],
                out_specs=out_spec),
            compiler_params=cparams,
        )(xp, wt, bb)

    # stride == 2: split padded columns into even / odd phases once in HBM so
    # every in-kernel tap slice is a contiguous window.
    assert H % 2 == 0 and W % 2 == 0, "stride-2 layers expect even spatial dims"
    xe = xp[:, :, 0::2, :]                                        # (B,H+2,W//2+1,Cin_p)
    xo = xp[:, :, 1::2, :]                                        # (B,H+2,W//2+1,Cin_p)
    Wp2 = xe.shape[2]
    return pl.pallas_call(
        _conv_s2_kernel,
        out_shape=out_shape,
        grid_spec=pltpu.PrefetchScalarGridSpec(
            num_scalar_prefetch=0, grid=(B,),
            in_specs=[
                pl.BlockSpec((1, H + 2, Wp2, Cin_p), lambda b_: (b_, 0, 0, 0)),
                pl.BlockSpec((1, H + 2, Wp2, Cin_p), lambda b_: (b_, 0, 0, 0)),
                w_spec, b_spec,
            ],
            out_specs=out_spec),
        compiler_params=cparams,
    )(xe, xo, wt, bb)


# ----------------------------------------------------------------------------
# proj_head: Linear (no activation), no M/N/K padding, K-tiled only if large
# ----------------------------------------------------------------------------
def _linear_single_kernel(x_ref, w_ref, b_ref, o_ref):
    o_ref[...] = b_ref[...] + jnp.dot(x_ref[...], w_ref[...],
                                      preferred_element_type=jnp.float32)


def _linear_accum_kernel(x_ref, w_ref, b_ref, o_ref):
    k = pl.program_id(0)
    part = jnp.dot(x_ref[...], w_ref[...], preferred_element_type=jnp.float32)

    @pl.when(k == 0)
    def _():
        o_ref[...] = b_ref[...] + part

    @pl.when(k != 0)
    def _():
        o_ref[...] = o_ref[...] + part


def linear(x, w, b):
    """x @ w + b.  x: (M,K), w: (K,N), b: (N,).  Output f32 (M,N)."""
    M, K = x.shape
    K2, N = w.shape
    assert K == K2
    if K % 128 == 0 and K > 1024:
        tk = next(t for t in (512, 256, 128) if K % t == 0)
    else:
        tk = K                      # small / ragged K: single full-extent block
    nk = K // tk

    xb = x.astype(jnp.bfloat16)
    wb = w.astype(jnp.bfloat16)
    bb = b.astype(jnp.float32).reshape(1, N)

    kernel = _linear_single_kernel if nk == 1 else _linear_accum_kernel
    return pl.pallas_call(
        kernel,
        out_shape=jax.ShapeDtypeStruct((M, N), jnp.float32),
        grid_spec=pltpu.PrefetchScalarGridSpec(
            num_scalar_prefetch=0, grid=(nk,),
            in_specs=[
                pl.BlockSpec((M, tk), lambda k: (0, k)),
                pl.BlockSpec((tk, N), lambda k: (k, 0)),
                pl.BlockSpec((1, N), lambda k: (0, 0)),
            ],
            out_specs=pl.BlockSpec((M, N), lambda k: (0, 0))),
        compiler_params=pltpu.CompilerParams(
            dimension_semantics=("arbitrary",),
            vmem_limit_bytes=_VMEM_LIMIT),
    )(xb, wb, bb)


# ----------------------------------------------------------------------------
# DeepEncoder forward
# ----------------------------------------------------------------------------
def deep_encoder(x_nchw, params):
    """x_nchw: (B, Cin, H, W) f32.  Returns (B, latent_dim) f32."""
    # Single layout change: NCHW -> NHWC (channels-last for the whole net).
    x = jnp.transpose(x_nchw, (0, 2, 3, 1)).astype(jnp.bfloat16)

    h = conv3x3_gelu(x, params["w1"], params["b1"], stride=2)
    h = conv3x3_gelu(h, params["w2"], params["b2"], stride=1)
    h = conv3x3_gelu(h, params["w3"], params["b3"], stride=2)
    h = conv3x3_gelu(h, params["w4"], params["b4"], stride=1)
    h = conv3x3_gelu(h, params["w5"], params["b5"], stride=2)

    flat = h.reshape(h.shape[0], -1)          # channels-last flatten (see init_params)
    return linear(flat, params["w_proj"], params["b_proj"])


# ----------------------------------------------------------------------------
# Parameters (deterministic synthetic weights matching the module's shapes)
# ----------------------------------------------------------------------------
def _conv_out(n, stride):
    return (n - 1) // stride + 1


def init_params(key, num_input_channels, c_hid, latent_dim, H, W):
    """Conv weights are HWIO (3,3,Cin,Cout) bf16; the proj-head weight is laid
    out for the channels-last flatten (a fixed permutation of PyTorch's NCHW
    Flatten + Linear — forward semantics are identical)."""
    h, w = H, W
    for s in (2, 1, 2, 1, 2):
        h, w = _conv_out(h, s), _conv_out(w, s)
    flat_dim = 2 * c_hid * h * w     # the module hard-codes 102400 for its
                                     # training resolution; computed here.
    ks = jax.random.split(key, 12)

    def conv_w(k, cin, cout):
        return (jax.random.normal(k, (3, 3, cin, cout), jnp.float32)
                / ((9 * cin) ** 0.5)).astype(jnp.bfloat16)

    def bias(k, cout):
        return jax.random.normal(k, (cout,), jnp.float32) * 0.1

    c2 = 2 * c_hid
    return {
        "w1": conv_w(ks[0], num_input_channels, c_hid), "b1": bias(ks[1], c_hid),
        "w2": conv_w(ks[2], c_hid, c_hid),              "b2": bias(ks[3], c_hid),
        "w3": conv_w(ks[4], c_hid, c2),                 "b3": bias(ks[5], c2),
        "w4": conv_w(ks[6], c2, c2),                    "b4": bias(ks[7], c2),
        "w5": conv_w(ks[8], c2, c2),                    "b5": bias(ks[9], c2),
        "w_proj": (jax.random.normal(ks[10], (flat_dim, latent_dim), jnp.float32)
                   / (flat_dim ** 0.5)).astype(jnp.bfloat16),
        "b_proj": jax.random.normal(ks[11], (latent_dim,), jnp.float32) * 0.1,
    }


# ----------------------------------------------------------------------------
# Pure-JAX f32 reference mirroring the PyTorch forward
# ----------------------------------------------------------------------------
def deep_encoder_reference(x_nchw, params):
    x = jnp.transpose(x_nchw, (0, 2, 3, 1)).astype(jnp.float32)

    def conv(h, w, b, stride):
        y = lax.conv_general_dilated(
            h, w.astype(jnp.float32), (stride, stride), ((1, 1), (1, 1)),
            dimension_numbers=("NHWC", "HWIO", "NHWC"))
        return jax.nn.gelu(y + b, approximate=True)

    h = conv(x, params["w1"], params["b1"], 2)
    h = conv(h, params["w2"], params["b2"], 1)
    h = conv(h, params["w3"], params["b3"], 2)
    h = conv(h, params["w4"], params["b4"], 1)
    h = conv(h, params["w5"], params["b5"], 2)
    flat = h.reshape(h.shape[0], -1)
    return flat @ params["w_proj"].astype(jnp.float32) + params["b_proj"]


# ----------------------------------------------------------------------------
if __name__ == "__main__":
    B, Cin, H, W = 2, 3, 16, 16
    c_hid, latent_dim = 8, 32

    key = jax.random.PRNGKey(0)
    kx, kp = jax.random.split(key)
    x = jax.random.normal(kx, (B, Cin, H, W), jnp.float32)
    params = init_params(kp, Cin, c_hid, latent_dim, H, W)

    out = jax.jit(deep_encoder)(x, params)
    out = jax.block_until_ready(out)

    ref = deep_encoder_reference(x, params)
    assert out.shape == (B, latent_dim)
    # bf16 matmul inputs / bf16 intermediate activations vs. the f32 reference.
    assert jnp.allclose(out, ref, atol=5e-2, rtol=5e-2), (
        "mismatch vs reference: max abs err = "
        f"{float(jnp.max(jnp.abs(out - ref)))}")

    print("KERNEL_OK")
</pallas_src>

<mosaic_0001>
module attributes {stable_mosaic.version = 11 : i64} {
  func.func @_conv_s1_kernel(%arg0: i32, %arg1: memref<1x10x10x8xbf16, #tpu.memory_space<vmem>>, %arg2: memref<9x8x8xbf16, #tpu.memory_space<vmem>>, %arg3: memref<1x8xf32, #tpu.memory_space<vmem>>, %arg4: memref<1x8x8x8xbf16, #tpu.memory_space<vmem>>) attributes {dimension_semantics = [#tpu.dimension_semantics<parallel>], iteration_bounds = array<i64: 2>, scalar_prefetch = 0 : i64, scratch_operands = 0 : i64, tpu.core_type = #tpu.core_type<tc>, window_params = [{transform_indices = @transform_0, window_bounds = array<i64: 1, 10, 10, 8>}, {pipeline_mode = #tpu.pipeline_mode<synchronous>, transform_indices = @transform_1, window_bounds = array<i64: 9, 8, 8>}, {pipeline_mode = #tpu.pipeline_mode<synchronous>, transform_indices = @transform_2, window_bounds = array<i64: 1, 8>}, {transform_indices = @transform_3, window_bounds = array<i64: 1, 8, 8, 8>}]} {
    %c0 = arith.constant 0 : index
    %c0_0 = arith.constant 0 : index
    %0 = vector.load %arg3[%c0, %c0_0] : memref<1x8xf32, #tpu.memory_space<vmem>>, vector<1x8xf32>
    %c0_i32 = arith.constant 0 : i32
    %c8_i32 = arith.constant 8 : i32
    %1 = arith.addi %c0_i32, %c8_i32 : i32
    %c1_i32 = arith.constant 1 : i32
    scf.for %arg5 = %c0_i32 to %1 step %c1_i32  : i32 {
      %c1_i32_2 = arith.constant 1 : i32
      %2 = arith.muli %arg5, %c1_i32_2 : i32
      %c0_i32_3 = arith.constant 0 : i32
      %3 = arith.addi %c0_i32_3, %2 : i32
      %c0_i32_4 = arith.constant 0 : i32
      %4 = arith.addi %3, %c0_i32_4 : i32
      %c0_5 = arith.constant 0 : index
      %5 = arith.index_cast %4 : i32 to index
      %c0_6 = arith.constant 0 : index
      %c0_7 = arith.constant 0 : index
      %6 = vector.load %arg1[%c0_5, %5, %c0_6, %c0_7] : memref<1x10x10x8xbf16, #tpu.memory_space<vmem>>, vector<1x1x8x8xbf16>
      %7 = vector.shape_cast %6 : vector<1x1x8x8xbf16> to vector<8x8xbf16>
      %c0_8 = arith.constant 0 : index
      %c0_9 = arith.constant 0 : index
      %c0_10 = arith.constant 0 : index
      %8 = vector.load %arg2[%c0_8, %c0_9, %c0_10] : memref<9x8x8xbf16, #tpu.memory_space<vmem>>, vector<1x8x8xbf16>
      %9 = vector.shape_cast %8 : vector<1x8x8xbf16> to vector<8x8xbf16>
      %cst = arith.constant dense<0.000000e+00> : vector<8x8xf32>
      %10 = tpu.matmul %7, %9, %cst {dimension_numbers = #tpu.dot_dimension_numbers<[1], [0], [0], [1], [0, 0, 1, 1], [], []>} : vector<8x8xbf16>, vector<8x8xbf16>, vector<8x8xf32> -> vector<8x8xf32>
      %c0_i32_11 = arith.constant 0 : i32
      %11 = arith.addi %3, %c0_i32_11 : i32
      %c0_12 = arith.constant 0 : index
      %12 = arith.index_cast %11 : i32 to index
      %c1 = arith.constant 1 : index
      %c0_13 = arith.constant 0 : index
      %13 = vector.load %arg1[%c0_12, %12, %c1, %c0_13] : memref<1x10x10x8xbf16, #tpu.memory_space<vmem>>, vector<1x1x8x8xbf16>
      %14 = vector.shape_cast %13 : vector<1x1x8x8xbf16> to vector<8x8xbf16>
      %c1_14 = arith.constant 1 : index
      %c0_15 = arith.constant 0 : index
      %c0_16 = arith.constant 0 : index
      %15 = vector.load %arg2[%c1_14, %c0_15, %c0_16] : memref<9x8x8xbf16, #tpu.memory_space<vmem>>, vector<1x8x8xbf16>
      %16 = vector.shape_cast %15 : vector<1x8x8xbf16> to vector<8x8xbf16>
      %cst_17 = arith.constant dense<0.000000e+00> : vector<8x8xf32>
      %17 = tpu.matmul %14, %16, %cst_17 {dimension_numbers = #tpu.dot_dimension_numbers<[1], [0], [0], [1], [0, 0, 1, 1], [], []>} : vector<8x8xbf16>, vector<8x8xbf16>, vector<8x8xf32> -> vector<8x8xf32>
      %18 = arith.addf %10, %17 : vector<8x8xf32>
      %c0_i32_18 = arith.constant 0 : i32
      %19 = arith.addi %3, %c0_i32_18 : i32
      %c0_19 = arith.constant 0 : index
      %20 = arith.index_cast %19 : i32 to index
      %c2 = arith.constant 2 : index
      %c0_20 = arith.constant 0 : index
      %21 = vector.load %arg1[%c0_19, %20, %c2, %c0_20] : memref<1x10x10x8xbf16, #tpu.memory_space<vmem>>, vector<1x1x8x8xbf16>
      %22 = vector.shape_cast %21 : vector<1x1x8x8xbf16> to vector<8x8xbf16>
      %c2_21 = arith.constant 2 : index
      %c0_22 = arith.constant 0 : index
      %c0_23 = arith.constant 0 : index
      %23 = vector.load %arg2[%c2_21, %c0_22, %c0_23] : memref<9x8x8xbf16, #tpu.memory_space<vmem>>, vector<1x8x8xbf16>
      %24 = vector.shape_cast %23 : vector<1x8x8xbf16> to vector<8x8xbf16>
      %cst_24 = arith.constant dense<0.000000e+00> : vector<8x8xf32>
      %25 = tpu.matmul %22, %24, %cst_24 {dimension_numbers = #tpu.dot_dimension_numbers<[1], [0], [0], [1], [0, 0, 1, 1], [], []>} : vector<8x8xbf16>, vector<8x8xbf16>, vector<8x8xf32> -> vector<8x8xf32>
      %26 = arith.addf %18, %25 : vector<8x8xf32>
      %c1_i32_25 = arith.constant 1 : i32
      %27 = arith.addi %3, %c1_i32_25 : i32
      %c0_26 = arith.constant 0 : index
      %28 = arith.index_cast %27 : i32 to index
      %c0_27 = arith.constant 0 : index
      %c0_28 = arith.constant 0 : index
      %29 = vector.load %arg1[%c0_26, %28, %c0_27, %c0_28] : memref<1x10x10x8xbf16, #tpu.memory_space<vmem>>, vector<1x1x8x8xbf16>
      %30 = vector.shape_cast %29 : vector<1x1x8x8xbf16> to vector<8x8xbf16>
      %c3 = arith.constant 3 : index
      %c0_29 = arith.constant 0 : index
      %c0_30 = arith.constant 0 : index
      %31 = vector.load %arg2[%c3, %c0_29, %c0_30] : memref<9x8x8xbf16, #tpu.memory_space<vmem>>, vector<1x8x8xbf16>
      %32 = vector.shape_cast %31 : vector<1x8x8xbf16> to vector<8x8xbf16>
      %cst_31 = arith.constant dense<0.000000e+00> : vector<8x8xf32>
      %33 = tpu.matmul %30, %32, %cst_31 {dimension_numbers = #tpu.dot_dimension_numbers<[1], [0], [0], [1], [0, 0, 1, 1], [], []>} : vector<8x8xbf16>, vector<8x8xbf16>, vector<8x8xf32> -> vector<8x8xf32>
      %34 = arith.addf %26, %33 : vector<8x8xf32>
      %c1_i32_32 = arith.constant 1 : i32
      %35 = arith.addi %3, %c1_i32_32 : i32
      %c0_33 = arith.constant 0 : index
      %36 = arith.index_cast %35 : i32 to index
      %c1_34 = arith.constant 1 : index
      %c0_35 = arith.constant 0 : index
      %37 = vector.load %arg1[%c0_33, %36, %c1_34, %c0_35] : memref<1x10x10x8xbf16, #tpu.memory_space<vmem>>, vector<1x1x8x8xbf16>
      %38 = vector.shape_cast %37 : vector<1x1x8x8xbf16> to vector<8x8xbf16>
      %c4 = arith.constant 4 : index
      %c0_36 = arith.constant 0 : index
      %c0_37 = arith.constant 0 : index
      %39 = vector.load %arg2[%c4, %c0_36, %c0_37] : memref<9x8x8xbf16, #tpu.memory_space<vmem>>, vector<1x8x8xbf16>
      %40 = vector.shape_cast %39 : vector<1x8x8xbf16> to vector<8x8xbf16>
      %cst_38 = arith.constant dense<0.000000e+00> : vector<8x8xf32>
      %41 = tpu.matmul %38, %40, %cst_38 {dimension_numbers = #tpu.dot_dimension_numbers<[1], [0], [0], [1], [0, 0, 1, 1], [], []>} : vector<8x8xbf16>, vector<8x8xbf16>, vector<8x8xf32> -> vector<8x8xf32>
      %42 = arith.addf %34, %41 : vector<8x8xf32>
      %c1_i32_39 = arith.constant 1 : i32
      %43 = arith.addi %3, %c1_i32_39 : i32
      %c0_40 = arith.constant 0 : index
      %44 = arith.index_cast %43 : i32 to index
      %c2_41 = arith.constant 2 : index
      %c0_42 = arith.constant 0 : index
      %45 = vector.load %arg1[%c0_40, %44, %c2_41, %c0_42] : memref<1x10x10x8xbf16, #tpu.memory_space<vmem>>, vector<1x1x8x8xbf16>
      %46 = vector.shape_cast %45 : vector<1x1x8x8xbf16> to vector<8x8xbf16>
      %c5 = arith.constant 5 : index
      %c0_43 = arith.constant 0 : index
      %c0_44 = arith.constant 0 : index
      %47 = vector.load %arg2[%c5, %c0_43, %c0_44] : memref<9x8x8xbf16, #tpu.memory_space<vmem>>, vector<1x8x8xbf16>
      %48 = vector.shape_cast %47 : vector<1x8x8xbf16> to vector<8x8xbf16>
      %cst_45 = arith.constant dense<0.000000e+00> : vector<8x8xf32>
      %49 = tpu.matmul %46, %48, %cst_45 {dimension_numbers = #tpu.dot_dimension_numbers<[1], [0], [0], [1], [0, 0, 1, 1], [], []>} : vector<8x8xbf16>, vector<8x8xbf16>, vector<8x8xf32> -> vector<8x8xf32>
      %50 = arith.addf %42, %49 : vector<8x8xf32>
      %c2_i32 = arith.constant 2 : i32
      %51 = arith.addi %3, %c2_i32 : i32
      %c0_46 = arith.constant 0 : index
      %52 = arith.index_cast %51 : i32 to index
      %c0_47 = arith.constant 0 : index
      %c0_48 = arith.constant 0 : index
      %53 = vector.load %arg1[%c0_46, %52, %c0_47, %c0_48] : memref<1x10x10x8xbf16, #tpu.memory_space<vmem>>, vector<1x1x8x8xbf16>
      %54 = vector.shape_cast %53 : vector<1x1x8x8xbf16> to vector<8x8xbf16>
      %c6 = arith.constant 6 : index
      %c0_49 = arith.constant 0 : index
      %c0_50 = arith.constant 0 : index
      %55 = vector.load %arg2[%c6, %c0_49, %c0_50] : memref<9x8x8xbf16, #tpu.memory_space<vmem>>, vector<1x8x8xbf16>
      %56 = vector.shape_cast %55 : vector<1x8x8xbf16> to vector<8x8xbf16>
      %cst_51 = arith.constant dense<0.000000e+00> : vector<8x8xf32>
      %57 = tpu.matmul %54, %56, %cst_51 {dimension_numbers = #tpu.dot_dimension_numbers<[1], [0], [0], [1], [0, 0, 1, 1], [], []>} : vector<8x8xbf16>, vector<8x8xbf16>, vector<8x8xf32> -> vector<8x8xf32>
      %58 = arith.addf %50, %57 : vector<8x8xf32>
      %c2_i32_52 = arith.constant 2 : i32
      %59 = arith.addi %3, %c2_i32_52 : i32
      %c0_53 = arith.constant 0 : index
      %60 = arith.index_cast %59 : i32 to index
      %c1_54 = arith.constant 1 : index
      %c0_55 = arith.constant 0 : index
      %61 = vector.load %arg1[%c0_53, %60, %c1_54, %c0_55] : memref<1x10x10x8xbf16, #tpu.memory_space<vmem>>, vector<1x1x8x8xbf16>
      %62 = vector.shape_cast %61 : vector<1x1x8x8xbf16> to vector<8x8xbf16>
      %c7 = arith.constant 7 : index
      %c0_56 = arith.constant 0 : index
      %c0_57 = arith.constant 0 : index
      %63 = vector.load %arg2[%c7, %c0_56, %c0_57] : memref<9x8x8xbf16, #tpu.memory_space<vmem>>, vector<1x8x8xbf16>
      %64 = vector.shape_cast %63 : vector<1x8x8xbf16> to vector<8x8xbf16>
      %cst_58 = arith.constant dense<0.000000e+00> : vector<8x8xf32>
      %65 = tpu.matmul %62, %64, %cst_58 {dimension_numbers = #tpu.dot_dimension_numbers<[1], [0], [0], [1], [0, 0, 1, 1], [], []>} : vector<8x8xbf16>, vector<8x8xbf16>, vector<8x8xf32> -> vector<8x8xf32>
      %66 = arith.addf %58, %65 : vector<8x8xf32>
      %c2_i32_59 = arith.constant 2 : i32
      %67 = arith.addi %3, %c2_i32_59 : i32
      %c0_60 = arith.constant 0 : index
      %68 = arith.index_cast %67 : i32 to index
      %c2_61 = arith.constant 2 : index
      %c0_62 = arith.constant 0 : index
      %69 = vector.load %arg1[%c0_60, %68, %c2_61, %c0_62] : memref<1x10x10x8xbf16, #tpu.memory_space<vmem>>, vector<1x1x8x8xbf16>
      %70 = vector.shape_cast %69 : vector<1x1x8x8xbf16> to vector<8x8xbf16>
      %c8 = arith.constant 8 : index
      %c0_63 = arith.constant 0 : index
      %c0_64 = arith.constant 0 : index
      %71 = vector.load %arg2[%c8, %c0_63, %c0_64] : memref<9x8x8xbf16, #tpu.memory_space<vmem>>, vector<1x8x8xbf16>
      %72 = vector.shape_cast %71 : vector<1x8x8xbf16> to vector<8x8xbf16>
      %cst_65 = arith.constant dense<0.000000e+00> : vector<8x8xf32>
      %73 = tpu.matmul %70, %72, %cst_65 {dimension_numbers = #tpu.dot_dimension_numbers<[1], [0], [0], [1], [0, 0, 1, 1], [], []>} : vector<8x8xbf16>, vector<8x8xbf16>, vector<8x8xf32> -> vector<8x8xf32>
      %74 = arith.addf %66, %73 : vector<8x8xf32>
      %75 = vector.broadcast %0 : vector<1x8xf32> to vector<8x8xf32>
      %76 = arith.addf %74, %75 : vector<8x8xf32>
      %cst_66 = arith.constant 5.000000e-01 : f32
      %77 = vector.broadcast %cst_66 : f32 to vector<8x8xf32>
      %78 = arith.mulf %77, %76 : vector<8x8xf32>
      %cst_67 = arith.constant 4.471500e-02 : f32
      %79 = vector.broadcast %cst_67 : f32 to vector<8x8xf32>
      %80 = arith.mulf %79, %76 : vector<8x8xf32>
      %81 = arith.mulf %80, %76 : vector<8x8xf32>
      %82 = arith.mulf %81, %76 : vector<8x8xf32>
      %83 = arith.addf %76, %82 : vector<8x8xf32>
      %cst_68 = arith.constant 0.797884583 : f32
      %84 = vector.broadcast %cst_68 : f32 to vector<8x8xf32>
      %85 = arith.mulf %84, %83 : vector<8x8xf32>
      %86 = math.tanh %85 : vector<8x8xf32>
      %cst_69 = arith.constant 1.000000e+00 : f32
      %87 = vector.broadcast %cst_69 : f32 to vector<8x8xf32>
      %88 = arith.addf %87, %86 : vector<8x8xf32>
      %89 = arith.mulf %78, %88 : vector<8x8xf32>
      %90 = arith.truncf %89 : vector<8x8xf32> to vector<8x8xbf16>
      %c0_70 = arith.constant 0 : index
      %91 = arith.index_cast %3 : i32 to index
      %c0_71 = arith.constant 0 : index
      %c0_72 = arith.constant 0 : index
      %92 = vector.load %arg4[%c0_70, %91, %c0_71, %c0_72] : memref<1x8x8x8xbf16, #tpu.memory_space<vmem>>, vector<1x1x8x8xbf16>
      %93 = vector.shape_cast %92 : vector<1x1x8x8xbf16> to vector<8x8xbf16>
      %94 = vector.shape_cast %90 : vector<8x8xbf16> to vector<1x1x8x8xbf16>
      tpu.vector_store %arg4[%c0_70, %91, %c0_71, %c0_72], %94 {strides = array<i32>} : memref<1x8x8x8xbf16, #tpu.memory_space<vmem>>, vector<1x1x8x8xbf16>,
    }
    %c8_i32_1 = arith.constant 8 : i32
    return
  }
  func.func @transform_0(%arg0: i32) -> (i32, i32, i32, i32) {
    %c0_i32 = arith.constant 0 : i32
    %c0_i32_0 = arith.constant 0 : i32
    %c0_i32_1 = arith.constant 0 : i32
    %c0_i32_2 = arith.constant 0 : i32
    return %arg0, %c0_i32, %c0_i32_0, %c0_i32_1 : i32, i32, i32, i32
  }
  func.func @transform_1(%arg0: i32) -> (i32, i32, i32) {
    %c0_i32 = arith.constant 0 : i32
    %c0_i32_0 = arith.constant 0 : i32
    %c0_i32_1 = arith.constant 0 : i32
    %c0_i32_2 = arith.constant 0 : i32
    return %c0_i32, %c0_i32_0, %c0_i32_1 : i32, i32, i32
  }
  func.func @transform_2(%arg0: i32) -> (i32, i32) {
    %c0_i32 = arith.constant 0 : i32
    %c0_i32_0 = arith.constant 0 : i32
    %c0_i32_1 = arith.constant 0 : i32
    return %c0_i32, %c0_i32_0 : i32, i32
  }
  func.func @transform_3(%arg0: i32) -> (i32, i32, i32, i32) {
    %c0_i32 = arith.constant 0 : i32
    %c0_i32_0 = arith.constant 0 : i32
    %c0_i32_1 = arith.constant 0 : i32
    %c0_i32_2 = arith.constant 0 : i32
    return %arg0, %c0_i32, %c0_i32_0, %c0_i32_1 : i32, i32, i32, i32
  }
}

module attributes {stable_mosaic.version = 11 : i64} {
  func.func @_conv_s2_kernel(%arg0: i32, %arg1: memref<1x18x9x8xbf16, #tpu.memory_space<vmem>>, %arg2: memref<1x18x9x8xbf16, #tpu.memory_space<vmem>>, %arg3: memref<9x8x8xbf16, #tpu.memory_space<vmem>>, %arg4: memref<1x8xf32, #tpu.memory_space<vmem>>, %arg5: memref<1x8x8x8xbf16, #tpu.memory_space<vmem>>) attributes {dimension_semantics = [#tpu.dimension_semantics<parallel>], iteration_bounds = array<i64: 2>, scalar_prefetch = 0 : i64, scratch_operands = 0 : i64, tpu.core_type = #tpu.core_type<tc>, window_params = [{transform_indices = @transform_0, window_bounds = array<i64: 1, 18, 9, 8>}, {transform_indices = @transform_1, window_bounds = array<i64: 1, 18, 9, 8>}, {pipeline_mode = #tpu.pipeline_mode<synchronous>, transform_indices = @transform_2, window_bounds = array<i64: 9, 8, 8>}, {pipeline_mode = #tpu.pipeline_mode<synchronous>, transform_indices = @transform_3, window_bounds = array<i64: 1, 8>}, {transform_indices = @transform_4, window_bounds = array<i64: 1, 8, 8, 8>}]} {
    %c0 = arith.constant 0 : index
    %c0_0 = arith.constant 0 : index
    %0 = vector.load %arg4[%c0, %c0_0] : memref<1x8xf32, #tpu.memory_space<vmem>>, vector<1x8xf32>
    %c0_i32 = arith.constant 0 : i32
    %c8_i32 = arith.constant 8 : i32
    %1 = arith.addi %c0_i32, %c8_i32 : i32
    %c1_i32 = arith.constant 1 : i32
    scf.for %arg6 = %c0_i32 to %1 step %c1_i32  : i32 {
      %c1_i32_2 = arith.constant 1 : i32
      %2 = arith.muli %arg6, %c1_i32_2 : i32
      %c0_i32_3 = arith.constant 0 : i32
      %3 = arith.addi %c0_i32_3, %2 : i32
      %c2_i32 = arith.constant 2 : i32
      %4 = arith.muli %c2_i32, %3 : i32
      %c0_i32_4 = arith.constant 0 : i32
      %5 = arith.addi %4, %c0_i32_4 : i32
      %c0_5 = arith.constant 0 : index
      %6 = arith.index_cast %5 : i32 to index
      %c0_6 = arith.constant 0 : index
      %c0_7 = arith.constant 0 : index
      %7 = vector.load %arg1[%c0_5, %6, %c0_6, %c0_7] : memref<1x18x9x8xbf16, #tpu.memory_space<vmem>>, vector<1x1x8x8xbf16>
      %8 = vector.shape_cast %7 : vector<1x1x8x8xbf16> to vector<8x8xbf16>
      %c0_8 = arith.constant 0 : index
      %c0_9 = arith.constant 0 : index
      %c0_10 = arith.constant 0 : index
      %9 = vector.load %arg3[%c0_8, %c0_9, %c0_10] : memref<9x8x8xbf16, #tpu.memory_space<vmem>>, vector<1x8x8xbf16>
      %10 = vector.shape_cast %9 : vector<1x8x8xbf16> to vector<8x8xbf16>
      %cst = arith.constant dense<0.000000e+00> : vector<8x8xf32>
      %11 = tpu.matmul %8, %10, %cst {dimension_numbers = #tpu.dot_dimension_numbers<[1], [0], [0], [1], [0, 0, 1, 1], [], []>} : vector<8x8xbf16>, vector<8x8xbf16>, vector<8x8xf32> -> vector<8x8xf32>
      %c2_i32_11 = arith.constant 2 : i32
      %12 = arith.muli %c2_i32_11, %3 : i32
      %c0_i32_12 = arith.constant 0 : i32
      %13 = arith.addi %12, %c0_i32_12 : i32
      %c0_13 = arith.constant 0 : index
      %14 = arith.index_cast %13 : i32 to index
      %c0_14 = arith.constant 0 : index
      %c0_15 = arith.constant 0 : index
      %15 = vector.load %arg2[%c0_13, %14, %c0_14, %c0_15] : memref<1x18x9x8xbf16, #tpu.memory_space<vmem>>, vector<1x1x8x8xbf16>
      %16 = vector.shape_cast %15 : vector<1x1x8x8xbf16> to vector<8x8xbf16>
      %c1 = arith.constant 1 : index
      %c0_16 = arith.constant 0 : index
      %c0_17 = arith.constant 0 : index
      %17 = vector.load %arg3[%c1, %c0_16, %c0_17] : memref<9x8x8xbf16, #tpu.memory_space<vmem>>, vector<1x8x8xbf16>
      %18 = vector.shape_cast %17 : vector<1x8x8xbf16> to vector<8x8xbf16>
      %cst_18 = arith.constant dense<0.000000e+00> : vector<8x8xf32>
      %19 = tpu.matmul %16, %18, %cst_18 {dimension_numbers = #tpu.dot_dimension_numbers<[1], [0], [0], [1], [0, 0, 1, 1], [], []>} : vector<8x8xbf16>, vector<8x8xbf16>, vector<8x8xf32> -> vector<8x8xf32>
      %20 = arith.addf %11, %19 : vector<8x8xf32>
      %c2_i32_19 = arith.constant 2 : i32
      %21 = arith.muli %c2_i32_19, %3 : i32
      %c0_i32_20 = arith.constant 0 : i32
      %22 = arith.addi %21, %c0_i32_20 : i32
      %c0_21 = arith.constant 0 : index
      %23 = arith.index_cast %22 : i32 to index
      %c1_22 = arith.constant 1 : index
      %c0_23 = arith.constant 0 : index
      %24 = vector.load %arg1[%c0_21, %23, %c1_22, %c0_23] : memref<1x18x9x8xbf16, #tpu.memory_space<vmem>>, vector<1x1x8x8xbf16>
      %25 = vector.shape_cast %24 : vector<1x1x8x8xbf16> to vector<8x8xbf16>
      %c2 = arith.constant 2 : index
      %c0_24 = arith.constant 0 : index
      %c0_25 = arith.constant 0 : index
      %26 = vector.load %arg3[%c2, %c0_24, %c0_25] : memref<9x8x8xbf16, #tpu.memory_space<vmem>>, vector<1x8x8xbf16>
      %27 = vector.shape_cast %26 : vector<1x8x8xbf16> to vector<8x8xbf16>
      %cst_26 = arith.constant dense<0.000000e+00> : vector<8x8xf32>
      %28 = tpu.matmul %25, %27, %cst_26 {dimension_numbers = #tpu.dot_dimension_numbers<[1], [0], [0], [1], [0, 0, 1, 1], [], []>} : vector<8x8xbf16>, vector<8x8xbf16>, vector<8x8xf32> -> vector<8x8xf32>
      %29 = arith.addf %20, %28 : vector<8x8xf32>
      %c2_i32_27 = arith.constant 2 : i32
      %30 = arith.muli %c2_i32_27, %3 : i32
      %c1_i32_28 = arith.constant 1 : i32
      %31 = arith.addi %30, %c1_i32_28 : i32
      %c0_29 = arith.constant 0 : index
      %32 = arith.index_cast %31 : i32 to index
      %c0_30 = arith.constant 0 : index
      %c0_31 = arith.constant 0 : index
      %33 = vector.load %arg1[%c0_29, %32, %c0_30, %c0_31] : memref<1x18x9x8xbf16, #tpu.memory_space<vmem>>, vector<1x1x8x8xbf16>
      %34 = vector.shape_cast %33 : vector<1x1x8x8xbf16> to vector<8x8xbf16>
      %c3 = arith.constant 3 : index
      %c0_32 = arith.constant 0 : index
      %c0_33 = arith.constant 0 : index
      %35 = vector.load %arg3[%c3, %c0_32, %c0_33] : memref<9x8x8xbf16, #tpu.memory_space<vmem>>, vector<1x8x8xbf16>
      %36 = vector.shape_cast %35 : vector<1x8x8xbf16> to vector<8x8xbf16>
      %cst_34 = arith.constant dense<0.000000e+00> : vector<8x8xf32>
      %37 = tpu.matmul %34, %36, %cst_34 {dimension_numbers = #tpu.dot_dimension_numbers<[1], [0], [0], [1], [0, 0, 1, 1], [], []>} : vector<8x8xbf16>, vector<8x8xbf16>, vector<8x8xf32> -> vector<8x8xf32>
      %38 = arith.addf %29, %37 : vector<8x8xf32>
      %c2_i32_35 = arith.constant 2 : i32
      %39 = arith.muli %c2_i32_35, %3 : i32
      %c1_i32_36 = arith.constant 1 : i32
      %40 = arith.addi %39, %c1_i32_36 : i32
      %c0_37 = arith.constant 0 : index
      %41 = arith.index_cast %40 : i32 to index
      %c0_38 = arith.constant 0 : index
      %c0_39 = arith.constant 0 : index
      %42 = vector.load %arg2[%c0_37, %41, %c0_38, %c0_39] : memref<1x18x9x8xbf16, #tpu.memory_space<vmem>>, vector<1x1x8x8xbf16>
      %43 = vector.shape_cast %42 : vector<1x1x8x8xbf16> to vector<8x8xbf16>
      %c4 = arith.constant 4 : index
      %c0_40 = arith.constant 0 : index
      %c0_41 = arith.constant 0 : index
      %44 = vector.load %arg3[%c4, %c0_40, %c0_41] : memref<9x8x8xbf16, #tpu.memory_space<vmem>>, vector<1x8x8xbf16>
      %45 = vector.shape_cast %44 : vector<1x8x8xbf16> to vector<8x8xbf16>
      %cst_42 = arith.constant dense<0.000000e+00> : vector<8x8xf32>
      %46 = tpu.matmul %43, %45, %cst_42 {dimension_numbers = #tpu.dot_dimension_numbers<[1], [0], [0], [1], [0, 0, 1, 1], [], []>} : vector<8x8xbf16>, vector<8x8xbf16>, vector<8x8xf32> -> vector<8x8xf32>
      %47 = arith.addf %38, %46 : vector<8x8xf32>
      %c2_i32_43 = arith.constant 2 : i32
      %48 = arith.muli %c2_i32_43, %3 : i32
      %c1_i32_44 = arith.constant 1 : i32
      %49 = arith.addi %48, %c1_i32_44 : i32
      %c0_45 = arith.constant 0 : index
      %50 = arith.index_cast %49 : i32 to index
      %c1_46 = arith.constant 1 : index
      %c0_47 = arith.constant 0 : index
      %51 = vector.load %arg1[%c0_45, %50, %c1_46, %c0_47] : memref<1x18x9x8xbf16, #tpu.memory_space<vmem>>, vector<1x1x8x8xbf16>
      %52 = vector.shape_cast %51 : vector<1x1x8x8xbf16> to vector<8x8xbf16>
      %c5 = arith.constant 5 : index
      %c0_48 = arith.constant 0 : index
      %c0_49 = arith.constant 0 : index
      %53 = vector.load %arg3[%c5, %c0_48, %c0_49] : memref<9x8x8xbf16, #tpu.memory_space<vmem>>, vector<1x8x8xbf16>
      %54 = vector.shape_cast %53 : vector<1x8x8xbf16> to vector<8x8xbf16>
      %cst_50 = arith.constant dense<0.000000e+00> : vector<8x8xf32>
      %55 = tpu.matmul %52, %54, %cst_50 {dimension_numbers = #tpu.dot_dimension_numbers<[1], [0], [0], [1], [0, 0, 1, 1], [], []>} : vector<8x8xbf16>, vector<8x8xbf16>, vector<8x8xf32> -> vector<8x8xf32>
      %56 = arith.addf %47, %55 : vector<8x8xf32>
      %c2_i32_51 = arith.constant 2 : i32
      %57 = arith.muli %c2_i32_51, %3 : i32
      %c2_i32_52 = arith.constant 2 : i32
      %58 = arith.addi %57, %c2_i32_52 : i32
      %c0_53 = arith.constant 0 : index
      %59 = arith.index_cast %58 : i32 to index
      %c0_54 = arith.constant 0 : index
      %c0_55 = arith.constant 0 : index
      %60 = vector.load %arg1[%c0_53, %59, %c0_54, %c0_55] : memref<1x18x9x8xbf16, #tpu.memory_space<vmem>>, vector<1x1x8x8xbf16>
      %61 = vector.shape_cast %60 : vector<1x1x8x8xbf16> to vector<8x8xbf16>
      %c6 = arith.constant 6 : index
      %c0_56 = arith.constant 0 : index
      %c0_57 = arith.constant 0 : index
      %62 = vector.load %arg3[%c6, %c0_56, %c0_57] : memref<9x8x8xbf16, #tpu.memory_space<vmem>>, vector<1x8x8xbf16>
      %63 = vector.shape_cast %62 : vector<1x8x8xbf16> to vector<8x8xbf16>
      %cst_58 = arith.constant dense<0.000000e+00> : vector<8x8xf32>
      %64 = tpu.matmul %61, %63, %cst_58 {dimension_numbers = #tpu.dot_dimension_numbers<[1], [0], [0], [1], [0, 0, 1, 1], [], []>} : vector<8x8xbf16>, vector<8x8xbf16>, vector<8x8xf32> -> vector<8x8xf32>
      %65 = arith.addf %56, %64 : vector<8x8xf32>
      %c2_i32_59 = arith.constant 2 : i32
      %66 = arith.muli %c2_i32_59, %3 : i32
      %c2_i32_60 = arith.constant 2 : i32
      %67 = arith.addi %66, %c2_i32_60 : i32
      %c0_61 = arith.constant 0 : index
      %68 = arith.index_cast %67 : i32 to index
      %c0_62 = arith.constant 0 : index
      %c0_63 = arith.constant 0 : index
      %69 = vector.load %arg2[%c0_61, %68, %c0_62, %c0_63] : memref<1x18x9x8xbf16, #tpu.memory_space<vmem>>, vector<1x1x8x8xbf16>
      %70 = vector.shape_cast %69 : vector<1x1x8x8xbf16> to vector<8x8xbf16>
      %c7 = arith.constant 7 : index
      %c0_64 = arith.constant 0 : index
      %c0_65 = arith.constant 0 : index
      %71 = vector.load %arg3[%c7, %c0_64, %c0_65] : memref<9x8x8xbf16, #tpu.memory_space<vmem>>, vector<1x8x8xbf16>
      %72 = vector.shape_cast %71 : vector<1x8x8xbf16> to vector<8x8xbf16>
      %cst_66 = arith.constant dense<0.000000e+00> : vector<8x8xf32>
      %73 = tpu.matmul %70, %72, %cst_66 {dimension_numbers = #tpu.dot_dimension_numbers<[1], [0], [0], [1], [0, 0, 1, 1], [], []>} : vector<8x8xbf16>, vector<8x8xbf16>, vector<8x8xf32> -> vector<8x8xf32>
      %74 = arith.addf %65, %73 : vector<8x8xf32>
      %c2_i32_67 = arith.constant 2 : i32
      %75 = arith.muli %c2_i32_67, %3 : i32
      %c2_i32_68 = arith.constant 2 : i32
      %76 = arith.addi %75, %c2_i32_68 : i32
      %c0_69 = arith.constant 0 : index
      %77 = arith.index_cast %76 : i32 to index
      %c1_70 = arith.constant 1 : index
      %c0_71 = arith.constant 0 : index
      %78 = vector.load %arg1[%c0_69, %77, %c1_70, %c0_71] : memref<1x18x9x8xbf16, #tpu.memory_space<vmem>>, vector<1x1x8x8xbf16>
      %79 = vector.shape_cast %78 : vector<1x1x8x8xbf16> to vector<8x8xbf16>
      %c8 = arith.constant 8 : index
      %c0_72 = arith.constant 0 : index
      %c0_73 = arith.constant 0 : index
      %80 = vector.load %arg3[%c8, %c0_72, %c0_73] : memref<9x8x8xbf16, #tpu.memory_space<vmem>>, vector<1x8x8xbf16>
      %81 = vector.shape_cast %80 : vector<1x8x8xbf16> to vector<8x8xbf16>
      %cst_74 = arith.constant dense<0.000000e+00> : vector<8x8xf32>
      %82 = tpu.matmul %79, %81, %cst_74 {dimension_numbers = #tpu.dot_dimension_numbers<[1], [0], [0], [1], [0, 0, 1, 1], [], []>} : vector<8x8xbf16>, vector<8x8xbf16>, vector<8x8xf32> -> vector<8x8xf32>
      %83 = arith.addf %74, %82 : vector<8x8xf32>
      %84 = vector.broadcast %0 : vector<1x8xf32> to vector<8x8xf32>
      %85 = arith.addf %83, %84 : vector<8x8xf32>
      %cst_75 = arith.constant 5.000000e-01 : f32
      %86 = vector.broadcast %cst_75 : f32 to vector<8x8xf32>
      %87 = arith.mulf %86, %85 : vector<8x8xf32>
      %cst_76 = arith.constant 4.471500e-02 : f32
      %88 = vector.broadcast %cst_76 : f32 to vector<8x8xf32>
      %89 = arith.mulf %88, %85 : vector<8x8xf32>
      %90 = arith.mulf %89, %85 : vector<8x8xf32>
      %91 = arith.mulf %90, %85 : vector<8x8xf32>
      %92 = arith.addf %85, %91 : vector<8x8xf32>
      %cst_77 = arith.constant 0.797884583 : f32
      %93 = vector.broadcast %cst_77 : f32 to vector<8x8xf32>
      %94 = arith.mulf %93, %92 : vector<8x8xf32>
      %95 = math.tanh %94 : vector<8x8xf32>
      %cst_78 = arith.constant 1.000000e+00 : f32
      %96 = vector.broadcast %cst_78 : f32 to vector<8x8xf32>
      %97 = arith.addf %96, %95 : vector<8x8xf32>
      %98 = arith.mulf %87, %97 : vector<8x8xf32>
      %99 = arith.truncf %98 : vector<8x8xf32> to vector<8x8xbf16>
      %c0_79 = arith.constant 0 : index
      %100 = arith.index_cast %3 : i32 to index
      %c0_80 = arith.constant 0 : index
      %c0_81 = arith.constant 0 : index
      %101 = vector.load %arg5[%c0_79, %100, %c0_80, %c0_81] : memref<1x8x8x8xbf16, #tpu.memory_space<vmem>>, vector<1x1x8x8xbf16>
      %102 = vector.shape_cast %101 : vector<1x1x8x8xbf16> to vector<8x8xbf16>
      %103 = vector.shape_cast %99 : vector<8x8xbf16> to vector<1x1x8x8xbf16>
      tpu.vector_store %arg5[%c0_79, %100, %c0_80, %c0_81], %103 {strides = array<i32>} : memref<1x8x8x8xbf16, #tpu.memory_space<vmem>>, vector<1x1x8x8xbf16>,
    }
    %c8_i32_1 = arith.constant 8 : i32
    return
  }
  func.func @transform_0(%arg0: i32) -> (i32, i32, i32, i32) {
    %c0_i32 = arith.constant 0 : i32
    %c0_i32_0 = arith.constant 0 : i32
    %c0_i32_1 = arith.constant 0 : i32
    %c0_i32_2 = arith.constant 0 : i32
    return %arg0, %c0_i32, %c0_i32_0, %c0_i32_1 : i32, i32, i32, i32
  }
  func.func @transform_1(%arg0: i32) -> (i32, i32, i32, i32) {
    %c0_i32 = arith.constant 0 : i32
    %c0_i32_0 = arith.constant 0 : i32
    %c0_i32_1 = arith.constant 0 : i32
    %c0_i32_2 = arith.constant 0 : i32
    return %arg0, %c0_i32, %c0_i32_0, %c0_i32_1 : i32, i32, i32, i32
  }
  func.func @transform_2(%arg0: i32) -> (i32, i32, i32) {
    %c0_i32 = arith.constant 0 : i32
    %c0_i32_0 = arith.constant 0 : i32
    %c0_i32_1 = arith.constant 0 : i32
    %c0_i32_2 = arith.constant 0 : i32
    return %c0_i32, %c0_i32_0, %c0_i32_1 : i32, i32, i32
  }
  func.func @transform_3(%arg0: i32) -> (i32, i32) {
    %c0_i32 = arith.constant 0 : i32
    %c0_i32_0 = arith.constant 0 : i32
    %c0_i32_1 = arith.constant 0 : i32
    return %c0_i32, %c0_i32_0 : i32, i32
  }
  func.func @transform_4(%arg0: i32) -> (i32, i32, i32, i32) {
    %c0_i32 = arith.constant 0 : i32
    %c0_i32_0 = arith.constant 0 : i32
    %c0_i32_1 = arith.constant 0 : i32
    %c0_i32_2 = arith.constant 0 : i32
    return %arg0, %c0_i32, %c0_i32_0, %c0_i32_1 : i32, i32, i32, i32
  }
}

module attributes {stable_mosaic.version = 11 : i64} {
  func.func @_conv_s2_kernel(%arg0: i32, %arg1: memref<1x10x5x8xbf16, #tpu.memory_space<vmem>>, %arg2: memref<1x10x5x8xbf16, #tpu.memory_space<vmem>>, %arg3: memref<9x8x16xbf16, #tpu.memory_space<vmem>>, %arg4: memref<1x16xf32, #tpu.memory_space<vmem>>, %arg5: memref<1x4x4x16xbf16, #tpu.memory_space<vmem>>) attributes {dimension_semantics = [#tpu.dimension_semantics<parallel>], iteration_bounds = array<i64: 2>, scalar_prefetch = 0 : i64, scratch_operands = 0 : i64, tpu.core_type = #tpu.core_type<tc>, window_params = [{transform_indices = @transform_0, window_bounds = array<i64: 1, 10, 5, 8>}, {transform_indices = @transform_1, window_bounds = array<i64: 1, 10, 5, 8>}, {pipeline_mode = #tpu.pipeline_mode<synchronous>, transform_indices = @transform_2, window_bounds = array<i64: 9, 8, 16>}, {pipeline_mode = #tpu.pipeline_mode<synchronous>, transform_indices = @transform_3, window_bounds = array<i64: 1, 16>}, {transform_indices = @transform_4, window_bounds = array<i64: 1, 4, 4, 16>}]} {
    %c0 = arith.constant 0 : index
    %c0_0 = arith.constant 0 : index
    %0 = vector.load %arg4[%c0, %c0_0] : memref<1x16xf32, #tpu.memory_space<vmem>>, vector<1x16xf32>
    %c0_i32 = arith.constant 0 : i32
    %c4_i32 = arith.constant 4 : i32
    %1 = arith.addi %c0_i32, %c4_i32 : i32
    %c1_i32 = arith.constant 1 : i32
    scf.for %arg6 = %c0_i32 to %1 step %c1_i32  : i32 {
      %c1_i32_2 = arith.constant 1 : i32
      %2 = arith.muli %arg6, %c1_i32_2 : i32
      %c0_i32_3 = arith.constant 0 : i32
      %3 = arith.addi %c0_i32_3, %2 : i32
      %c2_i32 = arith.constant 2 : i32
      %4 = arith.muli %c2_i32, %3 : i32
      %c0_i32_4 = arith.constant 0 : i32
      %5 = arith.addi %4, %c0_i32_4 : i32
      %c0_5 = arith.constant 0 : index
      %6 = arith.index_cast %5 : i32 to index
      %c0_6 = arith.constant 0 : index
      %c0_7 = arith.constant 0 : index
      %7 = vector.load %arg1[%c0_5, %6, %c0_6, %c0_7] : memref<1x10x5x8xbf16, #tpu.memory_space<vmem>>, vector<1x1x4x8xbf16>
      %8 = vector.shape_cast %7 : vector<1x1x4x8xbf16> to vector<4x8xbf16>
      %c0_8 = arith.constant 0 : index
      %c0_9 = arith.constant 0 : index
      %c0_10 = arith.constant 0 : index
      %9 = vector.load %arg3[%c0_8, %c0_9, %c0_10] : memref<9x8x16xbf16, #tpu.memory_space<vmem>>, vector<1x8x16xbf16>
      %10 = vector.shape_cast %9 : vector<1x8x16xbf16> to vector<8x16xbf16>
      %cst = arith.constant dense<0.000000e+00> : vector<4x16xf32>
      %11 = tpu.matmul %8, %10, %cst {dimension_numbers = #tpu.dot_dimension_numbers<[1], [0], [0], [1], [0, 0, 1, 1], [], []>} : vector<4x8xbf16>, vector<8x16xbf16>, vector<4x16xf32> -> vector<4x16xf32>
      %c2_i32_11 = arith.constant 2 : i32
      %12 = arith.muli %c2_i32_11, %3 : i32
      %c0_i32_12 = arith.constant 0 : i32
      %13 = arith.addi %12, %c0_i32_12 : i32
      %c0_13 = arith.constant 0 : index
      %14 = arith.index_cast %13 : i32 to index
      %c0_14 = arith.constant 0 : index
      %c0_15 = arith.constant 0 : index
      %15 = vector.load %arg2[%c0_13, %14, %c0_14, %c0_15] : memref<1x10x5x8xbf16, #tpu.memory_space<vmem>>, vector<1x1x4x8xbf16>
      %16 = vector.shape_cast %15 : vector<1x1x4x8xbf16> to vector<4x8xbf16>
      %c1 = arith.constant 1 : index
      %c0_16 = arith.constant 0 : index
      %c0_17 = arith.constant 0 : index
      %17 = vector.load %arg3[%c1, %c0_16, %c0_17] : memref<9x8x16xbf16, #tpu.memory_space<vmem>>, vector<1x8x16xbf16>
      %18 = vector.shape_cast %17 : vector<1x8x16xbf16> to vector<8x16xbf16>
      %cst_18 = arith.constant dense<0.000000e+00> : vector<4x16xf32>
      %19 = tpu.matmul %16, %18, %cst_18 {dimension_numbers = #tpu.dot_dimension_numbers<[1], [0], [0], [1], [0, 0, 1, 1], [], []>} : vector<4x8xbf16>, vector<8x16xbf16>, vector<4x16xf32> -> vector<4x16xf32>
      %20 = arith.addf %11, %19 : vector<4x16xf32>
      %c2_i32_19 = arith.constant 2 : i32
      %21 = arith.muli %c2_i32_19, %3 : i32
      %c0_i32_20 = arith.constant 0 : i32
      %22 = arith.addi %21, %c0_i32_20 : i32
      %c0_21 = arith.constant 0 : index
      %23 = arith.index_cast %22 : i32 to index
      %c1_22 = arith.constant 1 : index
      %c0_23 = arith.constant 0 : index
      %24 = vector.load %arg1[%c0_21, %23, %c1_22, %c0_23] : memref<1x10x5x8xbf16, #tpu.memory_space<vmem>>, vector<1x1x4x8xbf16>
      %25 = vector.shape_cast %24 : vector<1x1x4x8xbf16> to vector<4x8xbf16>
      %c2 = arith.constant 2 : index
      %c0_24 = arith.constant 0 : index
      %c0_25 = arith.constant 0 : index
      %26 = vector.load %arg3[%c2, %c0_24, %c0_25] : memref<9x8x16xbf16, #tpu.memory_space<vmem>>, vector<1x8x16xbf16>
      %27 = vector.shape_cast %26 : vector<1x8x16xbf16> to vector<8x16xbf16>
      %cst_26 = arith.constant dense<0.000000e+00> : vector<4x16xf32>
      %28 = tpu.matmul %25, %27, %cst_26 {dimension_numbers = #tpu.dot_dimension_numbers<[1], [0], [0], [1], [0, 0, 1, 1], [], []>} : vector<4x8xbf16>, vector<8x16xbf16>, vector<4x16xf32> -> vector<4x16xf32>
      %29 = arith.addf %20, %28 : vector<4x16xf32>
      %c2_i32_27 = arith.constant 2 : i32
      %30 = arith.muli %c2_i32_27, %3 : i32
      %c1_i32_28 = arith.constant 1 : i32
      %31 = arith.addi %30, %c1_i32_28 : i32
      %c0_29 = arith.constant 0 : index
      %32 = arith.index_cast %31 : i32 to index
      %c0_30 = arith.constant 0 : index
      %c0_31 = arith.constant 0 : index
      %33 = vector.load %arg1[%c0_29, %32, %c0_30, %c0_31] : memref<1x10x5x8xbf16, #tpu.memory_space<vmem>>, vector<1x1x4x8xbf16>
      %34 = vector.shape_cast %33 : vector<1x1x4x8xbf16> to vector<4x8xbf16>
      %c3 = arith.constant 3 : index
      %c0_32 = arith.constant 0 : index
      %c0_33 = arith.constant 0 : index
      %35 = vector.load %arg3[%c3, %c0_32, %c0_33] : memref<9x8x16xbf16, #tpu.memory_space<vmem>>, vector<1x8x16xbf16>
      %36 = vector.shape_cast %35 : vector<1x8x16xbf16> to vector<8x16xbf16>
      %cst_34 = arith.constant dense<0.000000e+00> : vector<4x16xf32>
      %37 = tpu.matmul %34, %36, %cst_34 {dimension_numbers = #tpu.dot_dimension_numbers<[1], [0], [0], [1], [0, 0, 1, 1], [], []>} : vector<4x8xbf16>, vector<8x16xbf16>, vector<4x16xf32> -> vector<4x16xf32>
      %38 = arith.addf %29, %37 : vector<4x16xf32>
      %c2_i32_35 = arith.constant 2 : i32
      %39 = arith.muli %c2_i32_35, %3 : i32
      %c1_i32_36 = arith.constant 1 : i32
      %40 = arith.addi %39, %c1_i32_36 : i32
      %c0_37 = arith.constant 0 : index
      %41 = arith.index_cast %40 : i32 to index
      %c0_38 = arith.constant 0 : index
      %c0_39 = arith.constant 0 : index
      %42 = vector.load %arg2[%c0_37, %41, %c0_38, %c0_39] : memref<1x10x5x8xbf16, #tpu.memory_space<vmem>>, vector<1x1x4x8xbf16>
      %43 = vector.shape_cast %42 : vector<1x1x4x8xbf16> to vector<4x8xbf16>
      %c4 = arith.constant 4 : index
      %c0_40 = arith.constant 0 : index
      %c0_41 = arith.constant 0 : index
      %44 = vector.load %arg3[%c4, %c0_40, %c0_41] : memref<9x8x16xbf16, #tpu.memory_space<vmem>>, vector<1x8x16xbf16>
      %45 = vector.shape_cast %44 : vector<1x8x16xbf16> to vector<8x16xbf16>
      %cst_42 = arith.constant dense<0.000000e+00> : vector<4x16xf32>
      %46 = tpu.matmul %43, %45, %cst_42 {dimension_numbers = #tpu.dot_dimension_numbers<[1], [0], [0], [1], [0, 0, 1, 1], [], []>} : vector<4x8xbf16>, vector<8x16xbf16>, vector<4x16xf32> -> vector<4x16xf32>
      %47 = arith.addf %38, %46 : vector<4x16xf32>
      %c2_i32_43 = arith.constant 2 : i32
      %48 = arith.muli %c2_i32_43, %3 : i32
      %c1_i32_44 = arith.constant 1 : i32
      %49 = arith.addi %48, %c1_i32_44 : i32
      %c0_45 = arith.constant 0 : index
      %50 = arith.index_cast %49 : i32 to index
      %c1_46 = arith.constant 1 : index
      %c0_47 = arith.constant 0 : index
      %51 = vector.load %arg1[%c0_45, %50, %c1_46, %c0_47] : memref<1x10x5x8xbf16, #tpu.memory_space<vmem>>, vector<1x1x4x8xbf16>
      %52 = vector.shape_cast %51 : vector<1x1x4x8xbf16> to vector<4x8xbf16>
      %c5 = arith.constant 5 : index
      %c0_48 = arith.constant 0 : index
      %c0_49 = arith.constant 0 : index
      %53 = vector.load %arg3[%c5, %c0_48, %c0_49] : memref<9x8x16xbf16, #tpu.memory_space<vmem>>, vector<1x8x16xbf16>
      %54 = vector.shape_cast %53 : vector<1x8x16xbf16> to vector<8x16xbf16>
      %cst_50 = arith.constant dense<0.000000e+00> : vector<4x16xf32>
      %55 = tpu.matmul %52, %54, %cst_50 {dimension_numbers = #tpu.dot_dimension_numbers<[1], [0], [0], [1], [0, 0, 1, 1], [], []>} : vector<4x8xbf16>, vector<8x16xbf16>, vector<4x16xf32> -> vector<4x16xf32>
      %56 = arith.addf %47, %55 : vector<4x16xf32>
      %c2_i32_51 = arith.constant 2 : i32
      %57 = arith.muli %c2_i32_51, %3 : i32
      %c2_i32_52 = arith.constant 2 : i32
      %58 = arith.addi %57, %c2_i32_52 : i32
      %c0_53 = arith.constant 0 : index
      %59 = arith.index_cast %58 : i32 to index
      %c0_54 = arith.constant 0 : index
      %c0_55 = arith.constant 0 : index
      %60 = vector.load %arg1[%c0_53, %59, %c0_54, %c0_55] : memref<1x10x5x8xbf16, #tpu.memory_space<vmem>>, vector<1x1x4x8xbf16>
      %61 = vector.shape_cast %60 : vector<1x1x4x8xbf16> to vector<4x8xbf16>
      %c6 = arith.constant 6 : index
      %c0_56 = arith.constant 0 : index
      %c0_57 = arith.constant 0 : index
      %62 = vector.load %arg3[%c6, %c0_56, %c0_57] : memref<9x8x16xbf16, #tpu.memory_space<vmem>>, vector<1x8x16xbf16>
      %63 = vector.shape_cast %62 : vector<1x8x16xbf16> to vector<8x16xbf16>
      %cst_58 = arith.constant dense<0.000000e+00> : vector<4x16xf32>
      %64 = tpu.matmul %61, %63, %cst_58 {dimension_numbers = #tpu.dot_dimension_numbers<[1], [0], [0], [1], [0, 0, 1, 1], [], []>} : vector<4x8xbf16>, vector<8x16xbf16>, vector<4x16xf32> -> vector<4x16xf32>
      %65 = arith.addf %56, %64 : vector<4x16xf32>
      %c2_i32_59 = arith.constant 2 : i32
      %66 = arith.muli %c2_i32_59, %3 : i32
      %c2_i32_60 = arith.constant 2 : i32
      %67 = arith.addi %66, %c2_i32_60 : i32
      %c0_61 = arith.constant 0 : index
      %68 = arith.index_cast %67 : i32 to index
      %c0_62 = arith.constant 0 : index
      %c0_63 = arith.constant 0 : index
      %69 = vector.load %arg2[%c0_61, %68, %c0_62, %c0_63] : memref<1x10x5x8xbf16, #tpu.memory_space<vmem>>, vector<1x1x4x8xbf16>
      %70 = vector.shape_cast %69 : vector<1x1x4x8xbf16> to vector<4x8xbf16>
      %c7 = arith.constant 7 : index
      %c0_64 = arith.constant 0 : index
      %c0_65 = arith.constant 0 : index
      %71 = vector.load %arg3[%c7, %c0_64, %c0_65] : memref<9x8x16xbf16, #tpu.memory_space<vmem>>, vector<1x8x16xbf16>
      %72 = vector.shape_cast %71 : vector<1x8x16xbf16> to vector<8x16xbf16>
      %cst_66 = arith.constant dense<0.000000e+00> : vector<4x16xf32>
      %73 = tpu.matmul %70, %72, %cst_66 {dimension_numbers = #tpu.dot_dimension_numbers<[1], [0], [0], [1], [0, 0, 1, 1], [], []>} : vector<4x8xbf16>, vector<8x16xbf16>, vector<4x16xf32> -> vector<4x16xf32>
      %74 = arith.addf %65, %73 : vector<4x16xf32>
      %c2_i32_67 = arith.constant 2 : i32
      %75 = arith.muli %c2_i32_67, %3 : i32
      %c2_i32_68 = arith.constant 2 : i32
      %76 = arith.addi %75, %c2_i32_68 : i32
      %c0_69 = arith.constant 0 : index
      %77 = arith.index_cast %76 : i32 to index
      %c1_70 = arith.constant 1 : index
      %c0_71 = arith.constant 0 : index
      %78 = vector.load %arg1[%c0_69, %77, %c1_70, %c0_71] : memref<1x10x5x8xbf16, #tpu.memory_space<vmem>>, vector<1x1x4x8xbf16>
      %79 = vector.shape_cast %78 : vector<1x1x4x8xbf16> to vector<4x8xbf16>
      %c8 = arith.constant 8 : index
      %c0_72 = arith.constant 0 : index
      %c0_73 = arith.constant 0 : index
      %80 = vector.load %arg3[%c8, %c0_72, %c0_73] : memref<9x8x16xbf16, #tpu.memory_space<vmem>>, vector<1x8x16xbf16>
      %81 = vector.shape_cast %80 : vector<1x8x16xbf16> to vector<8x16xbf16>
      %cst_74 = arith.constant dense<0.000000e+00> : vector<4x16xf32>
      %82 = tpu.matmul %79, %81, %cst_74 {dimension_numbers = #tpu.dot_dimension_numbers<[1], [0], [0], [1], [0, 0, 1, 1], [], []>} : vector<4x8xbf16>, vector<8x16xbf16>, vector<4x16xf32> -> vector<4x16xf32>
      %83 = arith.addf %74, %82 : vector<4x16xf32>
      %84 = vector.broadcast %0 : vector<1x16xf32> to vector<4x16xf32>
      %85 = arith.addf %83, %84 : vector<4x16xf32>
      %cst_75 = arith.constant 5.000000e-01 : f32
      %86 = vector.broadcast %cst_75 : f32 to vector<4x16xf32>
      %87 = arith.mulf %86, %85 : vector<4x16xf32>
      %cst_76 = arith.constant 4.471500e-02 : f32
      %88 = vector.broadcast %cst_76 : f32 to vector<4x16xf32>
      %89 = arith.mulf %88, %85 : vector<4x16xf32>
      %90 = arith.mulf %89, %85 : vector<4x16xf32>
      %91 = arith.mulf %90, %85 : vector<4x16xf32>
      %92 = arith.addf %85, %91 : vector<4x16xf32>
      %cst_77 = arith.constant 0.797884583 : f32
      %93 = vector.broadcast %cst_77 : f32 to vector<4x16xf32>
      %94 = arith.mulf %93, %92 : vector<4x16xf32>
      %95 = math.tanh %94 : vector<4x16xf32>
      %cst_78 = arith.constant 1.000000e+00 : f32
      %96 = vector.broadcast %cst_78 : f32 to vector<4x16xf32>
      %97 = arith.addf %96, %95 : vector<4x16xf32>
      %98 = arith.mulf %87, %97 : vector<4x16xf32>
      %99 = arith.truncf %98 : vector<4x16xf32> to vector<4x16xbf16>
      %c0_79 = arith.constant 0 : index
      %100 = arith.index_cast %3 : i32 to index
      %c0_80 = arith.constant 0 : index
      %c0_81 = arith.constant 0 : index
      %101 = vector.load %arg5[%c0_79, %100, %c0_80, %c0_81] : memref<1x4x4x16xbf16, #tpu.memory_space<vmem>>, vector<1x1x4x16xbf16>
      %102 = vector.shape_cast %101 : vector<1x1x4x16xbf16> to vector<4x16xbf16>
      %103 = vector.shape_cast %99 : vector<4x16xbf16> to vector<1x1x4x16xbf16>
      tpu.vector_store %arg5[%c0_79, %100, %c0_80, %c0_81], %103 {strides = array<i32>} : memref<1x4x4x16xbf16, #tpu.memory_space<vmem>>, vector<1x1x4x16xbf16>,
    }
    %c4_i32_1 = arith.constant 4 : i32
    return
  }
  func.func @transform_0(%arg0: i32) -> (i32, i32, i32, i32) {
    %c0_i32 = arith.constant 0 : i32
    %c0_i32_0 = arith.constant 0 : i32
    %c0_i32_1 = arith.constant 0 : i32
    %c0_i32_2 = arith.constant 0 : i32
    return %arg0, %c0_i32, %c0_i32_0, %c0_i32_1 : i32, i32, i32, i32
  }
  func.func @transform_1(%arg0: i32) -> (i32, i32, i32, i32) {
    %c0_i32 = arith.constant 0 : i32
    %c0_i32_0 = arith.constant 0 : i32
    %c0_i32_1 = arith.constant 0 : i32
    %c0_i32_2 = arith.constant 0 : i32
    return %arg0, %c0_i32, %c0_i32_0, %c0_i32_1 : i32, i32, i32, i32
  }
  func.func @transform_2(%arg0: i32) -> (i32, i32, i32) {
    %c0_i32 = arith.constant 0 : i32
    %c0_i32_0 = arith.constant 0 : i32
    %c0_i32_1 = arith.constant 0 : i32
    %c0_i32_2 = arith.constant 0 : i32
    return %c0_i32, %c0_i32_0, %c0_i32_1 : i32, i32, i32
  }
  func.func @transform_3(%arg0: i32) -> (i32, i32) {
    %c0_i32 = arith.constant 0 : i32
    %c0_i32_0 = arith.constant 0 : i32
    %c0_i32_1 = arith.constant 0 : i32
    return %c0_i32, %c0_i32_0 : i32, i32
  }
  func.func @transform_4(%arg0: i32) -> (i32, i32, i32, i32) {
    %c0_i32 = arith.constant 0 : i32
    %c0_i32_0 = arith.constant 0 : i32
    %c0_i32_1 = arith.constant 0 : i32
    %c0_i32_2 = arith.constant 0 : i32
    return %arg0, %c0_i32, %c0_i32_0, %c0_i32_1 : i32, i32, i32, i32
  }
}

module attributes {stable_mosaic.version = 11 : i64} {
  func.func @_conv_s1_kernel(%arg0: i32, %arg1: memref<1x6x6x16xbf16, #tpu.memory_space<vmem>>, %arg2: memref<9x16x16xbf16, #tpu.memory_space<vmem>>, %arg3: memref<1x16xf32, #tpu.memory_space<vmem>>, %arg4: memref<1x4x4x16xbf16, #tpu.memory_space<vmem>>) attributes {dimension_semantics = [#tpu.dimension_semantics<parallel>], iteration_bounds = array<i64: 2>, scalar_prefetch = 0 : i64, scratch_operands = 0 : i64, tpu.core_type = #tpu.core_type<tc>, window_params = [{transform_indices = @transform_0, window_bounds = array<i64: 1, 6, 6, 16>}, {pipeline_mode = #tpu.pipeline_mode<synchronous>, transform_indices = @transform_1, window_bounds = array<i64: 9, 16, 16>}, {pipeline_mode = #tpu.pipeline_mode<synchronous>, transform_indices = @transform_2, window_bounds = array<i64: 1, 16>}, {transform_indices = @transform_3, window_bounds = array<i64: 1, 4, 4, 16>}]} {
    %c0 = arith.constant 0 : index
    %c0_0 = arith.constant 0 : index
    %0 = vector.load %arg3[%c0, %c0_0] : memref<1x16xf32, #tpu.memory_space<vmem>>, vector<1x16xf32>
    %c0_i32 = arith.constant 0 : i32
    %c4_i32 = arith.constant 4 : i32
    %1 = arith.addi %c0_i32, %c4_i32 : i32
    %c1_i32 = arith.constant 1 : i32
    scf.for %arg5 = %c0_i32 to %1 step %c1_i32  : i32 {
      %c1_i32_2 = arith.constant 1 : i32
      %2 = arith.muli %arg5, %c1_i32_2 : i32
      %c0_i32_3 = arith.constant 0 : i32
      %3 = arith.addi %c0_i32_3, %2 : i32
      %c0_i32_4 = arith.constant 0 : i32
      %4 = arith.addi %3, %c0_i32_4 : i32
      %c0_5 = arith.constant 0 : index
      %5 = arith.index_cast %4 : i32 to index
      %c0_6 = arith.constant 0 : index
      %c0_7 = arith.constant 0 : index
      %6 = vector.load %arg1[%c0_5, %5, %c0_6, %c0_7] : memref<1x6x6x16xbf16, #tpu.memory_space<vmem>>, vector<1x1x4x16xbf16>
      %7 = vector.shape_cast %6 : vector<1x1x4x16xbf16> to vector<4x16xbf16>
      %c0_8 = arith.constant 0 : index
      %c0_9 = arith.constant 0 : index
      %c0_10 = arith.constant 0 : index
      %8 = vector.load %arg2[%c0_8, %c0_9, %c0_10] : memref<9x16x16xbf16, #tpu.memory_space<vmem>>, vector<1x16x16xbf16>
      %9 = vector.shape_cast %8 : vector<1x16x16xbf16> to vector<16x16xbf16>
      %cst = arith.constant dense<0.000000e+00> : vector<4x16xf32>
      %10 = tpu.matmul %7, %9, %cst {dimension_numbers = #tpu.dot_dimension_numbers<[1], [0], [0], [1], [0, 0, 1, 1], [], []>} : vector<4x16xbf16>, vector<16x16xbf16>, vector<4x16xf32> -> vector<4x16xf32>
      %c0_i32_11 = arith.constant 0 : i32
      %11 = arith.addi %3, %c0_i32_11 : i32
      %c0_12 = arith.constant 0 : index
      %12 = arith.index_cast %11 : i32 to index
      %c1 = arith.constant 1 : index
      %c0_13 = arith.constant 0 : index
      %13 = vector.load %arg1[%c0_12, %12, %c1, %c0_13] : memref<1x6x6x16xbf16, #tpu.memory_space<vmem>>, vector<1x1x4x16xbf16>
      %14 = vector.shape_cast %13 : vector<1x1x4x16xbf16> to vector<4x16xbf16>
      %c1_14 = arith.constant 1 : index
      %c0_15 = arith.constant 0 : index
      %c0_16 = arith.constant 0 : index
      %15 = vector.load %arg2[%c1_14, %c0_15, %c0_16] : memref<9x16x16xbf16, #tpu.memory_space<vmem>>, vector<1x16x16xbf16>
      %16 = vector.shape_cast %15 : vector<1x16x16xbf16> to vector<16x16xbf16>
      %cst_17 = arith.constant dense<0.000000e+00> : vector<4x16xf32>
      %17 = tpu.matmul %14, %16, %cst_17 {dimension_numbers = #tpu.dot_dimension_numbers<[1], [0], [0], [1], [0, 0, 1, 1], [], []>} : vector<4x16xbf16>, vector<16x16xbf16>, vector<4x16xf32> -> vector<4x16xf32>
      %18 = arith.addf %10, %17 : vector<4x16xf32>
      %c0_i32_18 = arith.constant 0 : i32
      %19 = arith.addi %3, %c0_i32_18 : i32
      %c0_19 = arith.constant 0 : index
      %20 = arith.index_cast %19 : i32 to index
      %c2 = arith.constant 2 : index
      %c0_20 = arith.constant 0 : index
      %21 = vector.load %arg1[%c0_19, %20, %c2, %c0_20] : memref<1x6x6x16xbf16, #tpu.memory_space<vmem>>, vector<1x1x4x16xbf16>
      %22 = vector.shape_cast %21 : vector<1x1x4x16xbf16> to vector<4x16xbf16>
      %c2_21 = arith.constant 2 : index
      %c0_22 = arith.constant 0 : index
      %c0_23 = arith.constant 0 : index
      %23 = vector.load %arg2[%c2_21, %c0_22, %c0_23] : memref<9x16x16xbf16, #tpu.memory_space<vmem>>, vector<1x16x16xbf16>
      %24 = vector.shape_cast %23 : vector<1x16x16xbf16> to vector<16x16xbf16>
      %cst_24 = arith.constant dense<0.000000e+00> : vector<4x16xf32>
      %25 = tpu.matmul %22, %24, %cst_24 {dimension_numbers = #tpu.dot_dimension_numbers<[1], [0], [0], [1], [0, 0, 1, 1], [], []>} : vector<4x16xbf16>, vector<16x16xbf16>, vector<4x16xf32> -> vector<4x16xf32>
      %26 = arith.addf %18, %25 : vector<4x16xf32>
      %c1_i32_25 = arith.constant 1 : i32
      %27 = arith.addi %3, %c1_i32_25 : i32
      %c0_26 = arith.constant 0 : index
      %28 = arith.index_cast %27 : i32 to index
      %c0_27 = arith.constant 0 : index
      %c0_28 = arith.constant 0 : index
      %29 = vector.load %arg1[%c0_26, %28, %c0_27, %c0_28] : memref<1x6x6x16xbf16, #tpu.memory_space<vmem>>, vector<1x1x4x16xbf16>
      %30 = vector.shape_cast %29 : vector<1x1x4x16xbf16> to vector<4x16xbf16>
      %c3 = arith.constant 3 : index
      %c0_29 = arith.constant 0 : index
      %c0_30 = arith.constant 0 : index
      %31 = vector.load %arg2[%c3, %c0_29, %c0_30] : memref<9x16x16xbf16, #tpu.memory_space<vmem>>, vector<1x16x16xbf16>
      %32 = vector.shape_cast %31 : vector<1x16x16xbf16> to vector<16x16xbf16>
      %cst_31 = arith.constant dense<0.000000e+00> : vector<4x16xf32>
      %33 = tpu.matmul %30, %32, %cst_31 {dimension_numbers = #tpu.dot_dimension_numbers<[1], [0], [0], [1], [0, 0, 1, 1], [], []>} : vector<4x16xbf16>, vector<16x16xbf16>, vector<4x16xf32> -> vector<4x16xf32>
      %34 = arith.addf %26, %33 : vector<4x16xf32>
      %c1_i32_32 = arith.constant 1 : i32
      %35 = arith.addi %3, %c1_i32_32 : i32
      %c0_33 = arith.constant 0 : index
      %36 = arith.index_cast %35 : i32 to index
      %c1_34 = arith.constant 1 : index
      %c0_35 = arith.constant 0 : index
      %37 = vector.load %arg1[%c0_33, %36, %c1_34, %c0_35] : memref<1x6x6x16xbf16, #tpu.memory_space<vmem>>, vector<1x1x4x16xbf16>
      %38 = vector.shape_cast %37 : vector<1x1x4x16xbf16> to vector<4x16xbf16>
      %c4 = arith.constant 4 : index
      %c0_36 = arith.constant 0 : index
      %c0_37 = arith.constant 0 : index
      %39 = vector.load %arg2[%c4, %c0_36, %c0_37] : memref<9x16x16xbf16, #tpu.memory_space<vmem>>, vector<1x16x16xbf16>
      %40 = vector.shape_cast %39 : vector<1x16x16xbf16> to vector<16x16xbf16>
      %cst_38 = arith.constant dense<0.000000e+00> : vector<4x16xf32>
      %41 = tpu.matmul %38, %40, %cst_38 {dimension_numbers = #tpu.dot_dimension_numbers<[1], [0], [0], [1], [0, 0, 1, 1], [], []>} : vector<4x16xbf16>, vector<16x16xbf16>, vector<4x16xf32> -> vector<4x16xf32>
      %42 = arith.addf %34, %41 : vector<4x16xf32>
      %c1_i32_39 = arith.constant 1 : i32
      %43 = arith.addi %3, %c1_i32_39 : i32
      %c0_40 = arith.constant 0 : index
      %44 = arith.index_cast %43 : i32 to index
      %c2_41 = arith.constant 2 : index
      %c0_42 = arith.constant 0 : index
      %45 = vector.load %arg1[%c0_40, %44, %c2_41, %c0_42] : memref<1x6x6x16xbf16, #tpu.memory_space<vmem>>, vector<1x1x4x16xbf16>
      %46 = vector.shape_cast %45 : vector<1x1x4x16xbf16> to vector<4x16xbf16>
      %c5 = arith.constant 5 : index
      %c0_43 = arith.constant 0 : index
      %c0_44 = arith.constant 0 : index
      %47 = vector.load %arg2[%c5, %c0_43, %c0_44] : memref<9x16x16xbf16, #tpu.memory_space<vmem>>, vector<1x16x16xbf16>
      %48 = vector.shape_cast %47 : vector<1x16x16xbf16> to vector<16x16xbf16>
      %cst_45 = arith.constant dense<0.000000e+00> : vector<4x16xf32>
      %49 = tpu.matmul %46, %48, %cst_45 {dimension_numbers = #tpu.dot_dimension_numbers<[1], [0], [0], [1], [0, 0, 1, 1], [], []>} : vector<4x16xbf16>, vector<16x16xbf16>, vector<4x16xf32> -> vector<4x16xf32>
      %50 = arith.addf %42, %49 : vector<4x16xf32>
      %c2_i32 = arith.constant 2 : i32
      %51 = arith.addi %3, %c2_i32 : i32
      %c0_46 = arith.constant 0 : index
      %52 = arith.index_cast %51 : i32 to index
      %c0_47 = arith.constant 0 : index
      %c0_48 = arith.constant 0 : index
      %53 = vector.load %arg1[%c0_46, %52, %c0_47, %c0_48] : memref<1x6x6x16xbf16, #tpu.memory_space<vmem>>, vector<1x1x4x16xbf16>
      %54 = vector.shape_cast %53 : vector<1x1x4x16xbf16> to vector<4x16xbf16>
      %c6 = arith.constant 6 : index
      %c0_49 = arith.constant 0 : index
      %c0_50 = arith.constant 0 : index
      %55 = vector.load %arg2[%c6, %c0_49, %c0_50] : memref<9x16x16xbf16, #tpu.memory_space<vmem>>, vector<1x16x16xbf16>
      %56 = vector.shape_cast %55 : vector<1x16x16xbf16> to vector<16x16xbf16>
      %cst_51 = arith.constant dense<0.000000e+00> : vector<4x16xf32>
      %57 = tpu.matmul %54, %56, %cst_51 {dimension_numbers = #tpu.dot_dimension_numbers<[1], [0], [0], [1], [0, 0, 1, 1], [], []>} : vector<4x16xbf16>, vector<16x16xbf16>, vector<4x16xf32> -> vector<4x16xf32>
      %58 = arith.addf %50, %57 : vector<4x16xf32>
      %c2_i32_52 = arith.constant 2 : i32
      %59 = arith.addi %3, %c2_i32_52 : i32
      %c0_53 = arith.constant 0 : index
      %60 = arith.index_cast %59 : i32 to index
      %c1_54 = arith.constant 1 : index
      %c0_55 = arith.constant 0 : index
      %61 = vector.load %arg1[%c0_53, %60, %c1_54, %c0_55] : memref<1x6x6x16xbf16, #tpu.memory_space<vmem>>, vector<1x1x4x16xbf16>
      %62 = vector.shape_cast %61 : vector<1x1x4x16xbf16> to vector<4x16xbf16>
      %c7 = arith.constant 7 : index
      %c0_56 = arith.constant 0 : index
      %c0_57 = arith.constant 0 : index
      %63 = vector.load %arg2[%c7, %c0_56, %c0_57] : memref<9x16x16xbf16, #tpu.memory_space<vmem>>, vector<1x16x16xbf16>
      %64 = vector.shape_cast %63 : vector<1x16x16xbf16> to vector<16x16xbf16>
      %cst_58 = arith.constant dense<0.000000e+00> : vector<4x16xf32>
      %65 = tpu.matmul %62, %64, %cst_58 {dimension_numbers = #tpu.dot_dimension_numbers<[1], [0], [0], [1], [0, 0, 1, 1], [], []>} : vector<4x16xbf16>, vector<16x16xbf16>, vector<4x16xf32> -> vector<4x16xf32>
      %66 = arith.addf %58, %65 : vector<4x16xf32>
      %c2_i32_59 = arith.constant 2 : i32
      %67 = arith.addi %3, %c2_i32_59 : i32
      %c0_60 = arith.constant 0 : index
      %68 = arith.index_cast %67 : i32 to index
      %c2_61 = arith.constant 2 : index
      %c0_62 = arith.constant 0 : index
      %69 = vector.load %arg1[%c0_60, %68, %c2_61, %c0_62] : memref<1x6x6x16xbf16, #tpu.memory_space<vmem>>, vector<1x1x4x16xbf16>
      %70 = vector.shape_cast %69 : vector<1x1x4x16xbf16> to vector<4x16xbf16>
      %c8 = arith.constant 8 : index
      %c0_63 = arith.constant 0 : index
      %c0_64 = arith.constant 0 : index
      %71 = vector.load %arg2[%c8, %c0_63, %c0_64] : memref<9x16x16xbf16, #tpu.memory_space<vmem>>, vector<1x16x16xbf16>
      %72 = vector.shape_cast %71 : vector<1x16x16xbf16> to vector<16x16xbf16>
      %cst_65 = arith.constant dense<0.000000e+00> : vector<4x16xf32>
      %73 = tpu.matmul %70, %72, %cst_65 {dimension_numbers = #tpu.dot_dimension_numbers<[1], [0], [0], [1], [0, 0, 1, 1], [], []>} : vector<4x16xbf16>, vector<16x16xbf16>, vector<4x16xf32> -> vector<4x16xf32>
      %74 = arith.addf %66, %73 : vector<4x16xf32>
      %75 = vector.broadcast %0 : vector<1x16xf32> to vector<4x16xf32>
      %76 = arith.addf %74, %75 : vector<4x16xf32>
      %cst_66 = arith.constant 5.000000e-01 : f32
      %77 = vector.broadcast %cst_66 : f32 to vector<4x16xf32>
      %78 = arith.mulf %77, %76 : vector<4x16xf32>
      %cst_67 = arith.constant 4.471500e-02 : f32
      %79 = vector.broadcast %cst_67 : f32 to vector<4x16xf32>
      %80 = arith.mulf %79, %76 : vector<4x16xf32>
      %81 = arith.mulf %80, %76 : vector<4x16xf32>
      %82 = arith.mulf %81, %76 : vector<4x16xf32>
      %83 = arith.addf %76, %82 : vector<4x16xf32>
      %cst_68 = arith.constant 0.797884583 : f32
      %84 = vector.broadcast %cst_68 : f32 to vector<4x16xf32>
      %85 = arith.mulf %84, %83 : vector<4x16xf32>
      %86 = math.tanh %85 : vector<4x16xf32>
      %cst_69 = arith.constant 1.000000e+00 : f32
      %87 = vector.broadcast %cst_69 : f32 to vector<4x16xf32>
      %88 = arith.addf %87, %86 : vector<4x16xf32>
      %89 = arith.mulf %78, %88 : vector<4x16xf32>
      %90 = arith.truncf %89 : vector<4x16xf32> to vector<4x16xbf16>
      %c0_70 = arith.constant 0 : index
      %91 = arith.index_cast %3 : i32 to index
      %c0_71 = arith.constant 0 : index
      %c0_72 = arith.constant 0 : index
      %92 = vector.load %arg4[%c0_70, %91, %c0_71, %c0_72] : memref<1x4x4x16xbf16, #tpu.memory_space<vmem>>, vector<1x1x4x16xbf16>
      %93 = vector.shape_cast %92 : vector<1x1x4x16xbf16> to vector<4x16xbf16>
      %94 = vector.shape_cast %90 : vector<4x16xbf16> to vector<1x1x4x16xbf16>
      tpu.vector_store %arg4[%c0_70, %91, %c0_71, %c0_72], %94 {strides = array<i32>} : memref<1x4x4x16xbf16, #tpu.memory_space<vmem>>, vector<1x1x4x16xbf16>,
    }
    %c4_i32_1 = arith.constant 4 : i32
    return
  }
  func.func @transform_0(%arg0: i32) -> (i32, i32, i32, i32) {
    %c0_i32 = arith.constant 0 : i32
    %c0_i32_0 = arith.constant 0 : i32
    %c0_i32_1 = arith.constant 0 : i32
    %c0_i32_2 = arith.constant 0 : i32
    return %arg0, %c0_i32, %c0_i32_0, %c0_i32_1 : i32, i32, i32, i32
  }
  func.func @transform_1(%arg0: i32) -> (i32, i32, i32) {
    %c0_i32 = arith.constant 0 : i32
    %c0_i32_0 = arith.constant 0 : i32
    %c0_i32_1 = arith.constant 0 : i32
    %c0_i32_2 = arith.constant 0 : i32
    return %c0_i32, %c0_i32_0, %c0_i32_1 : i32, i32, i32
  }
  func.func @transform_2(%arg0: i32) -> (i32, i32) {
    %c0_i32 = arith.constant 0 : i32
    %c0_i32_0 = arith.constant 0 : i32
    %c0_i32_1 = arith.constant 0 : i32
    return %c0_i32, %c0_i32_0 : i32, i32
  }
  func.func @transform_3(%arg0: i32) -> (i32, i32, i32, i32) {
    %c0_i32 = arith.constant 0 : i32
    %c0_i32_0 = arith.constant 0 : i32
    %c0_i32_1 = arith.constant 0 : i32
    %c0_i32_2 = arith.constant 0 : i32
    return %arg0, %c0_i32, %c0_i32_0, %c0_i32_1 : i32, i32, i32, i32
  }
}

module attributes {stable_mosaic.version = 11 : i64} {
  func.func @_conv_s2_kernel(%arg0: i32, %arg1: memref<1x6x3x16xbf16, #tpu.memory_space<vmem>>, %arg2: memref<1x6x3x16xbf16, #tpu.memory_space<vmem>>, %arg3: memref<9x16x16xbf16, #tpu.memory_space<vmem>>, %arg4: memref<1x16xf32, #tpu.memory_space<vmem>>, %arg5: memref<1x2x2x16xbf16, #tpu.memory_space<vmem>>) attributes {dimension_semantics = [#tpu.dimension_semantics<parallel>], iteration_bounds = array<i64: 2>, scalar_prefetch = 0 : i64, scratch_operands = 0 : i64, tpu.core_type = #tpu.core_type<tc>, window_params = [{transform_indices = @transform_0, window_bounds = array<i64: 1, 6, 3, 16>}, {transform_indices = @transform_1, window_bounds = array<i64: 1, 6, 3, 16>}, {pipeline_mode = #tpu.pipeline_mode<synchronous>, transform_indices = @transform_2, window_bounds = array<i64: 9, 16, 16>}, {pipeline_mode = #tpu.pipeline_mode<synchronous>, transform_indices = @transform_3, window_bounds = array<i64: 1, 16>}, {transform_indices = @transform_4, window_bounds = array<i64: 1, 2, 2, 16>}]} {
    %c0 = arith.constant 0 : index
    %c0_0 = arith.constant 0 : index
    %0 = vector.load %arg4[%c0, %c0_0] : memref<1x16xf32, #tpu.memory_space<vmem>>, vector<1x16xf32>
    %c0_i32 = arith.constant 0 : i32
    %c2_i32 = arith.constant 2 : i32
    %1 = arith.addi %c0_i32, %c2_i32 : i32
    %c1_i32 = arith.constant 1 : i32
    scf.for %arg6 = %c0_i32 to %1 step %c1_i32  : i32 {
      %c1_i32_2 = arith.constant 1 : i32
      %2 = arith.muli %arg6, %c1_i32_2 : i32
      %c0_i32_3 = arith.constant 0 : i32
      %3 = arith.addi %c0_i32_3, %2 : i32
      %c2_i32_4 = arith.constant 2 : i32
      %4 = arith.muli %c2_i32_4, %3 : i32
      %c0_i32_5 = arith.constant 0 : i32
      %5 = arith.addi %4, %c0_i32_5 : i32
      %c0_6 = arith.constant 0 : index
      %6 = arith.index_cast %5 : i32 to index
      %c0_7 = arith.constant 0 : index
      %c0_8 = arith.constant 0 : index
      %7 = vector.load %arg1[%c0_6, %6, %c0_7, %c0_8] : memref<1x6x3x16xbf16, #tpu.memory_space<vmem>>, vector<1x1x2x16xbf16>
      %8 = vector.shape_cast %7 : vector<1x1x2x16xbf16> to vector<2x16xbf16>
      %c0_9 = arith.constant 0 : index
      %c0_10 = arith.constant 0 : index
      %c0_11 = arith.constant 0 : index
      %9 = vector.load %arg3[%c0_9, %c0_10, %c0_11] : memref<9x16x16xbf16, #tpu.memory_space<vmem>>, vector<1x16x16xbf16>
      %10 = vector.shape_cast %9 : vector<1x16x16xbf16> to vector<16x16xbf16>
      %cst = arith.constant dense<0.000000e+00> : vector<2x16xf32>
      %11 = tpu.matmul %8, %10, %cst {dimension_numbers = #tpu.dot_dimension_numbers<[1], [0], [0], [1], [0, 0, 1, 1], [], []>} : vector<2x16xbf16>, vector<16x16xbf16>, vector<2x16xf32> -> vector<2x16xf32>
      %c2_i32_12 = arith.constant 2 : i32
      %12 = arith.muli %c2_i32_12, %3 : i32
      %c0_i32_13 = arith.constant 0 : i32
      %13 = arith.addi %12, %c0_i32_13 : i32
      %c0_14 = arith.constant 0 : index
      %14 = arith.index_cast %13 : i32 to index
      %c0_15 = arith.constant 0 : index
      %c0_16 = arith.constant 0 : index
      %15 = vector.load %arg2[%c0_14, %14, %c0_15, %c0_16] : memref<1x6x3x16xbf16, #tpu.memory_space<vmem>>, vector<1x1x2x16xbf16>
      %16 = vector.shape_cast %15 : vector<1x1x2x16xbf16> to vector<2x16xbf16>
      %c1 = arith.constant 1 : index
      %c0_17 = arith.constant 0 : index
      %c0_18 = arith.constant 0 : index
      %17 = vector.load %arg3[%c1, %c0_17, %c0_18] : memref<9x16x16xbf16, #tpu.memory_space<vmem>>, vector<1x16x16xbf16>
      %18 = vector.shape_cast %17 : vector<1x16x16xbf16> to vector<16x16xbf16>
      %cst_19 = arith.constant dense<0.000000e+00> : vector<2x16xf32>
      %19 = tpu.matmul %16, %18, %cst_19 {dimension_numbers = #tpu.dot_dimension_numbers<[1], [0], [0], [1], [0, 0, 1, 1], [], []>} : vector<2x16xbf16>, vector<16x16xbf16>, vector<2x16xf32> -> vector<2x16xf32>
      %20 = arith.addf %11, %19 : vector<2x16xf32>
      %c2_i32_20 = arith.constant 2 : i32
      %21 = arith.muli %c2_i32_20, %3 : i32
      %c0_i32_21 = arith.constant 0 : i32
      %22 = arith.addi %21, %c0_i32_21 : i32
      %c0_22 = arith.constant 0 : index
      %23 = arith.index_cast %22 : i32 to index
      %c1_23 = arith.constant 1 : index
      %c0_24 = arith.constant 0 : index
      %24 = vector.load %arg1[%c0_22, %23, %c1_23, %c0_24] : memref<1x6x3x16xbf16, #tpu.memory_space<vmem>>, vector<1x1x2x16xbf16>
      %25 = vector.shape_cast %24 : vector<1x1x2x16xbf16> to vector<2x16xbf16>
      %c2 = arith.constant 2 : index
      %c0_25 = arith.constant 0 : index
      %c0_26 = arith.constant 0 : index
      %26 = vector.load %arg3[%c2, %c0_25, %c0_26] : memref<9x16x16xbf16, #tpu.memory_space<vmem>>, vector<1x16x16xbf16>
      %27 = vector.shape_cast %26 : vector<1x16x16xbf16> to vector<16x16xbf16>
      %cst_27 = arith.constant dense<0.000000e+00> : vector<2x16xf32>
      %28 = tpu.matmul %25, %27, %cst_27 {dimension_numbers = #tpu.dot_dimension_numbers<[1], [0], [0], [1], [0, 0, 1, 1], [], []>} : vector<2x16xbf16>, vector<16x16xbf16>, vector<2x16xf32> -> vector<2x16xf32>
      %29 = arith.addf %20, %28 : vector<2x16xf32>
      %c2_i32_28 = arith.constant 2 : i32
      %30 = arith.muli %c2_i32_28, %3 : i32
      %c1_i32_29 = arith.constant 1 : i32
      %31 = arith.addi %30, %c1_i32_29 : i32
      %c0_30 = arith.constant 0 : index
      %32 = arith.index_cast %31 : i32 to index
      %c0_31 = arith.constant 0 : index
      %c0_32 = arith.constant 0 : index
      %33 = vector.load %arg1[%c0_30, %32, %c0_31, %c0_32] : memref<1x6x3x16xbf16, #tpu.memory_space<vmem>>, vector<1x1x2x16xbf16>
      %34 = vector.shape_cast %33 : vector<1x1x2x16xbf16> to vector<2x16xbf16>
      %c3 = arith.constant 3 : index
      %c0_33 = arith.constant 0 : index
      %c0_34 = arith.constant 0 : index
      %35 = vector.load %arg3[%c3, %c0_33, %c0_34] : memref<9x16x16xbf16, #tpu.memory_space<vmem>>, vector<1x16x16xbf16>
      %36 = vector.shape_cast %35 : vector<1x16x16xbf16> to vector<16x16xbf16>
      %cst_35 = arith.constant dense<0.000000e+00> : vector<2x16xf32>
      %37 = tpu.matmul %34, %36, %cst_35 {dimension_numbers = #tpu.dot_dimension_numbers<[1], [0], [0], [1], [0, 0, 1, 1], [], []>} : vector<2x16xbf16>, vector<16x16xbf16>, vector<2x16xf32> -> vector<2x16xf32>
      %38 = arith.addf %29, %37 : vector<2x16xf32>
      %c2_i32_36 = arith.constant 2 : i32
      %39 = arith.muli %c2_i32_36, %3 : i32
      %c1_i32_37 = arith.constant 1 : i32
      %40 = arith.addi %39, %c1_i32_37 : i32
      %c0_38 = arith.constant 0 : index
      %41 = arith.index_cast %40 : i32 to index
      %c0_39 = arith.constant 0 : index
      %c0_40 = arith.constant 0 : index
      %42 = vector.load %arg2[%c0_38, %41, %c0_39, %c0_40] : memref<1x6x3x16xbf16, #tpu.memory_space<vmem>>, vector<1x1x2x16xbf16>
      %43 = vector.shape_cast %42 : vector<1x1x2x16xbf16> to vector<2x16xbf16>
      %c4 = arith.constant 4 : index
      %c0_41 = arith.constant 0 : index
      %c0_42 = arith.constant 0 : index
      %44 = vector.load %arg3[%c4, %c0_41, %c0_42] : memref<9x16x16xbf16, #tpu.memory_space<vmem>>, vector<1x16x16xbf16>
      %45 = vector.shape_cast %44 : vector<1x16x16xbf16> to vector<16x16xbf16>
      %cst_43 = arith.constant dense<0.000000e+00> : vector<2x16xf32>
      %46 = tpu.matmul %43, %45, %cst_43 {dimension_numbers = #tpu.dot_dimension_numbers<[1], [0], [0], [1], [0, 0, 1, 1], [], []>} : vector<2x16xbf16>, vector<16x16xbf16>, vector<2x16xf32> -> vector<2x16xf32>
      %47 = arith.addf %38, %46 : vector<2x16xf32>
      %c2_i32_44 = arith.constant 2 : i32
      %48 = arith.muli %c2_i32_44, %3 : i32
      %c1_i32_45 = arith.constant 1 : i32
      %49 = arith.addi %48, %c1_i32_45 : i32
      %c0_46 = arith.constant 0 : index
      %50 = arith.index_cast %49 : i32 to index
      %c1_47 = arith.constant 1 : index
      %c0_48 = arith.constant 0 : index
      %51 = vector.load %arg1[%c0_46, %50, %c1_47, %c0_48] : memref<1x6x3x16xbf16, #tpu.memory_space<vmem>>, vector<1x1x2x16xbf16>
      %52 = vector.shape_cast %51 : vector<1x1x2x16xbf16> to vector<2x16xbf16>
      %c5 = arith.constant 5 : index
      %c0_49 = arith.constant 0 : index
      %c0_50 = arith.constant 0 : index
      %53 = vector.load %arg3[%c5, %c0_49, %c0_50] : memref<9x16x16xbf16, #tpu.memory_space<vmem>>, vector<1x16x16xbf16>
      %54 = vector.shape_cast %53 : vector<1x16x16xbf16> to vector<16x16xbf16>
      %cst_51 = arith.constant dense<0.000000e+00> : vector<2x16xf32>
      %55 = tpu.matmul %52, %54, %cst_51 {dimension_numbers = #tpu.dot_dimension_numbers<[1], [0], [0], [1], [0, 0, 1, 1], [], []>} : vector<2x16xbf16>, vector<16x16xbf16>, vector<2x16xf32> -> vector<2x16xf32>
      %56 = arith.addf %47, %55 : vector<2x16xf32>
      %c2_i32_52 = arith.constant 2 : i32
      %57 = arith.muli %c2_i32_52, %3 : i32
      %c2_i32_53 = arith.constant 2 : i32
      %58 = arith.addi %57, %c2_i32_53 : i32
      %c0_54 = arith.constant 0 : index
      %59 = arith.index_cast %58 : i32 to index
      %c0_55 = arith.constant 0 : index
      %c0_56 = arith.constant 0 : index
      %60 = vector.load %arg1[%c0_54, %59, %c0_55, %c0_56] : memref<1x6x3x16xbf16, #tpu.memory_space<vmem>>, vector<1x1x2x16xbf16>
      %61 = vector.shape_cast %60 : vector<1x1x2x16xbf16> to vector<2x16xbf16>
      %c6 = arith.constant 6 : index
      %c0_57 = arith.constant 0 : index
      %c0_58 = arith.constant 0 : index
      %62 = vector.load %arg3[%c6, %c0_57, %c0_58] : memref<9x16x16xbf16, #tpu.memory_space<vmem>>, vector<1x16x16xbf16>
      %63 = vector.shape_cast %62 : vector<1x16x16xbf16> to vector<16x16xbf16>
      %cst_59 = arith.constant dense<0.000000e+00> : vector<2x16xf32>
      %64 = tpu.matmul %61, %63, %cst_59 {dimension_numbers = #tpu.dot_dimension_numbers<[1], [0], [0], [1], [0, 0, 1, 1], [], []>} : vector<2x16xbf16>, vector<16x16xbf16>, vector<2x16xf32> -> vector<2x16xf32>
      %65 = arith.addf %56, %64 : vector<2x16xf32>
      %c2_i32_60 = arith.constant 2 : i32
      %66 = arith.muli %c2_i32_60, %3 : i32
      %c2_i32_61 = arith.constant 2 : i32
      %67 = arith.addi %66, %c2_i32_61 : i32
      %c0_62 = arith.constant 0 : index
      %68 = arith.index_cast %67 : i32 to index
      %c0_63 = arith.constant 0 : index
      %c0_64 = arith.constant 0 : index
      %69 = vector.load %arg2[%c0_62, %68, %c0_63, %c0_64] : memref<1x6x3x16xbf16, #tpu.memory_space<vmem>>, vector<1x1x2x16xbf16>
      %70 = vector.shape_cast %69 : vector<1x1x2x16xbf16> to vector<2x16xbf16>
      %c7 = arith.constant 7 : index
      %c0_65 = arith.constant 0 : index
      %c0_66 = arith.constant 0 : index
      %71 = vector.load %arg3[%c7, %c0_65, %c0_66] : memref<9x16x16xbf16, #tpu.memory_space<vmem>>, vector<1x16x16xbf16>
      %72 = vector.shape_cast %71 : vector<1x16x16xbf16> to vector<16x16xbf16>
      %cst_67 = arith.constant dense<0.000000e+00> : vector<2x16xf32>
      %73 = tpu.matmul %70, %72, %cst_67 {dimension_numbers = #tpu.dot_dimension_numbers<[1], [0], [0], [1], [0, 0, 1, 1], [], []>} : vector<2x16xbf16>, vector<16x16xbf16>, vector<2x16xf32> -> vector<2x16xf32>
      %74 = arith.addf %65, %73 : vector<2x16xf32>
      %c2_i32_68 = arith.constant 2 : i32
      %75 = arith.muli %c2_i32_68, %3 : i32
      %c2_i32_69 = arith.constant 2 : i32
      %76 = arith.addi %75, %c2_i32_69 : i32
      %c0_70 = arith.constant 0 : index
      %77 = arith.index_cast %76 : i32 to index
      %c1_71 = arith.constant 1 : index
      %c0_72 = arith.constant 0 : index
      %78 = vector.load %arg1[%c0_70, %77, %c1_71, %c0_72] : memref<1x6x3x16xbf16, #tpu.memory_space<vmem>>, vector<1x1x2x16xbf16>
      %79 = vector.shape_cast %78 : vector<1x1x2x16xbf16> to vector<2x16xbf16>
      %c8 = arith.constant 8 : index
      %c0_73 = arith.constant 0 : index
      %c0_74 = arith.constant 0 : index
      %80 = vector.load %arg3[%c8, %c0_73, %c0_74] : memref<9x16x16xbf16, #tpu.memory_space<vmem>>, vector<1x16x16xbf16>
      %81 = vector.shape_cast %80 : vector<1x16x16xbf16> to vector<16x16xbf16>
      %cst_75 = arith.constant dense<0.000000e+00> : vector<2x16xf32>
      %82 = tpu.matmul %79, %81, %cst_75 {dimension_numbers = #tpu.dot_dimension_numbers<[1], [0], [0], [1], [0, 0, 1, 1], [], []>} : vector<2x16xbf16>, vector<16x16xbf16>, vector<2x16xf32> -> vector<2x16xf32>
      %83 = arith.addf %74, %82 : vector<2x16xf32>
      %84 = vector.broadcast %0 : vector<1x16xf32> to vector<2x16xf32>
      %85 = arith.addf %83, %84 : vector<2x16xf32>
      %cst_76 = arith.constant 5.000000e-01 : f32
      %86 = vector.broadcast %cst_76 : f32 to vector<2x16xf32>
      %87 = arith.mulf %86, %85 : vector<2x16xf32>
      %cst_77 = arith.constant 4.471500e-02 : f32
      %88 = vector.broadcast %cst_77 : f32 to vector<2x16xf32>
      %89 = arith.mulf %88, %85 : vector<2x16xf32>
      %90 = arith.mulf %89, %85 : vector<2x16xf32>
      %91 = arith.mulf %90, %85 : vector<2x16xf32>
      %92 = arith.addf %85, %91 : vector<2x16xf32>
      %cst_78 = arith.constant 0.797884583 : f32
      %93 = vector.broadcast %cst_78 : f32 to vector<2x16xf32>
      %94 = arith.mulf %93, %92 : vector<2x16xf32>
      %95 = math.tanh %94 : vector<2x16xf32>
      %cst_79 = arith.constant 1.000000e+00 : f32
      %96 = vector.broadcast %cst_79 : f32 to vector<2x16xf32>
      %97 = arith.addf %96, %95 : vector<2x16xf32>
      %98 = arith.mulf %87, %97 : vector<2x16xf32>
      %99 = arith.truncf %98 : vector<2x16xf32> to vector<2x16xbf16>
      %c0_80 = arith.constant 0 : index
      %100 = arith.index_cast %3 : i32 to index
      %c0_81 = arith.constant 0 : index
      %c0_82 = arith.constant 0 : index
      %101 = vector.load %arg5[%c0_80, %100, %c0_81, %c0_82] : memref<1x2x2x16xbf16, #tpu.memory_space<vmem>>, vector<1x1x2x16xbf16>
      %102 = vector.shape_cast %101 : vector<1x1x2x16xbf16> to vector<2x16xbf16>
      %103 = vector.shape_cast %99 : vector<2x16xbf16> to vector<1x1x2x16xbf16>
      tpu.vector_store %arg5[%c0_80, %100, %c0_81, %c0_82], %103 {strides = array<i32>} : memref<1x2x2x16xbf16, #tpu.memory_space<vmem>>, vector<1x1x2x16xbf16>,
    }
    %c2_i32_1 = arith.constant 2 : i32
    return
  }
  func.func @transform_0(%arg0: i32) -> (i32, i32, i32, i32) {
    %c0_i32 = arith.constant 0 : i32
    %c0_i32_0 = arith.constant 0 : i32
    %c0_i32_1 = arith.constant 0 : i32
    %c0_i32_2 = arith.constant 0 : i32
    return %arg0, %c0_i32, %c0_i32_0, %c0_i32_1 : i32, i32, i32, i32
  }
  func.func @transform_1(%arg0: i32) -> (i32, i32, i32, i32) {
    %c0_i32 = arith.constant 0 : i32
    %c0_i32_0 = arith.constant 0 : i32
    %c0_i32_1 = arith.constant 0 : i32
    %c0_i32_2 = arith.constant 0 : i32
    return %arg0, %c0_i32, %c0_i32_0, %c0_i32_1 : i32, i32, i32, i32
  }
  func.func @transform_2(%arg0: i32) -> (i32, i32, i32) {
    %c0_i32 = arith.constant 0 : i32
    %c0_i32_0 = arith.constant 0 : i32
    %c0_i32_1 = arith.constant 0 : i32
    %c0_i32_2 = arith.constant 0 : i32
    return %c0_i32, %c0_i32_0, %c0_i32_1 : i32, i32, i32
  }
  func.func @transform_3(%arg0: i32) -> (i32, i32) {
    %c0_i32 = arith.constant 0 : i32
    %c0_i32_0 = arith.constant 0 : i32
    %c0_i32_1 = arith.constant 0 : i32
    return %c0_i32, %c0_i32_0 : i32, i32
  }
  func.func @transform_4(%arg0: i32) -> (i32, i32, i32, i32) {
    %c0_i32 = arith.constant 0 : i32
    %c0_i32_0 = arith.constant 0 : i32
    %c0_i32_1 = arith.constant 0 : i32
    %c0_i32_2 = arith.constant 0 : i32
    return %arg0, %c0_i32, %c0_i32_0, %c0_i32_1 : i32, i32, i32, i32
  }
}

module attributes {stable_mosaic.version = 11 : i64} {
  func.func @_linear_single_kernel(%arg0: i32, %arg1: memref<2x64xbf16, #tpu.memory_space<vmem>>, %arg2: memref<64x32xbf16, #tpu.memory_space<vmem>>, %arg3: memref<1x32xf32, #tpu.memory_space<vmem>>, %arg4: memref<2x32xf32, #tpu.memory_space<vmem>>) attributes {dimension_semantics = [#tpu.dimension_semantics<arbitrary>], iteration_bounds = array<i64: 1>, scalar_prefetch = 0 : i64, scratch_operands = 0 : i64, tpu.core_type = #tpu.core_type<tc>, window_params = [{transform_indices = @transform_0, window_bounds = array<i64: 2, 64>}, {transform_indices = @transform_1, window_bounds = array<i64: 64, 32>}, {pipeline_mode = #tpu.pipeline_mode<synchronous>, transform_indices = @transform_2, window_bounds = array<i64: 1, 32>}, {pipeline_mode = #tpu.pipeline_mode<synchronous>, transform_indices = @transform_3, window_bounds = array<i64: 2, 32>}]} {
    %c0 = arith.constant 0 : index
    %c0_0 = arith.constant 0 : index
    %0 = vector.load %arg3[%c0, %c0_0] : memref<1x32xf32, #tpu.memory_space<vmem>>, vector<1x32xf32>
    %c0_1 = arith.constant 0 : index
    %c0_2 = arith.constant 0 : index
    %1 = vector.load %arg1[%c0_1, %c0_2] : memref<2x64xbf16, #tpu.memory_space<vmem>>, vector<2x64xbf16>
    %c0_3 = arith.constant 0 : index
    %c0_4 = arith.constant 0 : index
    %2 = vector.load %arg2[%c0_3, %c0_4] : memref<64x32xbf16, #tpu.memory_space<vmem>>, vector<64x32xbf16>
    %cst = arith.constant dense<0.000000e+00> : vector<2x32xf32>
    %3 = tpu.matmul %1, %2, %cst {dimension_numbers = #tpu.dot_dimension_numbers<[1], [0], [0], [1], [0, 0, 1, 1], [], []>} : vector<2x64xbf16>, vector<64x32xbf16>, vector<2x32xf32> -> vector<2x32xf32>
    %4 = vector.broadcast %0 : vector<1x32xf32> to vector<2x32xf32>
    %5 = arith.addf %4, %3 : vector<2x32xf32>
    %c0_5 = arith.constant 0 : index
    %c0_6 = arith.constant 0 : index
    %6 = vector.load %arg4[%c0_5, %c0_6] : memref<2x32xf32, #tpu.memory_space<vmem>>, vector<2x32xf32>
    tpu.vector_store %arg4[%c0_5, %c0_6], %5 {strides = array<i32>} : memref<2x32xf32, #tpu.memory_space<vmem>>, vector<2x32xf32>,
    return
  }
  func.func @transform_0(%arg0: i32) -> (i32, i32) {
    %c0_i32 = arith.constant 0 : i32
    %c0_i32_0 = arith.constant 0 : i32
    return %c0_i32, %arg0 : i32, i32
  }
  func.func @transform_1(%arg0: i32) -> (i32, i32) {
    %c0_i32 = arith.constant 0 : i32
    %c0_i32_0 = arith.constant 0 : i32
    return %arg0, %c0_i32 : i32, i32
  }
  func.func @transform_2(%arg0: i32) -> (i32, i32) {
    %c0_i32 = arith.constant 0 : i32
    %c0_i32_0 = arith.constant 0 : i32
    %c0_i32_1 = arith.constant 0 : i32
    return %c0_i32, %c0_i32_0 : i32, i32
  }
  func.func @transform_3(%arg0: i32) -> (i32, i32) {
    %c0_i32 = arith.constant 0 : i32
    %c0_i32_0 = arith.constant 0 : i32
    %c0_i32_1 = arith.constant 0 : i32
    return %c0_i32, %c0_i32_0 : i32, i32
  }
}

</mosaic_0001>

<llo_original>
// kernel: deep_encoder.7
$region0: #{deep_encoder.7}
  #allocation0 [shape = 'u32[]', space=smem, size = 0x4, offset = 0x4, fixed_abs, tag = 'smem constant byte address 0x4 - core index']
  #allocation1 [shape = 'u32[144,128]{1,0:T(1,128)}', space=vmem, size = 0x12000, scoped, tag = 'internal scratch']
  %s0 = inlined_call_operand.vmem [shape: bf16[2,10,10,8], index: 0, kind: input, shape index: {}]
  %s1 = inlined_call_operand.vmem [shape: bf16[9,8,8], index: 1, kind: input, shape index: {}]
  %s2 = inlined_call_operand.vmem [shape: f32[1,8], index: 2, kind: input, shape index: {}]
  %s3 = inlined_call_operand.vmem [shape: bf16[2,8,8,8], index: 3, kind: output, shape index: {}]
  %s4 = sld [smem:[#allocation0]]
  $region52: #{deep_encoder.7} parent=0
    _
  %s6 = ssub.s32 1, %s4
  %s7 = scalar_select 0, %s6, %s4
  loop: start=0, step=1, limit=4
  $region2: #{deep_encoder.7} parent=0 // loop_pre_header
    _
  $region3: #{deep_encoder.7} parent=0 // loop_header
    %s9 = sphi 0, %s13
    %p10 = scmp.ge.s32.totalorder %s9, 4
    %s19 = sphi 0, %s21
    %s22 = sphi 0, %s19
    %s23 = sphi 0, %s22
    %s39 = sphi 0, %s23
    %s43 = sphi 0, %s43
    %s45 = sphi 0, %s43
    %s46 = sphi 0, %s45
    %s60 = sphi 0, %s46
    %s64 = sphi 0, %s64
    %s66 = sphi 0, %s64
    %s67 = sphi 0, %s66
    %s81 = sphi 0, %s67
    %s87 = sphi 0, %s89
    %s90 = sphi 0, %s87
    %s91 = sphi 0, %s90
    %s107 = sphi 0, %s91
  $region4: #{deep_encoder.7} parent=0 // loop_header_branch
    %12 = sbr.rel (%p10) target = $region8
  $region5: #{deep_encoder.7} parent=0 // loop_body
    %s14 = ssub.s32 %s9, 1
    %s15 = ssub.s32 %s9, 2
    %s16 = sadd.s32 %s9, 1
    %s17 = ssub.s32 %s9, %s16
    %p18 = scmp.eq.s32.totalorder %s17, 0
    %s20 = sadd.s32 %s19, 1
    %s21 = scalar_select %p18, %s19, %s20
    %p24 = pneg %p18
    %p25 = scmp.eq.s32.totalorder %s9, 1
    %p26 = por %p24, %p25
    %p27 = scmp.ne.s32.totalorder %s19, %s22
    %p28 = scmp.eq.s32.totalorder %s9, 0
    %p29 = por %p27, %p28
    %p30 = scmp.ne.s32.totalorder %s19, %s22
    %p31 = scmp.eq.s32.totalorder %s14, 1
    %p32 = por %p30, %p31
    %p33 = scmp.ne.s32.totalorder %s22, %s23
    %p34 = scmp.eq.s32.totalorder %s14, 0
    %p35 = por %p33, %p34
    %p36 = scmp.ne.s32.totalorder %s22, %s23
    %p37 = scmp.eq.s32.totalorder %s15, 1
    %p38 = por %p36, %p37
    %p40 = scmp.ne.s32.totalorder %s23, %s39
    %p41 = scmp.eq.s32.totalorder %s15, 0
    %p42 = por %p40, %p41
    %s44 = sadd.s32 %s43, 1
    %p47 = scmp.eq.s32.totalorder %s9, 1
    %p48 = scmp.ne.s32.totalorder %s43, %s45
    %p49 = scmp.eq.s32.totalorder %s9, 0
    %p50 = por %p48, %p49
    %p51 = scmp.ne.s32.totalorder %s43, %s45
    %p52 = scmp.eq.s32.totalorder %s14, 1
    %p53 = por %p51, %p52
    %p54 = scmp.ne.s32.totalorder %s45, %s46
    %p55 = scmp.eq.s32.totalorder %s14, 0
    %p56 = por %p54, %p55
    %p57 = scmp.ne.s32.totalorder %s45, %s46
    %p58 = scmp.eq.s32.totalorder %s15, 1
    %p59 = por %p57, %p58
    %p61 = scmp.ne.s32.totalorder %s46, %s60
    %p62 = scmp.eq.s32.totalorder %s15, 0
    %p63 = por %p61, %p62
    %s65 = sadd.s32 %s64, 1
    %p68 = scmp.eq.s32.totalorder %s9, 1
    %p69 = scmp.ne.s32.totalorder %s64, %s66
    %p70 = scmp.eq.s32.totalorder %s9, 0
    %p71 = por %p69, %p70
    %p72 = scmp.ne.s32.totalorder %s64, %s66
    %p73 = scmp.eq.s32.totalorder %s14, 1
    %p74 = por %p72, %p73
    %p75 = scmp.ne.s32.totalorder %s66, %s67
    %p76 = scmp.eq.s32.totalorder %s14, 0
    %p77 = por %p75, %p76
    %p78 = scmp.ne.s32.totalorder %s66, %s67
    %p79 = scmp.eq.s32.totalorder %s15, 1
    %p80 = por %p78, %p79
    %p82 = scmp.ne.s32.totalorder %s67, %s81
    %p83 = scmp.eq.s32.totalorder %s15, 0
    %p84 = por %p82, %p83
    %s85 = ssub.s32 %s9, %s16
    %p86 = scmp.eq.s32.totalorder %s85, 0
    %s88 = sadd.s32 %s87, 1
    %s89 = scalar_select %p86, %s87, %s88
    %p92 = pneg %p86
    %p93 = scmp.eq.s32.totalorder %s9, 1
    %p94 = por %p92, %p93
    %p95 = scmp.ne.s32.totalorder %s87, %s90
    %p96 = scmp.eq.s32.totalorder %s9, 0
    %p97 = por %p95, %p96
    %p98 = scmp.ne.s32.totalorder %s87, %s90
    %p99 = scmp.eq.s32.totalorder %s14, 1
    %p100 = por %p98, %p99
    %p101 = scmp.ne.s32.totalorder %s90, %s91
    %p102 = scmp.eq.s32.totalorder %s14, 0
    %p103 = por %p101, %p102
    %p104 = scmp.ne.s32.totalorder %s90, %s91
    %p105 = scmp.eq.s32.totalorder %s15, 1
    %p106 = por %p104, %p105
    %p108 = scmp.ne.s32.totalorder %s91, %s107
    %p109 = scmp.eq.s32.totalorder %s15, 0
    %p110 = por %p108, %p109
    %p111 = scmp.le.s32.totalorder 1, %s9
    %p112 = scmp.lt.s32.totalorder %s9, 3
    %p113 = pnand %p111, %p112
    %p114 = pneg %p113
    // Predicated region
    $region9: #{deep_encoder.7} parent=5 // pred_check
      _
    $region10: #{deep_encoder.7} parent=5 // pred_check_branch
      %116 = sbr.rel (%p113) target = $region12
    $region11: #{deep_encoder.7} parent=5 // pred_region
      %s117 = ssub.s32 %s9, 1
      // Predicated region
      $region13: #{deep_encoder.7} parent=11 // pred_check
        %p118 = pneg %p56
      $region14: #{deep_encoder.7} parent=11 // pred_check_branch
        %120 = sbr.rel (%p118) target = $region16
      $region15: #{deep_encoder.7} parent=11 // pred_region
        _
      $region16: #{deep_encoder.7} parent=11 // pred_fallthru
        _
      // Predicated region
      $region17: #{deep_encoder.7} parent=11 // pred_check
        %p121 = pneg %p77
      $region18: #{deep_encoder.7} parent=11 // pred_check_branch
        %123 = sbr.rel (%p121) target = $region20
      $region19: #{deep_encoder.7} parent=11 // pred_region
        _
      $region20: #{deep_encoder.7} parent=11 // pred_fallthru
        _
    $region12: #{deep_encoder.7} parent=5 // pred_fallthru
      _
    %p124 = scmp.lt.s32.totalorder %s9, 2
    // Predicated region
    $region21: #{deep_encoder.7} parent=5 // pred_check
      %p125 = pneg %p124
    $region22: #{deep_encoder.7} parent=5 // pred_check_branch
      %127 = sbr.rel (%p125) target = $region24
    $region23: #{deep_encoder.7} parent=5 // pred_region
      // Predicated region
      $region25: #{deep_encoder.7} parent=23 // pred_check
        %p128 = pneg %p29
      $region26: #{deep_encoder.7} parent=23 // pred_check_branch
        %130 = sbr.rel (%p128) target = $region28
      $region27: #{deep_encoder.7} parent=23 // pred_region
        %p131 = scmp.lt.s32.totalorder %s9, 1
        %s132 = scalar_select %p131, %s9, 1
        %s133 = smul.addr %s132, 20
        %s134 = smul.addr %s133, 4
        %s135 = scalar_lea.vmem %s0, %s134
      $region28: #{deep_encoder.7} parent=23 // pred_fallthru
        _
    $region24: #{deep_encoder.7} parent=5 // pred_fallthru
      _
    %p136 = scmp.le.s32.totalorder 1, %s9
    %p137 = scmp.lt.s32.totalorder %s9, 3
    %p138 = pnand %p136, %p137
    %p139 = pneg %p138
    // Predicated region
    $region29: #{deep_encoder.7} parent=5 // pred_check
      _
    $region30: #{deep_encoder.7} parent=5 // pred_check_branch
      %141 = sbr.rel (%p138) target = $region32
    $region31: #{deep_encoder.7} parent=5 // pred_region
      %s142 = ssub.s32 %s9, 1
      %p143 = scmp.lt.s32.totalorder %s14, 1
      %s144 = scalar_select %p143, %s14, 1
      %s145 = smul.addr %s144, 20
      %s146 = smul.addr %s145, 4
      %s147 = scalar_lea.vmem %s0, %s146
      %p148 = pneg %p35
      %p149 = pneg %p32
      %p150 = pneg %p56
      %p151 = pneg %p53
      %p152 = pneg %p77
      %p153 = pneg %p74
      %p154 = pneg %p103
      %p155 = pneg %p100
      %p156 = scmp.lt.s32.totalorder %s14, 1
      %s157 = scalar_select %p156, %s14, 1
      %s158 = smul.addr %s157, 8
      %s159 = smul.addr %s158, 4
      %s160 = scalar_lea.vmem %s3, %s159
      %p161 = scmp.lt.s32.totalorder %s14, 1
      %s162 = scalar_select %p161, %s14, 1
      %s163 = smul.addr %s162, 20
      %s164 = smul.addr %s163, 4
      %s165 = scalar_lea.vmem %s0, %s164
      %p166 = scmp.lt.s32.totalorder %s14, 1
      %s167 = scalar_select %p166, %s14, 1
      %s168 = smul.addr %s167, 8
      %s169 = smul.addr %s168, 4
      %s170 = scalar_lea.vmem %s3, %s169
      %v172 = vld [vmem:[%s2] sm:$0x1]
      loop: start=0, step=1, limit=8
      $region33: #{deep_encoder.7} parent=31 // loop_pre_header
        _
      $region34: #{deep_encoder.7} parent=31 // loop_header
        %s174 = sphi 0, %s178
        %p175 = scmp.ge.s32.totalorder %s174, 8
      $region35: #{deep_encoder.7} parent=31 // loop_header_branch
        %177 = sbr.rel (%p175) target = $region39
      $region36: #{deep_encoder.7} parent=31 // loop_body
        %s179 = smul.u32 %s174, 2
        %s180 = smul.addr %s179, 4
        %s181 = scalar_lea.vmem %s165, %s180
        %v182 = vld [vmem:[%s181] sm:$0xf]
        %v183 = vld [vmem:[%s1] sm:$0xf]
        %v184 = vld [vmem:[%s181 + $0x4] sm:$0x1]
        %s185 = scalar_lea.vmem %s1, 4
        %v186 = vld [vmem:[%s185] sm:$0xf]
        %v189 = vunpack.c.l.b16 %v182
        %v190 = vunpack.c.l.b16 %v184
        %v191 = vpack.c.b16 %v190, %v189
        %v193 = vshrl.u32 %v191, 16
        %v195 = vshll.u32 %v191, 16
        %v197 = vrot.slane %v195, 1
        %v198 = vor.u32 %v193, %v197
        %vm199 = vcmask 64512
        %v201 = vsel %vm199, %v198, 0
        %vm203 = vcmask 1043456
        %v205 = vsel %vm203, %v186, 0
        %207 = vmatprep.subr.bf16.mxu0 0
        %208 = vmatpush1.bf16.msra.mxu0 %v205
        %209 = vmatprep.subr.bf16.mxu0 0
        %210 = vmatpush1.bf16.msra.mxu0 0
        %211 = vmatprep.subr.bf16.mxu0 0
        %212 = vmatpush1.bf16.msra.mxu0 0
        %213 = vmatprep.subr.bf16.mxu0 0
        %214 = vmatpush1.bf16.msra.mxu0 0
        %215 = vmatprep.subr.bf16.mxu0 0
        %216 = vmatpush1.bf16.msra.mxu0 0
        %217 = vmatprep.subr.bf16.mxu0 0
        %218 = vmatpush1.bf16.msra.mxu0 0
        %219 = vmatprep.subr.bf16.mxu0 0
        %220 = vmatpush1.bf16.msra.mxu0 0
        %221 = vmatprep.subr.bf16.mxu0 0
        %222 = vmatpush1.bf16.msra.mxu0 0
        %223 = vmatprep.subr.bf16.mxu0 0
        %224 = vmatpush1.bf16.msra.mxu0 0
        %225 = vmatprep.subr.bf16.mxu0 0
        %226 = vmatpush1.bf16.msra.mxu0 0
        %227 = vmatprep.subr.bf16.mxu0 0
        %228 = vmatpush1.bf16.msra.mxu0 0
        %229 = vmatprep.subr.bf16.mxu0 0
        %230 = vmatpush1.bf16.msra.mxu0 0
        %231 = vmatprep.subr.bf16.mxu0 0
        %232 = vmatpush1.bf16.msra.mxu0 0
        %233 = vmatprep.subr.bf16.mxu0 0
        %234 = vmatpush1.bf16.msra.mxu0 0
        %235 = vmatprep.subr.bf16.mxu0 0
        %236 = vmatpush1.bf16.msra.mxu0 0
        %237 = vmatprep.subr.bf16.mxu0 0
        %238 = vmatpush1.bf16.msra.mxu0 0
        %239 = vmatprep.mubr.bf16.mxu0 0
        %240 = vmatmul.mubr.bf16.gmra.mrb[0].mxu0 %v201
        %v241 = vpop.f32.mrb[0].mxu0
        %v242 = vadd.f32 0.0, %v241
        %v243 = vpop.f32.mrb[0].mxu0
        %v244 = vpop.f32.mrb[0].mxu0
        %v245 = vpop.f32.mrb[0].mxu0
        %246 = vdwg.mxu0
        %v248 = vsel %vm199, %v182, 0
        %v251 = vsel %vm203, %v183, 0
        %253 = vmatprep.subr.bf16.mxu0 0
        %254 = vmatpush1.bf16.msra.mxu0 %v251
        %255 = vmatprep.subr.bf16.mxu0 0
        %256 = vmatpush1.bf16.msra.mxu0 0
        %257 = vmatprep.subr.bf16.mxu0 0
        %258 = vmatpush1.bf16.msra.mxu0 0
        %259 = vmatprep.subr.bf16.mxu0 0
        %260 = vmatpush1.bf16.msra.mxu0 0
        %261 = vmatprep.subr.bf16.mxu0 0
        %262 = vmatpush1.bf16.msra.mxu0 0
        %263 = vmatprep.subr.bf16.mxu0 0
        %264 = vmatpush1.bf16.msra.mxu0 0
        %265 = vmatprep.subr.bf16.mxu0 0
        %266 = vmatpush1.bf16.msra.mxu0 0
        %267 = vmatprep.subr.bf16.mxu0 0
        %268 = vmatpush1.bf16.msra.mxu0 0
        %269 = vmatprep.subr.bf16.mxu0 0
        %270 = vmatpush1.bf16.msra.mxu0 0
        %271 = vmatprep.subr.bf16.mxu0 0
        %272 = vmatpush1.bf16.msra.mxu0 0
        %273 = vmatprep.subr.bf16.mxu0 0
        %274 = vmatpush1.bf16.msra.mxu0 0
        %275 = vmatprep.subr.bf16.mxu0 0
        %276 = vmatpush1.bf16.msra.mxu0 0
        %277 = vmatprep.subr.bf16.mxu0 0
        %278 = vmatpush1.bf16.msra.mxu0 0
        %279 = vmatprep.subr.bf16.mxu0 0
        %280 = vmatpush1.bf16.msra.mxu0 0
        %281 = vmatprep.subr.bf16.mxu0 0
        %282 = vmatpush1.bf16.msra.mxu0 0
        %283 = vmatprep.subr.bf16.mxu0 0
        %284 = vmatpush1.bf16.msra.mxu0 0
        %285 = vmatprep.mubr.bf16.mxu0 0
        %286 = vmatmul.mubr.bf16.gmra.mrb[0].mxu0 %v248
        %v287 = vpop.f32.mrb[0].mxu0
        %v288 = vadd.f32 %v242, %v287
        %v289 = vpop.f32.mrb[0].mxu0
        %v290 = vpop.f32.mrb[0].mxu0
        %v291 = vpop.f32.mrb[0].mxu0
        %292 = vdwg.mxu0
        %v293 = vld [vmem:[%s181] sm:$0xe]
        %s294 = scalar_lea.vmem %s1, 8
        %v295 = vld [vmem:[%s294] sm:$0xf]
        %v297 = vunpack.c.l.b16 %v293
        %v298 = vpack.c.b16 %v190, %v297
        %v299 = vrot.slane %v298, 1
        %v301 = vsel %vm199, %v299, 0
        %v304 = vsel %vm203, %v295, 0
        %306 = vmatprep.subr.bf16.mxu0 0
        %307 = vmatpush1.bf16.msra.mxu0 %v304
        %308 = vmatprep.subr.bf16.mxu0 0
        %309 = vmatpush1.bf16.msra.mxu0 0
        %310 = vmatprep.subr.bf16.mxu0 0
        %311 = vmatpush1.bf16.msra.mxu0 0
        %312 = vmatprep.subr.bf16.mxu0 0
        %313 = vmatpush1.bf16.msra.mxu0 0
        %314 = vmatprep.subr.bf16.mxu0 0
        %315 = vmatpush1.bf16.msra.mxu0 0
        %316 = vmatprep.subr.bf16.mxu0 0
        %317 = vmatpush1.bf16.msra.mxu0 0
        %318 = vmatprep.subr.bf16.mxu0 0
        %319 = vmatpush1.bf16.msra.mxu0 0
        %320 = vmatprep.subr.bf16.mxu0 0
        %321 = vmatpush1.bf16.msra.mxu0 0
        %322 = vmatprep.subr.bf16.mxu0 0
        %323 = vmatpush1.bf16.msra.mxu0 0
        %324 = vmatprep.subr.bf16.mxu0 0
        %325 = vmatpush1.bf16.msra.mxu0 0
        %326 = vmatprep.subr.bf16.mxu0 0
        %327 = vmatpush1.bf16.msra.mxu0 0
        %328 = vmatprep.subr.bf16.mxu0 0
        %329 = vmatpush1.bf16.msra.mxu0 0
        %330 = vmatprep.subr.bf16.mxu0 0
        %331 = vmatpush1.bf16.msra.mxu0 0
        %332 = vmatprep.subr.bf16.mxu0 0
        %333 = vmatpush1.bf16.msra.mxu0 0
        %334 = vmatprep.subr.bf16.mxu0 0
        %335 = vmatpush1.bf16.msra.mxu0 0
        %336 = vmatprep.subr.bf16.mxu0 0
        %337 = vmatpush1.bf16.msra.mxu0 0
        %338 = vmatprep.mubr.bf16.mxu0 0
        %339 = vmatmul.mubr.bf16.gmra.mrb[0].mxu0 %v301
        %v340 = vpop.f32.mrb[0].mxu0
        %v341 = vadd.f32 0.0, %v340
        %v342 = vpop.f32.mrb[0].mxu0
        %v343 = vpop.f32.mrb[0].mxu0
        %v344 = vpop.f32.mrb[0].mxu0
        %345 = vdwg.mxu0
        %v346 = vadd.f32 %v288, %v341
        %s347 = sadd.s32 %s174, 1
        %s348 = smul.u32 %s347, 2
        %s349 = smul.addr %s348, 4
        %s350 = scalar_lea.vmem %s165, %s349
        %v351 = vld [vmem:[%s350] sm:$0xf]
        %s352 = scalar_lea.vmem %s1, 12
        %v353 = vld [vmem:[%s352] sm:$0xf]
        %v355 = vsel %vm199, %v351, 0
        %v358 = vsel %vm203, %v353, 0
        %360 = vmatprep.subr.bf16.mxu0 0
        %361 = vmatpush1.bf16.msra.mxu0 %v358
        %362 = vmatprep.subr.bf16.mxu0 0
        %363 = vmatpush1.bf16.msra.mxu0 0
        %364 = vmatprep.subr.bf16.mxu0 0
        %365 = vmatpush1.bf16.msra.mxu0 0
        %366 = vmatprep.subr.bf16.mxu0 0
        %367 = vmatpush1.bf16.msra.mxu0 0
        %368 = vmatprep.subr.bf16.mxu0 0
        %369 = vmatpush1.bf16.msra.mxu0 0
        %370 = vmatprep.subr.bf16.mxu0 0
        %371 = vmatpush1.bf16.msra.mxu0 0
        %372 = vmatprep.subr.bf16.mxu0 0
        %373 = vmatpush1.bf16.msra.mxu0 0
        %374 = vmatprep.subr.bf16.mxu0 0
        %375 = vmatpush1.bf16.msra.mxu0 0
        %376 = vmatprep.subr.bf16.mxu0 0
        %377 = vmatpush1.bf16.msra.mxu0 0
        %378 = vmatprep.subr.bf16.mxu0 0
        %379 = vmatpush1.bf16.msra.mxu0 0
        %380 = vmatprep.subr.bf16.mxu0 0
        %381 = vmatpush1.bf16.msra.mxu0 0
        %382 = vmatprep.subr.bf16.mxu0 0
        %383 = vmatpush1.bf16.msra.mxu0 0
        %384 = vmatprep.subr.bf16.mxu0 0
        %385 = vmatpush1.bf16.msra.mxu0 0
        %386 = vmatprep.subr.bf16.mxu0 0
        %387 = vmatpush1.bf16.msra.mxu0 0
        %388 = vmatprep.subr.bf16.mxu0 0
        %389 = vmatpush1.bf16.msra.mxu0 0
        %390 = vmatprep.subr.bf16.mxu0 0
        %391 = vmatpush1.bf16.msra.mxu0 0
        %392 = vmatprep.mubr.bf16.mxu0 0
        %393 = vmatmul.mubr.bf16.gmra.mrb[0].mxu0 %v355
        %v394 = vpop.f32.mrb[0].mxu0
        %v395 = vadd.f32 0.0, %v394
        %v396 = vpop.f32.mrb[0].mxu0
        %v397 = vpop.f32.mrb[0].mxu0
        %v398 = vpop.f32.mrb[0].mxu0
        %399 = vdwg.mxu0
        %v400 = vadd.f32 %v346, %v395
        %v401 = vld [vmem:[%s350] sm:$0xf]
        %v402 = vld [vmem:[%s350 + $0x4] sm:$0x1]
        %s403 = scalar_lea.vmem %s1, 16
        %v404 = vld [vmem:[%s403] sm:$0xf]
        %v407 = vunpack.c.l.b16 %v401
        %v408 = vunpack.c.l.b16 %v402
        %v409 = vpack.c.b16 %v408, %v407
        %v411 = vshrl.u32 %v409, 16
        %v413 = vshll.u32 %v409, 16
        %v415 = vrot.slane %v413, 1
        %v416 = vor.u32 %v411, %v415
        %v418 = vsel %vm199, %v416, 0
        %v421 = vsel %vm203, %v404, 0
        %423 = vmatprep.subr.bf16.mxu0 0
        %424 = vmatpush1.bf16.msra.mxu0 %v421
        %425 = vmatprep.subr.bf16.mxu0 0
        %426 = vmatpush1.bf16.msra.mxu0 0
        %427 = vmatprep.subr.bf16.mxu0 0
        %428 = vmatpush1.bf16.msra.mxu0 0
        %429 = vmatprep.subr.bf16.mxu0 0
        %430 = vmatpush1.bf16.msra.mxu0 0
        %431 = vmatprep.subr.bf16.mxu0 0
        %432 = vmatpush1.bf16.msra.mxu0 0
        %433 = vmatprep.subr.bf16.mxu0 0
        %434 = vmatpush1.bf16.msra.mxu0 0
        %435 = vmatprep.subr.bf16.mxu0 0
        %436 = vmatpush1.bf16.msra.mxu0 0
        %437 = vmatprep.subr.bf16.mxu0 0
        %438 = vmatpush1.bf16.msra.mxu0 0
        %439 = vmatprep.subr.bf16.mxu0 0
        %440 = vmatpush1.bf16.msra.mxu0 0
        %441 = vmatprep.subr.bf16.mxu0 0
        %442 = vmatpush1.bf16.msra.mxu0 0
        %443 = vmatprep.subr.bf16.mxu0 0
        %444 = vmatpush1.bf16.msra.mxu0 0
        %445 = vmatprep.subr.bf16.mxu0 0
        %446 = vmatpush1.bf16.msra.mxu0 0
        %447 = vmatprep.subr.bf16.mxu0 0
        %448 = vmatpush1.bf16.msra.mxu0 0
        %449 = vmatprep.subr.bf16.mxu0 0
        %450 = vmatpush1.bf16.msra.mxu0 0
        %451 = vmatprep.subr.bf16.mxu0 0
        %452 = vmatpush1.bf16.msra.mxu0 0
        %453 = vmatprep.subr.bf16.mxu0 0
        %454 = vmatpush1.bf16.msra.mxu0 0
        %455 = vmatprep.mubr.bf16.mxu0 0
        %456 = vmatmul.mubr.bf16.gmra.mrb[0].mxu0 %v418
        %v457 = vpop.f32.mrb[0].mxu0
        %v458 = vadd.f32 0.0, %v457
        %v459 = vpop.f32.mrb[0].mxu0
        %v460 = vpop.f32.mrb[0].mxu0
        %v461 = vpop.f32.mrb[0].mxu0
        %462 = vdwg.mxu0
        %v463 = vadd.f32 %v400, %v458
        %v464 = vld [vmem:[%s350] sm:$0xe]
        %s465 = scalar_lea.vmem %s1, 20
        %v466 = vld [vmem:[%s465] sm:$0xf]
        %v468 = vunpack.c.l.b16 %v464
        %v469 = vpack.c.b16 %v408, %v468
        %v470 = vrot.slane %v469, 1
        %v472 = vsel %vm199, %v470, 0
        %v475 = vsel %vm203, %v466, 0
        %477 = vmatprep.subr.bf16.mxu0 0
        %478 = vmatpush1.bf16.msra.mxu0 %v475
        %479 = vmatprep.subr.bf16.mxu0 0
        %480 = vmatpush1.bf16.msra.mxu0 0
        %481 = vmatprep.subr.bf16.mxu0 0
        %482 = vmatpush1.bf16.msra.mxu0 0
        %483 = vmatprep.subr.bf16.mxu0 0
        %484 = vmatpush1.bf16.msra.mxu0 0
        %485 = vmatprep.subr.bf16.mxu0 0
        %486 = vmatpush1.bf16.msra.mxu0 0
        %487 = vmatprep.subr.bf16.mxu0 0
        %488 = vmatpush1.bf16.msra.mxu0 0
        %489 = vmatprep.subr.bf16.mxu0 0
        %490 = vmatpush1.bf16.msra.mxu0 0
        %491 = vmatprep.subr.bf16.mxu0 0
        %492 = vmatpush1.bf16.msra.mxu0 0
        %493 = vmatprep.subr.bf16.mxu0 0
        %494 = vmatpush1.bf16.msra.mxu0 0
        %495 = vmatprep.subr.bf16.mxu0 0
        %496 = vmatpush1.bf16.msra.mxu0 0
        %497 = vmatprep.subr.bf16.mxu0 0
        %498 = vmatpush1.bf16.msra.mxu0 0
        %499 = vmatprep.subr.bf16.mxu0 0
        %500 = vmatpush1.bf16.msra.mxu0 0
        %501 = vmatprep.subr.bf16.mxu0 0
        %502 = vmatpush1.bf16.msra.mxu0 0
        %503 = vmatprep.subr.bf16.mxu0 0
        %504 = vmatpush1.bf16.msra.mxu0 0
        %505 = vmatprep.subr.bf16.mxu0 0
        %506 = vmatpush1.bf16.msra.mxu0 0
        %507 = vmatprep.subr.bf16.mxu0 0
        %508 = vmatpush1.bf16.msra.mxu0 0
        %509 = vmatprep.mubr.bf16.mxu0 0
        %510 = vmatmul.mubr.bf16.gmra.mrb[0].mxu0 %v472
        %v511 = vpop.f32.mrb[0].mxu0
        %v512 = vadd.f32 0.0, %v511
        %v513 = vpop.f32.mrb[0].mxu0
        %v514 = vpop.f32.mrb[0].mxu0
        %v515 = vpop.f32.mrb[0].mxu0
        %516 = vdwg.mxu0
        %v517 = vadd.f32 %v463, %v512
        %s518 = sadd.s32 %s174, 2
        %s519 = smul.u32 %s518, 2
        %s520 = smul.addr %s519, 4
        %s521 = scalar_lea.vmem %s165, %s520
        %v522 = vld [vmem:[%s521] sm:$0xf]
        %s523 = scalar_lea.vmem %s1, 24
        %v524 = vld [vmem:[%s523] sm:$0xf]
        %v526 = vsel %vm199, %v522, 0
        %v529 = vsel %vm203, %v524, 0
        %531 = vmatprep.subr.bf16.mxu0 0
        %532 = vmatpush1.bf16.msra.mxu0 %v529
        %533 = vmatprep.subr.bf16.mxu0 0
        %534 = vmatpush1.bf16.msra.mxu0 0
        %535 = vmatprep.subr.bf16.mxu0 0
        %536 = vmatpush1.bf16.msra.mxu0 0
        %537 = vmatprep.subr.bf16.mxu0 0
        %538 = vmatpush1.bf16.msra.mxu0 0
        %539 = vmatprep.subr.bf16.mxu0 0
        %540 = vmatpush1.bf16.msra.mxu0 0
        %541 = vmatprep.subr.bf16.mxu0 0
        %542 = vmatpush1.bf16.msra.mxu0 0
        %543 = vmatprep.subr.bf16.mxu0 0
        %544 = vmatpush1.bf16.msra.mxu0 0
        %545 = vmatprep.subr.bf16.mxu0 0
        %546 = vmatpush1.bf16.msra.mxu0 0
        %547 = vmatprep.subr.bf16.mxu0 0
        %548 = vmatpush1.bf16.msra.mxu0 0
        %549 = vmatprep.subr.bf16.mxu0 0
        %550 = vmatpush1.bf16.msra.mxu0 0
        %551 = vmatprep.subr.bf16.mxu0 0
        %552 = vmatpush1.bf16.msra.mxu0 0
        %553 = vmatprep.subr.bf16.mxu0 0
        %554 = vmatpush1.bf16.msra.mxu0 0
        %555 = vmatprep.subr.bf16.mxu0 0
        %556 = vmatpush1.bf16.msra.mxu0 0
        %557 = vmatprep.subr.bf16.mxu0 0
        %558 = vmatpush1.bf16.msra.mxu0 0
        %559 = vmatprep.subr.bf16.mxu0 0
        %560 = vmatpush1.bf16.msra.mxu0 0
        %561 = vmatprep.subr.bf16.mxu0 0
        %562 = vmatpush1.bf16.msra.mxu0 0
        %563 = vmatprep.mubr.bf16.mxu0 0
        %564 = vmatmul.mubr.bf16.gmra.mrb[0].mxu0 %v526
        %v565 = vpop.f32.mrb[0].mxu0
        %v566 = vadd.f32 0.0, %v565
        %v567 = vpop.f32.mrb[0].mxu0
        %v568 = vpop.f32.mrb[0].mxu0
        %v569 = vpop.f32.mrb[0].mxu0
        %570 = vdwg.mxu0
        %v571 = vadd.f32 %v517, %v566
        %v572 = vld [vmem:[%s521] sm:$0xf]
        %v573 = vld [vmem:[%s521 + $0x4] sm:$0x1]
        %s574 = scalar_lea.vmem %s1, 28
        %v575 = vld [vmem:[%s574] sm:$0xf]
        %v578 = vunpack.c.l.b16 %v572
        %v579 = vunpack.c.l.b16 %v573
        %v580 = vpack.c.b16 %v579, %v578
        %v582 = vshrl.u32 %v580, 16
        %v584 = vshll.u32 %v580, 16
        %v586 = vrot.slane %v584, 1
        %v587 = vor.u32 %v582, %v586
        %v589 = vsel %vm199, %v587, 0
        %v592 = vsel %vm203, %v575, 0
        %594 = vmatprep.subr.bf16.mxu0 0
        %595 = vmatpush1.bf16.msra.mxu0 %v592
        %596 = vmatprep.subr.bf16.mxu0 0
        %597 = vmatpush1.bf16.msra.mxu0 0
        %598 = vmatprep.subr.bf16.mxu0 0
        %599 = vmatpush1.bf16.msra.mxu0 0
        %600 = vmatprep.subr.bf16.mxu0 0
        %601 = vmatpush1.bf16.msra.mxu0 0
        %602 = vmatprep.subr.bf16.mxu0 0
        %603 = vmatpush1.bf16.msra.mxu0 0
        %604 = vmatprep.subr.bf16.mxu0 0
        %605 = vmatpush1.bf16.msra.mxu0 0
        %606 = vmatprep.subr.bf16.mxu0 0
        %607 = vmatpush1.bf16.msra.mxu0 0
        %608 = vmatprep.subr.bf16.mxu0 0
        %609 = vmatpush1.bf16.msra.mxu0 0
        %610 = vmatprep.subr.bf16.mxu0 0
        %611 = vmatpush1.bf16.msra.mxu0 0
        %612 = vmatprep.subr.bf16.mxu0 0
        %613 = vmatpush1.bf16.msra.mxu0 0
        %614 = vmatprep.subr.bf16.mxu0 0
        %615 = vmatpush1.bf16.msra.mxu0 0
        %616 = vmatprep.subr.bf16.mxu0 0
        %617 = vmatpush1.bf16.msra.mxu0 0
        %618 = vmatprep.subr.bf16.mxu0 0
        %619 = vmatpush1.bf16.msra.mxu0 0
        %620 = vmatprep.subr.bf16.mxu0 0
        %621 = vmatpush1.bf16.msra.mxu0 0
        %622 = vmatprep.subr.bf16.mxu0 0
        %623 = vmatpush1.bf16.msra.mxu0 0
        %624 = vmatprep.subr.bf16.mxu0 0
        %625 = vmatpush1.bf16.msra.mxu0 0
        %626 = vmatprep.mubr.bf16.mxu0 0
        %627 = vmatmul.mubr.bf16.gmra.mrb[0].mxu0 %v589
        %v628 = vpop.f32.mrb[0].mxu0
        %v629 = vadd.f32 0.0, %v628
        %v630 = vpop.f32.mrb[0].mxu0
        %v631 = vpop.f32.mrb[0].mxu0
        %v632 = vpop.f32.mrb[0].mxu0
        %633 = vdwg.mxu0
        %v634 = vadd.f32 %v571, %v629
        %v635 = vld [vmem:[%s521] sm:$0xe]
        %s636 = scalar_lea.vmem %s1, 32
        %v637 = vld [vmem:[%s636] sm:$0xf]
        %v639 = vunpack.c.l.b16 %v635
        %v640 = vpack.c.b16 %v579, %v639
        %v641 = vrot.slane %v640, 1
        %v643 = vsel %vm199, %v641, 0
        %v646 = vsel %vm203, %v637, 0
        %648 = vmatprep.subr.bf16.mxu0 0
        %649 = vmatpush1.bf16.msra.mxu0 %v646
        %650 = vmatprep.subr.bf16.mxu0 0
        %651 = vmatpush1.bf16.msra.mxu0 0
        %652 = vmatprep.subr.bf16.mxu0 0
        %653 = vmatpush1.bf16.msra.mxu0 0
        %654 = vmatprep.subr.bf16.mxu0 0
        %655 = vmatpush1.bf16.msra.mxu0 0
        %656 = vmatprep.subr.bf16.mxu0 0
        %657 = vmatpush1.bf16.msra.mxu0 0
        %658 = vmatprep.subr.bf16.mxu0 0
        %659 = vmatpush1.bf16.msra.mxu0 0
        %660 = vmatprep.subr.bf16.mxu0 0
        %661 = vmatpush1.bf16.msra.mxu0 0
        %662 = vmatprep.subr.bf16.mxu0 0
        %663 = vmatpush1.bf16.msra.mxu0 0
        %664 = vmatprep.subr.bf16.mxu0 0
        %665 = vmatpush1.bf16.msra.mxu0 0
        %666 = vmatprep.subr.bf16.mxu0 0
        %667 = vmatpush1.bf16.msra.mxu0 0
        %668 = vmatprep.subr.bf16.mxu0 0
        %669 = vmatpush1.bf16.msra.mxu0 0
        %670 = vmatprep.subr.bf16.mxu0 0
        %671 = vmatpush1.bf16.msra.mxu0 0
        %672 = vmatprep.subr.bf16.mxu0 0
        %673 = vmatpush1.bf16.msra.mxu0 0
        %674 = vmatprep.subr.bf16.mxu0 0
        %675 = vmatpush1.bf16.msra.mxu0 0
        %676 = vmatprep.subr.bf16.mxu0 0
        %677 = vmatpush1.bf16.msra.mxu0 0
        %678 = vmatprep.subr.bf16.mxu0 0
        %679 = vmatpush1.bf16.msra.mxu0 0
        %680 = vmatprep.mubr.bf16.mxu0 0
        %681 = vmatmul.mubr.bf16.gmra.mrb[0].mxu0 %v643
        %v682 = vpop.f32.mrb[0].mxu0
        %v683 = vadd.f32 0.0, %v682
        %v684 = vpop.f32.mrb[0].mxu0
        %v685 = vpop.f32.mrb[0].mxu0
        %v686 = vpop.f32.mrb[0].mxu0
        %687 = vdwg.mxu0
        %v688 = vadd.f32 %v634, %v683
        %v690 = vlaneseq
        %v691 = vshrl.u32 %v690, 7
        %v692 = vsub.s32 0, %v691
        %v693 = vrot.slane %v172, %v692
        %v695 = vadd.f32 %v688, %v693
        %v696 = vmul.f32 %v695, 0.5
        %v697 = vmul.f32 %v695, 0.044715
        %v698 = vmul.f32 %v697, %v695
        %v699 = vmul.f32 %v698, %v695
        %v700 = vadd.f32 %v695, %v699
        %v701 = vmul.f32 %v700, 0.7978846
        %v702 = vtanh.pop %v701
        %v703 = vadd.f32 %v702, 1.0
        %v704 = vmul.f32 %v696, %v703
        %v705 = vpack.c.bf16 %v704, %v704
        %s706 = smul.addr %s174, 4
        %s707 = scalar_lea.vmem %s170, %s706
        %vm708 = vcmask 60416
        %709 = vst.msk [vmem:[%s707] sm:$0xf] %vm708, %v705
      $region37: #{deep_encoder.7} parent=31 // loop_footer
        %s178 = sadd.s32 1, %s174
      $region38: #{deep_encoder.7} parent=31 // loop_footer_branch
        %173 = sbr.rel target = $region34
      $region39: #{deep_encoder.7} parent=31 // loop_exit
        _
      %p710 = scmp.lt.s32.totalorder %s14, 1
      %s711 = scalar_select %p710, %s14, 1
      %s712 = smul.addr %s711, 8
      %s713 = smul.addr %s712, 4
      %s714 = scalar_lea.vmem %s3, %s713
      // Predicated region
      $region40: #{deep_encoder.7} parent=31 // pred_check
        %p715 = pneg %p100
      $region41: #{deep_encoder.7} parent=31 // pred_check_branch
        %717 = sbr.rel (%p715) target = $region43
      $region42: #{deep_encoder.7} parent=31 // pred_region
        _
      $region43: #{deep_encoder.7} parent=31 // pred_fallthru
        _
    $region32: #{deep_encoder.7} parent=5 // pred_fallthru
      _
    %p718 = scmp.le.s32.totalorder 2, %s9
    // Predicated region
    $region44: #{deep_encoder.7} parent=5 // pred_check
      %p719 = pneg %p718
    $region45: #{deep_encoder.7} parent=5 // pred_check_branch
      %721 = sbr.rel (%p719) target = $region47
    $region46: #{deep_encoder.7} parent=5 // pred_region
      %s722 = ssub.s32 %s9, 2
      // Predicated region
      $region48: #{deep_encoder.7} parent=46 // pred_check
        %p723 = pneg %p106
      $region49: #{deep_encoder.7} parent=46 // pred_check_branch
        %725 = sbr.rel (%p723) target = $region51
      $region50: #{deep_encoder.7} parent=46 // pred_region
        %p726 = scmp.lt.s32.totalorder %s15, 1
        %s727 = scalar_select %p726, %s15, 1
        %s728 = smul.addr %s727, 8
        %s729 = smul.addr %s728, 4
        %s730 = scalar_lea.vmem %s3, %s729
      $region51: #{deep_encoder.7} parent=46 // pred_fallthru
        _
    $region47: #{deep_encoder.7} parent=5 // pred_fallthru
      _
  $region6: #{deep_encoder.7} parent=0 // loop_footer
    %s13 = sadd.s32 1, %s9
  $region7: #{deep_encoder.7} parent=0 // loop_footer_branch
    %8 = sbr.rel target = $region3
  $region8: #{deep_encoder.7} parent=0 // loop_exit
    _

// kernel: deep_encoder.6
$region0: #{deep_encoder.6}
  #allocation0 [shape = 'u32[]', space=smem, size = 0x4, offset = 0x4, fixed_abs, tag = 'smem constant byte address 0x4 - core index']
  #allocation1 [shape = 'u32[144,128]{1,0:T(1,128)}', space=vmem, size = 0x12000, scoped, tag = 'internal scratch']
  %s0 = inlined_call_operand.vmem [shape: bf16[2,18,9,8], index: 0, kind: input, shape index: {}]
  %s1 = inlined_call_operand.vmem [shape: bf16[2,18,9,8], index: 1, kind: input, shape index: {}]
  %s2 = inlined_call_operand.vmem [shape: bf16[9,8,8], index: 2, kind: input, shape index: {}]
  %s3 = inlined_call_operand.vmem [shape: f32[1,8], index: 3, kind: input, shape index: {}]
  %s4 = inlined_call_operand.vmem [shape: bf16[2,8,8,8], index: 4, kind: output, shape index: {}]
  %s5 = sld [smem:[#allocation0]]
  $region56: #{deep_encoder.6} parent=0
    _
  %s7 = ssub.s32 1, %s5
  %s8 = scalar_select 0, %s7, %s5
  loop: start=0, step=1, limit=4
  $region2: #{deep_encoder.6} parent=0 // loop_pre_header
    _
  $region3: #{deep_encoder.6} parent=0 // loop_header
    %s10 = sphi 0, %s14
    %p11 = scmp.ge.s32.totalorder %s10, 4
    %s20 = sphi 0, %s22
    %s23 = sphi 0, %s20
    %s24 = sphi 0, %s23
    %s40 = sphi 0, %s24
    %s46 = sphi 0, %s48
    %s49 = sphi 0, %s46
    %s50 = sphi 0, %s49
    %s66 = sphi 0, %s50
    %s70 = sphi 0, %s70
    %s72 = sphi 0, %s70
    %s73 = sphi 0, %s72
    %s87 = sphi 0, %s73
    %s91 = sphi 0, %s91
    %s93 = sphi 0, %s91
    %s94 = sphi 0, %s93
    %s108 = sphi 0, %s94
    %s114 = sphi 0, %s116
    %s117 = sphi 0, %s114
    %s118 = sphi 0, %s117
    %s134 = sphi 0, %s118
  $region4: #{deep_encoder.6} parent=0 // loop_header_branch
    %13 = sbr.rel (%p11) target = $region8
  $region5: #{deep_encoder.6} parent=0 // loop_body
    %s15 = ssub.s32 %s10, 1
    %s16 = ssub.s32 %s10, 2
    %s17 = sadd.s32 %s10, 1
    %s18 = ssub.s32 %s10, %s17
    %p19 = scmp.eq.s32.totalorder %s18, 0
    %s21 = sadd.s32 %s20, 1
    %s22 = scalar_select %p19, %s20, %s21
    %p25 = pneg %p19
    %p26 = scmp.eq.s32.totalorder %s10, 1
    %p27 = por %p25, %p26
    %p28 = scmp.ne.s32.totalorder %s20, %s23
    %p29 = scmp.eq.s32.totalorder %s10, 0
    %p30 = por %p28, %p29
    %p31 = scmp.ne.s32.totalorder %s20, %s23
    %p32 = scmp.eq.s32.totalorder %s15, 1
    %p33 = por %p31, %p32
    %p34 = scmp.ne.s32.totalorder %s23, %s24
    %p35 = scmp.eq.s32.totalorder %s15, 0
    %p36 = por %p34, %p35
    %p37 = scmp.ne.s32.totalorder %s23, %s24
    %p38 = scmp.eq.s32.totalorder %s16, 1
    %p39 = por %p37, %p38
    %p41 = scmp.ne.s32.totalorder %s24, %s40
    %p42 = scmp.eq.s32.totalorder %s16, 0
    %p43 = por %p41, %p42
    %s44 = ssub.s32 %s10, %s17
    %p45 = scmp.eq.s32.totalorder %s44, 0
    %s47 = sadd.s32 %s46, 1
    %s48 = scalar_select %p45, %s46, %s47
    %p51 = pneg %p45
    %p52 = scmp.eq.s32.totalorder %s10, 1
    %p53 = por %p51, %p52
    %p54 = scmp.ne.s32.totalorder %s46, %s49
    %p55 = scmp.eq.s32.totalorder %s10, 0
    %p56 = por %p54, %p55
    %p57 = scmp.ne.s32.totalorder %s46, %s49
    %p58 = scmp.eq.s32.totalorder %s15, 1
    %p59 = por %p57, %p58
    %p60 = scmp.ne.s32.totalorder %s49, %s50
    %p61 = scmp.eq.s32.totalorder %s15, 0
    %p62 = por %p60, %p61
    %p63 = scmp.ne.s32.totalorder %s49, %s50
    %p64 = scmp.eq.s32.totalorder %s16, 1
    %p65 = por %p63, %p64
    %p67 = scmp.ne.s32.totalorder %s50, %s66
    %p68 = scmp.eq.s32.totalorder %s16, 0
    %p69 = por %p67, %p68
    %s71 = sadd.s32 %s70, 1
    %p74 = scmp.eq.s32.totalorder %s10, 1
    %p75 = scmp.ne.s32.totalorder %s70, %s72
    %p76 = scmp.eq.s32.totalorder %s10, 0
    %p77 = por %p75, %p76
    %p78 = scmp.ne.s32.totalorder %s70, %s72
    %p79 = scmp.eq.s32.totalorder %s15, 1
    %p80 = por %p78, %p79
    %p81 = scmp.ne.s32.totalorder %s72, %s73
    %p82 = scmp.eq.s32.totalorder %s15, 0
    %p83 = por %p81, %p82
    %p84 = scmp.ne.s32.totalorder %s72, %s73
    %p85 = scmp.eq.s32.totalorder %s16, 1
    %p86 = por %p84, %p85
    %p88 = scmp.ne.s32.totalorder %s73, %s87
    %p89 = scmp.eq.s32.totalorder %s16, 0
    %p90 = por %p88, %p89
    %s92 = sadd.s32 %s91, 1
    %p95 = scmp.eq.s32.totalorder %s10, 1
    %p96 = scmp.ne.s32.totalorder %s91, %s93
    %p97 = scmp.eq.s32.totalorder %s10, 0
    %p98 = por %p96, %p97
    %p99 = scmp.ne.s32.totalorder %s91, %s93
    %p100 = scmp.eq.s32.totalorder %s15, 1
    %p101 = por %p99, %p100
    %p102 = scmp.ne.s32.totalorder %s93, %s94
    %p103 = scmp.eq.s32.totalorder %s15, 0
    %p104 = por %p102, %p103
    %p105 = scmp.ne.s32.totalorder %s93, %s94
    %p106 = scmp.eq.s32.totalorder %s16, 1
    %p107 = por %p105, %p106
    %p109 = scmp.ne.s32.totalorder %s94, %s108
    %p110 = scmp.eq.s32.totalorder %s16, 0
    %p111 = por %p109, %p110
    %s112 = ssub.s32 %s10, %s17
    %p113 = scmp.eq.s32.totalorder %s112, 0
    %s115 = sadd.s32 %s114, 1
    %s116 = scalar_select %p113, %s114, %s115
    %p119 = pneg %p113
    %p120 = scmp.eq.s32.totalorder %s10, 1
    %p121 = por %p119, %p120
    %p122 = scmp.ne.s32.totalorder %s114, %s117
    %p123 = scmp.eq.s32.totalorder %s10, 0
    %p124 = por %p122, %p123
    %p125 = scmp.ne.s32.totalorder %s114, %s117
    %p126 = scmp.eq.s32.totalorder %s15, 1
    %p127 = por %p125, %p126
    %p128 = scmp.ne.s32.totalorder %s117, %s118
    %p129 = scmp.eq.s32.totalorder %s15, 0
    %p130 = por %p128, %p129
    %p131 = scmp.ne.s32.totalorder %s117, %s118
    %p132 = scmp.eq.s32.totalorder %s16, 1
    %p133 = por %p131, %p132
    %p135 = scmp.ne.s32.totalorder %s118, %s134
    %p136 = scmp.eq.s32.totalorder %s16, 0
    %p137 = por %p135, %p136
    %p138 = scmp.le.s32.totalorder 1, %s10
    %p139 = scmp.lt.s32.totalorder %s10, 3
    %p140 = pnand %p138, %p139
    %p141 = pneg %p140
    // Predicated region
    $region9: #{deep_encoder.6} parent=5 // pred_check
      _
    $region10: #{deep_encoder.6} parent=5 // pred_check_branch
      %143 = sbr.rel (%p140) target = $region12
    $region11: #{deep_encoder.6} parent=5 // pred_region
      %s144 = ssub.s32 %s10, 1
      // Predicated region
      $region13: #{deep_encoder.6} parent=11 // pred_check
        %p145 = pneg %p83
      $region14: #{deep_encoder.6} parent=11 // pred_check_branch
        %147 = sbr.rel (%p145) target = $region16
      $region15: #{deep_encoder.6} parent=11 // pred_region
        _
      $region16: #{deep_encoder.6} parent=11 // pred_fallthru
        _
      // Predicated region
      $region17: #{deep_encoder.6} parent=11 // pred_check
        %p148 = pneg %p104
      $region18: #{deep_encoder.6} parent=11 // pred_check_branch
        %150 = sbr.rel (%p148) target = $region20
      $region19: #{deep_encoder.6} parent=11 // pred_region
        _
      $region20: #{deep_encoder.6} parent=11 // pred_fallthru
        _
    $region12: #{deep_encoder.6} parent=5 // pred_fallthru
      _
    %p151 = scmp.lt.s32.totalorder %s10, 2
    // Predicated region
    $region21: #{deep_encoder.6} parent=5 // pred_check
      %p152 = pneg %p151
    $region22: #{deep_encoder.6} parent=5 // pred_check_branch
      %154 = sbr.rel (%p152) target = $region24
    $region23: #{deep_encoder.6} parent=5 // pred_region
      // Predicated region
      $region25: #{deep_encoder.6} parent=23 // pred_check
        %p155 = pneg %p30
      $region26: #{deep_encoder.6} parent=23 // pred_check_branch
        %157 = sbr.rel (%p155) target = $region28
      $region27: #{deep_encoder.6} parent=23 // pred_region
        %p158 = scmp.lt.s32.totalorder %s10, 1
        %s159 = scalar_select %p158, %s10, 1
        %s160 = smul.addr %s159, 36
        %s161 = smul.addr %s160, 4
        %s162 = scalar_lea.vmem %s0, %s161
      $region28: #{deep_encoder.6} parent=23 // pred_fallthru
        _
      // Predicated region
      $region29: #{deep_encoder.6} parent=23 // pred_check
        %p163 = pneg %p56
      $region30: #{deep_encoder.6} parent=23 // pred_check_branch
        %165 = sbr.rel (%p163) target = $region32
      $region31: #{deep_encoder.6} parent=23 // pred_region
        %p166 = scmp.lt.s32.totalorder %s10, 1
        %s167 = scalar_select %p166, %s10, 1
        %s168 = smul.addr %s167, 36
        %s169 = smul.addr %s168, 4
        %s170 = scalar_lea.vmem %s1, %s169
      $region32: #{deep_encoder.6} parent=23 // pred_fallthru
        _
    $region24: #{deep_encoder.6} parent=5 // pred_fallthru
      _
    %p171 = scmp.le.s32.totalorder 1, %s10
    %p172 = scmp.lt.s32.totalorder %s10, 3
    %p173 = pnand %p171, %p172
    %p174 = pneg %p173
    // Predicated region
    $region33: #{deep_encoder.6} parent=5 // pred_check
      _
    $region34: #{deep_encoder.6} parent=5 // pred_check_branch
      %176 = sbr.rel (%p173) target = $region36
    $region35: #{deep_encoder.6} parent=5 // pred_region
      %s177 = ssub.s32 %s10, 1
      %p178 = scmp.lt.s32.totalorder %s15, 1
      %s179 = scalar_select %p178, %s15, 1
      %s180 = smul.addr %s179, 36
      %s181 = smul.addr %s180, 4
      %s182 = scalar_lea.vmem %s0, %s181
      %p183 = pneg %p36
      %p184 = pneg %p33
      %p185 = scmp.lt.s32.totalorder %s15, 1
      %s186 = scalar_select %p185, %s15, 1
      %s187 = smul.addr %s186, 36
      %s188 = smul.addr %s187, 4
      %s189 = scalar_lea.vmem %s1, %s188
      %p190 = pneg %p62
      %p191 = pneg %p59
      %p192 = pneg %p83
      %p193 = pneg %p80
      %p194 = pneg %p104
      %p195 = pneg %p101
      %p196 = pneg %p130
      %p197 = pneg %p127
      %p198 = scmp.lt.s32.totalorder %s15, 1
      %s199 = scalar_select %p198, %s15, 1
      %s200 = smul.addr %s199, 8
      %s201 = smul.addr %s200, 4
      %s202 = scalar_lea.vmem %s4, %s201
      %p203 = scmp.lt.s32.totalorder %s15, 1
      %s204 = scalar_select %p203, %s15, 1
      %s205 = smul.addr %s204, 36
      %s206 = smul.addr %s205, 4
      %s207 = scalar_lea.vmem %s0, %s206
      %p208 = scmp.lt.s32.totalorder %s15, 1
      %s209 = scalar_select %p208, %s15, 1
      %s210 = smul.addr %s209, 36
      %s211 = smul.addr %s210, 4
      %s212 = scalar_lea.vmem %s1, %s211
      %p213 = scmp.lt.s32.totalorder %s15, 1
      %s214 = scalar_select %p213, %s15, 1
      %s215 = smul.addr %s214, 8
      %s216 = smul.addr %s215, 4
      %s217 = scalar_lea.vmem %s4, %s216
      %v219 = vld [vmem:[%s3] sm:$0x1]
      loop: start=0, step=1, limit=8
      $region37: #{deep_encoder.6} parent=35 // loop_pre_header
        _
      $region38: #{deep_encoder.6} parent=35 // loop_header
        %s221 = sphi 0, %s225
        %p222 = scmp.ge.s32.totalorder %s221, 8
      $region39: #{deep_encoder.6} parent=35 // loop_header_branch
        %224 = sbr.rel (%p222) target = $region43
      $region40: #{deep_encoder.6} parent=35 // loop_body
        %s226 = smul.u32 %s221, 2
        %s227 = smul.u32 %s226, 2
        %s228 = smul.addr %s227, 4
        %s229 = scalar_lea.vmem %s207, %s228
        %v230 = vld [vmem:[%s229] sm:$0xf]
        %v231 = vld [vmem:[%s2] sm:$0xf]
        %s232 = smul.addr %s227, 4
        %s233 = scalar_lea.vmem %s212, %s232
        %v234 = vld [vmem:[%s233] sm:$0xf]
        %s235 = scalar_lea.vmem %s2, 4
        %v236 = vld [vmem:[%s235] sm:$0xf]
        %vm237 = vcmask 64512
        %v239 = vsel %vm237, %v234, 0
        %vm241 = vcmask 1043456
        %v243 = vsel %vm241, %v236, 0
        %245 = vmatprep.subr.bf16.mxu0 0
        %246 = vmatpush1.bf16.msra.mxu0 %v243
        %247 = vmatprep.subr.bf16.mxu0 0
        %248 = vmatpush1.bf16.msra.mxu0 0
        %249 = vmatprep.subr.bf16.mxu0 0
        %250 = vmatpush1.bf16.msra.mxu0 0
        %251 = vmatprep.subr.bf16.mxu0 0
        %252 = vmatpush1.bf16.msra.mxu0 0
        %253 = vmatprep.subr.bf16.mxu0 0
        %254 = vmatpush1.bf16.msra.mxu0 0
        %255 = vmatprep.subr.bf16.mxu0 0
        %256 = vmatpush1.bf16.msra.mxu0 0
        %257 = vmatprep.subr.bf16.mxu0 0
        %258 = vmatpush1.bf16.msra.mxu0 0
        %259 = vmatprep.subr.bf16.mxu0 0
        %260 = vmatpush1.bf16.msra.mxu0 0
        %261 = vmatprep.subr.bf16.mxu0 0
        %262 = vmatpush1.bf16.msra.mxu0 0
        %263 = vmatprep.subr.bf16.mxu0 0
        %264 = vmatpush1.bf16.msra.mxu0 0
        %265 = vmatprep.subr.bf16.mxu0 0
        %266 = vmatpush1.bf16.msra.mxu0 0
        %267 = vmatprep.subr.bf16.mxu0 0
        %268 = vmatpush1.bf16.msra.mxu0 0
        %269 = vmatprep.subr.bf16.mxu0 0
        %270 = vmatpush1.bf16.msra.mxu0 0
        %271 = vmatprep.subr.bf16.mxu0 0
        %272 = vmatpush1.bf16.msra.mxu0 0
        %273 = vmatprep.subr.bf16.mxu0 0
        %274 = vmatpush1.bf16.msra.mxu0 0
        %275 = vmatprep.subr.bf16.mxu0 0
        %276 = vmatpush1.bf16.msra.mxu0 0
        %277 = vmatprep.mubr.bf16.mxu0 0
        %278 = vmatmul.mubr.bf16.gmra.mrb[0].mxu0 %v239
        %v279 = vpop.f32.mrb[0].mxu0
        %v280 = vadd.f32 0.0, %v279
        %v281 = vpop.f32.mrb[0].mxu0
        %v282 = vpop.f32.mrb[0].mxu0
        %v283 = vpop.f32.mrb[0].mxu0
        %284 = vdwg.mxu0
        %v286 = vsel %vm237, %v230, 0
        %v289 = vsel %vm241, %v231, 0
        %291 = vmatprep.subr.bf16.mxu0 0
        %292 = vmatpush1.bf16.msra.mxu0 %v289
        %293 = vmatprep.subr.bf16.mxu0 0
        %294 = vmatpush1.bf16.msra.mxu0 0
        %295 = vmatprep.subr.bf16.mxu0 0
        %296 = vmatpush1.bf16.msra.mxu0 0
        %297 = vmatprep.subr.bf16.mxu0 0
        %298 = vmatpush1.bf16.msra.mxu0 0
        %299 = vmatprep.subr.bf16.mxu0 0
        %300 = vmatpush1.bf16.msra.mxu0 0
        %301 = vmatprep.subr.bf16.mxu0 0
        %302 = vmatpush1.bf16.msra.mxu0 0
        %303 = vmatprep.subr.bf16.mxu0 0
        %304 = vmatpush1.bf16.msra.mxu0 0
        %305 = vmatprep.subr.bf16.mxu0 0
        %306 = vmatpush1.bf16.msra.mxu0 0
        %307 = vmatprep.subr.bf16.mxu0 0
        %308 = vmatpush1.bf16.msra.mxu0 0
        %309 = vmatprep.subr.bf16.mxu0 0
        %310 = vmatpush1.bf16.msra.mxu0 0
        %311 = vmatprep.subr.bf16.mxu0 0
        %312 = vmatpush1.bf16.msra.mxu0 0
        %313 = vmatprep.subr.bf16.mxu0 0
        %314 = vmatpush1.bf16.msra.mxu0 0
        %315 = vmatprep.subr.bf16.mxu0 0
        %316 = vmatpush1.bf16.msra.mxu0 0
        %317 = vmatprep.subr.bf16.mxu0 0
        %318 = vmatpush1.bf16.msra.mxu0 0
        %319 = vmatprep.subr.bf16.mxu0 0
        %320 = vmatpush1.bf16.msra.mxu0 0
        %321 = vmatprep.subr.bf16.mxu0 0
        %322 = vmatpush1.bf16.msra.mxu0 0
        %323 = vmatprep.mubr.bf16.mxu0 0
        %324 = vmatmul.mubr.bf16.gmra.mrb[0].mxu0 %v286
        %v325 = vpop.f32.mrb[0].mxu0
        %v326 = vadd.f32 %v280, %v325
        %v327 = vpop.f32.mrb[0].mxu0
        %v328 = vpop.f32.mrb[0].mxu0
        %v329 = vpop.f32.mrb[0].mxu0
        %330 = vdwg.mxu0
        %v331 = vld [vmem:[%s229] sm:$0xf]
        %v332 = vld [vmem:[%s229 + $0x4] sm:$0x1]
        %s333 = scalar_lea.vmem %s2, 8
        %v334 = vld [vmem:[%s333] sm:$0xf]
        %v337 = vunpack.c.l.b16 %v331
        %v338 = vunpack.c.l.b16 %v332
        %v339 = vpack.c.b16 %v338, %v337
        %v341 = vshrl.u32 %v339, 16
        %v343 = vshll.u32 %v339, 16
        %v345 = vrot.slane %v343, 1
        %v346 = vor.u32 %v341, %v345
        %v348 = vsel %vm237, %v346, 0
        %v351 = vsel %vm241, %v334, 0
        %353 = vmatprep.subr.bf16.mxu0 0
        %354 = vmatpush1.bf16.msra.mxu0 %v351
        %355 = vmatprep.subr.bf16.mxu0 0
        %356 = vmatpush1.bf16.msra.mxu0 0
        %357 = vmatprep.subr.bf16.mxu0 0
        %358 = vmatpush1.bf16.msra.mxu0 0
        %359 = vmatprep.subr.bf16.mxu0 0
        %360 = vmatpush1.bf16.msra.mxu0 0
        %361 = vmatprep.subr.bf16.mxu0 0
        %362 = vmatpush1.bf16.msra.mxu0 0
        %363 = vmatprep.subr.bf16.mxu0 0
        %364 = vmatpush1.bf16.msra.mxu0 0
        %365 = vmatprep.subr.bf16.mxu0 0
        %366 = vmatpush1.bf16.msra.mxu0 0
        %367 = vmatprep.subr.bf16.mxu0 0
        %368 = vmatpush1.bf16.msra.mxu0 0
        %369 = vmatprep.subr.bf16.mxu0 0
        %370 = vmatpush1.bf16.msra.mxu0 0
        %371 = vmatprep.subr.bf16.mxu0 0
        %372 = vmatpush1.bf16.msra.mxu0 0
        %373 = vmatprep.subr.bf16.mxu0 0
        %374 = vmatpush1.bf16.msra.mxu0 0
        %375 = vmatprep.subr.bf16.mxu0 0
        %376 = vmatpush1.bf16.msra.mxu0 0
        %377 = vmatprep.subr.bf16.mxu0 0
        %378 = vmatpush1.bf16.msra.mxu0 0
        %379 = vmatprep.subr.bf16.mxu0 0
        %380 = vmatpush1.bf16.msra.mxu0 0
        %381 = vmatprep.subr.bf16.mxu0 0
        %382 = vmatpush1.bf16.msra.mxu0 0
        %383 = vmatprep.subr.bf16.mxu0 0
        %384 = vmatpush1.bf16.msra.mxu0 0
        %385 = vmatprep.mubr.bf16.mxu0 0
        %386 = vmatmul.mubr.bf16.gmra.mrb[0].mxu0 %v348
        %v387 = vpop.f32.mrb[0].mxu0
        %v388 = vadd.f32 0.0, %v387
        %v389 = vpop.f32.mrb[0].mxu0
        %v390 = vpop.f32.mrb[0].mxu0
        %v391 = vpop.f32.mrb[0].mxu0
        %392 = vdwg.mxu0
        %v393 = vadd.f32 %v326, %v388
        %s394 = sadd.s32 %s226, 1
        %s395 = smul.u32 %s394, 2
        %s396 = smul.addr %s395, 4
        %s397 = scalar_lea.vmem %s207, %s396
        %v398 = vld [vmem:[%s397] sm:$0xf]
        %s399 = scalar_lea.vmem %s2, 12
        %v400 = vld [vmem:[%s399] sm:$0xf]
        %v402 = vsel %vm237, %v398, 0
        %v405 = vsel %vm241, %v400, 0
        %407 = vmatprep.subr.bf16.mxu0 0
        %408 = vmatpush1.bf16.msra.mxu0 %v405
        %409 = vmatprep.subr.bf16.mxu0 0
        %410 = vmatpush1.bf16.msra.mxu0 0
        %411 = vmatprep.subr.bf16.mxu0 0
        %412 = vmatpush1.bf16.msra.mxu0 0
        %413 = vmatprep.subr.bf16.mxu0 0
        %414 = vmatpush1.bf16.msra.mxu0 0
        %415 = vmatprep.subr.bf16.mxu0 0
        %416 = vmatpush1.bf16.msra.mxu0 0
        %417 = vmatprep.subr.bf16.mxu0 0
        %418 = vmatpush1.bf16.msra.mxu0 0
        %419 = vmatprep.subr.bf16.mxu0 0
        %420 = vmatpush1.bf16.msra.mxu0 0
        %421 = vmatprep.subr.bf16.mxu0 0
        %422 = vmatpush1.bf16.msra.mxu0 0
        %423 = vmatprep.subr.bf16.mxu0 0
        %424 = vmatpush1.bf16.msra.mxu0 0
        %425 = vmatprep.subr.bf16.mxu0 0
        %426 = vmatpush1.bf16.msra.mxu0 0
        %427 = vmatprep.subr.bf16.mxu0 0
        %428 = vmatpush1.bf16.msra.mxu0 0
        %429 = vmatprep.subr.bf16.mxu0 0
        %430 = vmatpush1.bf16.msra.mxu0 0
        %431 = vmatprep.subr.bf16.mxu0 0
        %432 = vmatpush1.bf16.msra.mxu0 0
        %433 = vmatprep.subr.bf16.mxu0 0
        %434 = vmatpush1.bf16.msra.mxu0 0
        %435 = vmatprep.subr.bf16.mxu0 0
        %436 = vmatpush1.bf16.msra.mxu0 0
        %437 = vmatprep.subr.bf16.mxu0 0
        %438 = vmatpush1.bf16.msra.mxu0 0
        %439 = vmatprep.mubr.bf16.mxu0 0
        %440 = vmatmul.mubr.bf16.gmra.mrb[0].mxu0 %v402
        %v441 = vpop.f32.mrb[0].mxu0
        %v442 = vadd.f32 0.0, %v441
        %v443 = vpop.f32.mrb[0].mxu0
        %v444 = vpop.f32.mrb[0].mxu0
        %v445 = vpop.f32.mrb[0].mxu0
        %446 = vdwg.mxu0
        %v447 = vadd.f32 %v393, %v442
        %s448 = smul.addr %s395, 4
        %s449 = scalar_lea.vmem %s212, %s448
        %v450 = vld [vmem:[%s449] sm:$0xf]
        %s451 = scalar_lea.vmem %s2, 16
        %v452 = vld [vmem:[%s451] sm:$0xf]
        %v454 = vsel %vm237, %v450, 0
        %v457 = vsel %vm241, %v452, 0
        %459 = vmatprep.subr.bf16.mxu0 0
        %460 = vmatpush1.bf16.msra.mxu0 %v457
        %461 = vmatprep.subr.bf16.mxu0 0
        %462 = vmatpush1.bf16.msra.mxu0 0
        %463 = vmatprep.subr.bf16.mxu0 0
        %464 = vmatpush1.bf16.msra.mxu0 0
        %465 = vmatprep.subr.bf16.mxu0 0
        %466 = vmatpush1.bf16.msra.mxu0 0
        %467 = vmatprep.subr.bf16.mxu0 0
        %468 = vmatpush1.bf16.msra.mxu0 0
        %469 = vmatprep.subr.bf16.mxu0 0
        %470 = vmatpush1.bf16.msra.mxu0 0
        %471 = vmatprep.subr.bf16.mxu0 0
        %472 = vmatpush1.bf16.msra.mxu0 0
        %473 = vmatprep.subr.bf16.mxu0 0
        %474 = vmatpush1.bf16.msra.mxu0 0
        %475 = vmatprep.subr.bf16.mxu0 0
        %476 = vmatpush1.bf16.msra.mxu0 0
        %477 = vmatprep.subr.bf16.mxu0 0
        %478 = vmatpush1.bf16.msra.mxu0 0
        %479 = vmatprep.subr.bf16.mxu0 0
        %480 = vmatpush1.bf16.msra.mxu0 0
        %481 = vmatprep.subr.bf16.mxu0 0
        %482 = vmatpush1.bf16.msra.mxu0 0
        %483 = vmatprep.subr.bf16.mxu0 0
        %484 = vmatpush1.bf16.msra.mxu0 0
        %485 = vmatprep.subr.bf16.mxu0 0
        %486 = vmatpush1.bf16.msra.mxu0 0
        %487 = vmatprep.subr.bf16.mxu0 0
        %488 = vmatpush1.bf16.msra.mxu0 0
        %489 = vmatprep.subr.bf16.mxu0 0
        %490 = vmatpush1.bf16.msra.mxu0 0
        %491 = vmatprep.mubr.bf16.mxu0 0
        %492 = vmatmul.mubr.bf16.gmra.mrb[0].mxu0 %v454
        %v493 = vpop.f32.mrb[0].mxu0
        %v494 = vadd.f32 0.0, %v493
        %v495 = vpop.f32.mrb[0].mxu0
        %v496 = vpop.f32.mrb[0].mxu0
        %v497 = vpop.f32.mrb[0].mxu0
        %498 = vdwg.mxu0
        %v499 = vadd.f32 %v447, %v494
        %v500 = vld [vmem:[%s397] sm:$0xf]
        %v501 = vld [vmem:[%s397 + $0x4] sm:$0x1]
        %s502 = scalar_lea.vmem %s2, 20
        %v503 = vld [vmem:[%s502] sm:$0xf]
        %v506 = vunpack.c.l.b16 %v500
        %v507 = vunpack.c.l.b16 %v501
        %v508 = vpack.c.b16 %v507, %v506
        %v510 = vshrl.u32 %v508, 16
        %v512 = vshll.u32 %v508, 16
        %v514 = vrot.slane %v512, 1
        %v515 = vor.u32 %v510, %v514
        %v517 = vsel %vm237, %v515, 0
        %v520 = vsel %vm241, %v503, 0
        %522 = vmatprep.subr.bf16.mxu0 0
        %523 = vmatpush1.bf16.msra.mxu0 %v520
        %524 = vmatprep.subr.bf16.mxu0 0
        %525 = vmatpush1.bf16.msra.mxu0 0
        %526 = vmatprep.subr.bf16.mxu0 0
        %527 = vmatpush1.bf16.msra.mxu0 0
        %528 = vmatprep.subr.bf16.mxu0 0
        %529 = vmatpush1.bf16.msra.mxu0 0
        %530 = vmatprep.subr.bf16.mxu0 0
        %531 = vmatpush1.bf16.msra.mxu0 0
        %532 = vmatprep.subr.bf16.mxu0 0
        %533 = vmatpush1.bf16.msra.mxu0 0
        %534 = vmatprep.subr.bf16.mxu0 0
        %535 = vmatpush1.bf16.msra.mxu0 0
        %536 = vmatprep.subr.bf16.mxu0 0
        %537 = vmatpush1.bf16.msra.mxu0 0
        %538 = vmatprep.subr.bf16.mxu0 0
        %539 = vmatpush1.bf16.msra.mxu0 0
        %540 = vmatprep.subr.bf16.mxu0 0
        %541 = vmatpush1.bf16.msra.mxu0 0
        %542 = vmatprep.subr.bf16.mxu0 0
        %543 = vmatpush1.bf16.msra.mxu0 0
        %544 = vmatprep.subr.bf16.mxu0 0
        %545 = vmatpush1.bf16.msra.mxu0 0
        %546 = vmatprep.subr.bf16.mxu0 0
        %547 = vmatpush1.bf16.msra.mxu0 0
        %548 = vmatprep.subr.bf16.mxu0 0
        %549 = vmatpush1.bf16.msra.mxu0 0
        %550 = vmatprep.subr.bf16.mxu0 0
        %551 = vmatpush1.bf16.msra.mxu0 0
        %552 = vmatprep.subr.bf16.mxu0 0
        %553 = vmatpush1.bf16.msra.mxu0 0
        %554 = vmatprep.mubr.bf16.mxu0 0
        %555 = vmatmul.mubr.bf16.gmra.mrb[0].mxu0 %v517
        %v556 = vpop.f32.mrb[0].mxu0
        %v557 = vadd.f32 0.0, %v556
        %v558 = vpop.f32.mrb[0].mxu0
        %v559 = vpop.f32.mrb[0].mxu0
        %v560 = vpop.f32.mrb[0].mxu0
        %561 = vdwg.mxu0
        %v562 = vadd.f32 %v499, %v557
        %s563 = sadd.s32 %s226, 2
        %s564 = smul.u32 %s563, 2
        %s565 = smul.addr %s564, 4
        %s566 = scalar_lea.vmem %s207, %s565
        %v567 = vld [vmem:[%s566] sm:$0xf]
        %s568 = scalar_lea.vmem %s2, 24
        %v569 = vld [vmem:[%s568] sm:$0xf]
        %v571 = vsel %vm237, %v567, 0
        %v574 = vsel %vm241, %v569, 0
        %576 = vmatprep.subr.bf16.mxu0 0
        %577 = vmatpush1.bf16.msra.mxu0 %v574
        %578 = vmatprep.subr.bf16.mxu0 0
        %579 = vmatpush1.bf16.msra.mxu0 0
        %580 = vmatprep.subr.bf16.mxu0 0
        %581 = vmatpush1.bf16.msra.mxu0 0
        %582 = vmatprep.subr.bf16.mxu0 0
        %583 = vmatpush1.bf16.msra.mxu0 0
        %584 = vmatprep.subr.bf16.mxu0 0
        %585 = vmatpush1.bf16.msra.mxu0 0
        %586 = vmatprep.subr.bf16.mxu0 0
        %587 = vmatpush1.bf16.msra.mxu0 0
        %588 = vmatprep.subr.bf16.mxu0 0
        %589 = vmatpush1.bf16.msra.mxu0 0
        %590 = vmatprep.subr.bf16.mxu0 0
        %591 = vmatpush1.bf16.msra.mxu0 0
        %592 = vmatprep.subr.bf16.mxu0 0
        %593 = vmatpush1.bf16.msra.mxu0 0
        %594 = vmatprep.subr.bf16.mxu0 0
        %595 = vmatpush1.bf16.msra.mxu0 0
        %596 = vmatprep.subr.bf16.mxu0 0
        %597 = vmatpush1.bf16.msra.mxu0 0
        %598 = vmatprep.subr.bf16.mxu0 0
        %599 = vmatpush1.bf16.msra.mxu0 0
        %600 = vmatprep.subr.bf16.mxu0 0
        %601 = vmatpush1.bf16.msra.mxu0 0
        %602 = vmatprep.subr.bf16.mxu0 0
        %603 = vmatpush1.bf16.msra.mxu0 0
        %604 = vmatprep.subr.bf16.mxu0 0
        %605 = vmatpush1.bf16.msra.mxu0 0
        %606 = vmatprep.subr.bf16.mxu0 0
        %607 = vmatpush1.bf16.msra.mxu0 0
        %608 = vmatprep.mubr.bf16.mxu0 0
        %609 = vmatmul.mubr.bf16.gmra.mrb[0].mxu0 %v571
        %v610 = vpop.f32.mrb[0].mxu0
        %v611 = vadd.f32 0.0, %v610
        %v612 = vpop.f32.mrb[0].mxu0
        %v613 = vpop.f32.mrb[0].mxu0
        %v614 = vpop.f32.mrb[0].mxu0
        %615 = vdwg.mxu0
        %v616 = vadd.f32 %v562, %v611
        %s617 = smul.addr %s564, 4
        %s618 = scalar_lea.vmem %s212, %s617
        %v619 = vld [vmem:[%s618] sm:$0xf]
        %s620 = scalar_lea.vmem %s2, 28
        %v621 = vld [vmem:[%s620] sm:$0xf]
        %v623 = vsel %vm237, %v619, 0
        %v626 = vsel %vm241, %v621, 0
        %628 = vmatprep.subr.bf16.mxu0 0
        %629 = vmatpush1.bf16.msra.mxu0 %v626
        %630 = vmatprep.subr.bf16.mxu0 0
        %631 = vmatpush1.bf16.msra.mxu0 0
        %632 = vmatprep.subr.bf16.mxu0 0
        %633 = vmatpush1.bf16.msra.mxu0 0
        %634 = vmatprep.subr.bf16.mxu0 0
        %635 = vmatpush1.bf16.msra.mxu0 0
        %636 = vmatprep.subr.bf16.mxu0 0
        %637 = vmatpush1.bf16.msra.mxu0 0
        %638 = vmatprep.subr.bf16.mxu0 0
        %639 = vmatpush1.bf16.msra.mxu0 0
        %640 = vmatprep.subr.bf16.mxu0 0
        %641 = vmatpush1.bf16.msra.mxu0 0
        %642 = vmatprep.subr.bf16.mxu0 0
        %643 = vmatpush1.bf16.msra.mxu0 0
        %644 = vmatprep.subr.bf16.mxu0 0
        %645 = vmatpush1.bf16.msra.mxu0 0
        %646 = vmatprep.subr.bf16.mxu0 0
        %647 = vmatpush1.bf16.msra.mxu0 0
        %648 = vmatprep.subr.bf16.mxu0 0
        %649 = vmatpush1.bf16.msra.mxu0 0
        %650 = vmatprep.subr.bf16.mxu0 0
        %651 = vmatpush1.bf16.msra.mxu0 0
        %652 = vmatprep.subr.bf16.mxu0 0
        %653 = vmatpush1.bf16.msra.mxu0 0
        %654 = vmatprep.subr.bf16.mxu0 0
        %655 = vmatpush1.bf16.msra.mxu0 0
        %656 = vmatprep.subr.bf16.mxu0 0
        %657 = vmatpush1.bf16.msra.mxu0 0
        %658 = vmatprep.subr.bf16.mxu0 0
        %659 = vmatpush1.bf16.msra.mxu0 0
        %660 = vmatprep.mubr.bf16.mxu0 0
        %661 = vmatmul.mubr.bf16.gmra.mrb[0].mxu0 %v623
        %v662 = vpop.f32.mrb[0].mxu0
        %v663 = vadd.f32 0.0, %v662
        %v664 = vpop.f32.mrb[0].mxu0
        %v665 = vpop.f32.mrb[0].mxu0
        %v666 = vpop.f32.mrb[0].mxu0
        %667 = vdwg.mxu0
        %v668 = vadd.f32 %v616, %v663
        %v669 = vld [vmem:[%s566] sm:$0xf]
        %v670 = vld [vmem:[%s566 + $0x4] sm:$0x1]
        %s671 = scalar_lea.vmem %s2, 32
        %v672 = vld [vmem:[%s671] sm:$0xf]
        %v675 = vunpack.c.l.b16 %v669
        %v676 = vunpack.c.l.b16 %v670
        %v677 = vpack.c.b16 %v676, %v675
        %v679 = vshrl.u32 %v677, 16
        %v681 = vshll.u32 %v677, 16
        %v683 = vrot.slane %v681, 1
        %v684 = vor.u32 %v679, %v683
        %v686 = vsel %vm237, %v684, 0
        %v689 = vsel %vm241, %v672, 0
        %691 = vmatprep.subr.bf16.mxu0 0
        %692 = vmatpush1.bf16.msra.mxu0 %v689
        %693 = vmatprep.subr.bf16.mxu0 0
        %694 = vmatpush1.bf16.msra.mxu0 0
        %695 = vmatprep.subr.bf16.mxu0 0
        %696 = vmatpush1.bf16.msra.mxu0 0
        %697 = vmatprep.subr.bf16.mxu0 0
        %698 = vmatpush1.bf16.msra.mxu0 0
        %699 = vmatprep.subr.bf16.mxu0 0
        %700 = vmatpush1.bf16.msra.mxu0 0
        %701 = vmatprep.subr.bf16.mxu0 0
        %702 = vmatpush1.bf16.msra.mxu0 0
        %703 = vmatprep.subr.bf16.mxu0 0
        %704 = vmatpush1.bf16.msra.mxu0 0
        %705 = vmatprep.subr.bf16.mxu0 0
        %706 = vmatpush1.bf16.msra.mxu0 0
        %707 = vmatprep.subr.bf16.mxu0 0
        %708 = vmatpush1.bf16.msra.mxu0 0
        %709 = vmatprep.subr.bf16.mxu0 0
        %710 = vmatpush1.bf16.msra.mxu0 0
        %711 = vmatprep.subr.bf16.mxu0 0
        %712 = vmatpush1.bf16.msra.mxu0 0
        %713 = vmatprep.subr.bf16.mxu0 0
        %714 = vmatpush1.bf16.msra.mxu0 0
        %715 = vmatprep.subr.bf16.mxu0 0
        %716 = vmatpush1.bf16.msra.mxu0 0
        %717 = vmatprep.subr.bf16.mxu0 0
        %718 = vmatpush1.bf16.msra.mxu0 0
        %719 = vmatprep.subr.bf16.mxu0 0
        %720 = vmatpush1.bf16.msra.mxu0 0
        %721 = vmatprep.subr.bf16.mxu0 0
        %722 = vmatpush1.bf16.msra.mxu0 0
        %723 = vmatprep.mubr.bf16.mxu0 0
        %724 = vmatmul.mubr.bf16.gmra.mrb[0].mxu0 %v686
        %v725 = vpop.f32.mrb[0].mxu0
        %v726 = vadd.f32 0.0, %v725
        %v727 = vpop.f32.mrb[0].mxu0
        %v728 = vpop.f32.mrb[0].mxu0
        %v729 = vpop.f32.mrb[0].mxu0
        %730 = vdwg.mxu0
        %v731 = vadd.f32 %v668, %v726
        %v733 = vlaneseq
        %v734 = vshrl.u32 %v733, 7
        %v735 = vsub.s32 0, %v734
        %v736 = vrot.slane %v219, %v735
        %v738 = vadd.f32 %v731, %v736
        %v739 = vmul.f32 %v738, 0.5
        %v740 = vmul.f32 %v738, 0.044715
        %v741 = vmul.f32 %v740, %v738
        %v742 = vmul.f32 %v741, %v738
        %v743 = vadd.f32 %v738, %v742
        %v744 = vmul.f32 %v743, 0.7978846
        %v745 = vtanh.pop %v744
        %v746 = vadd.f32 %v745, 1.0
        %v747 = vmul.f32 %v739, %v746
        %v748 = vpack.c.bf16 %v747, %v747
        %s749 = smul.addr %s221, 4
        %s750 = scalar_lea.vmem %s217, %s749
        %vm751 = vcmask 60416
        %752 = vst.msk [vmem:[%s750] sm:$0xf] %vm751, %v748
      $region41: #{deep_encoder.6} parent=35 // loop_footer
        %s225 = sadd.s32 1, %s221
      $region42: #{deep_encoder.6} parent=35 // loop_footer_branch
        %220 = sbr.rel target = $region38
      $region43: #{deep_encoder.6} parent=35 // loop_exit
        _
      %p753 = scmp.lt.s32.totalorder %s15, 1
      %s754 = scalar_select %p753, %s15, 1
      %s755 = smul.addr %s754, 8
      %s756 = smul.addr %s755, 4
      %s757 = scalar_lea.vmem %s4, %s756
      // Predicated region
      $region44: #{deep_encoder.6} parent=35 // pred_check
        %p758 = pneg %p127
      $region45: #{deep_encoder.6} parent=35 // pred_check_branch
        %760 = sbr.rel (%p758) target = $region47
      $region46: #{deep_encoder.6} parent=35 // pred_region
        _
      $region47: #{deep_encoder.6} parent=35 // pred_fallthru
        _
    $region36: #{deep_encoder.6} parent=5 // pred_fallthru
      _
    %p761 = scmp.le.s32.totalorder 2, %s10
    // Predicated region
    $region48: #{deep_encoder.6} parent=5 // pred_check
      %p762 = pneg %p761
    $region49: #{deep_encoder.6} parent=5 // pred_check_branch
      %764 = sbr.rel (%p762) target = $region51
    $region50: #{deep_encoder.6} parent=5 // pred_region
      %s765 = ssub.s32 %s10, 2
      // Predicated region
      $region52: #{deep_encoder.6} parent=50 // pred_check
        %p766 = pneg %p133
      $region53: #{deep_encoder.6} parent=50 // pred_check_branch
        %768 = sbr.rel (%p766) target = $region55
      $region54: #{deep_encoder.6} parent=50 // pred_region
        %p769 = scmp.lt.s32.totalorder %s16, 1
        %s770 = scalar_select %p769, %s16, 1
        %s771 = smul.addr %s770, 8
        %s772 = smul.addr %s771, 4
        %s773 = scalar_lea.vmem %s4, %s772
      $region55: #{deep_encoder.6} parent=50 // pred_fallthru
        _
    $region51: #{deep_encoder.6} parent=5 // pred_fallthru
      _
  $region6: #{deep_encoder.6} parent=0 // loop_footer
    %s14 = sadd.s32 1, %s10
  $region7: #{deep_encoder.6} parent=0 // loop_footer_branch
    %9 = sbr.rel target = $region3
  $region8: #{deep_encoder.6} parent=0 // loop_exit
    _

// kernel: deep_encoder.8
$region0: #{deep_encoder.8}
  #allocation0 [shape = 'u32[]', space=smem, size = 0x4, offset = 0x4, fixed_abs, tag = 'smem constant byte address 0x4 - core index']
  #allocation1 [shape = 'u32[144,128]{1,0:T(1,128)}', space=vmem, size = 0x12000, scoped, tag = 'internal scratch']
  %s0 = inlined_call_operand.vmem [shape: bf16[2,10,5,8], index: 0, kind: input, shape index: {}]
  %s1 = inlined_call_operand.vmem [shape: bf16[2,10,5,8], index: 1, kind: input, shape index: {}]
  %s2 = inlined_call_operand.vmem [shape: bf16[9,8,16], index: 2, kind: input, shape index: {}]
  %s3 = inlined_call_operand.vmem [shape: f32[1,16], index: 3, kind: input, shape index: {}]
  %s4 = inlined_call_operand.vmem [shape: bf16[2,4,4,16], index: 4, kind: output, shape index: {}]
  %s5 = sld [smem:[#allocation0]]
  $region56: #{deep_encoder.8} parent=0
    _
  %s7 = ssub.s32 1, %s5
  %s8 = scalar_select 0, %s7, %s5
  loop: start=0, step=1, limit=4
  $region2: #{deep_encoder.8} parent=0 // loop_pre_header
    _
  $region3: #{deep_encoder.8} parent=0 // loop_header
    %s10 = sphi 0, %s14
    %p11 = scmp.ge.s32.totalorder %s10, 4
    %s20 = sphi 0, %s22
    %s23 = sphi 0, %s20
    %s24 = sphi 0, %s23
    %s40 = sphi 0, %s24
    %s46 = sphi 0, %s48
    %s49 = sphi 0, %s46
    %s50 = sphi 0, %s49
    %s66 = sphi 0, %s50
    %s70 = sphi 0, %s70
    %s72 = sphi 0, %s70
    %s73 = sphi 0, %s72
    %s87 = sphi 0, %s73
    %s91 = sphi 0, %s91
    %s93 = sphi 0, %s91
    %s94 = sphi 0, %s93
    %s108 = sphi 0, %s94
    %s114 = sphi 0, %s116
    %s117 = sphi 0, %s114
    %s118 = sphi 0, %s117
    %s134 = sphi 0, %s118
  $region4: #{deep_encoder.8} parent=0 // loop_header_branch
    %13 = sbr.rel (%p11) target = $region8
  $region5: #{deep_encoder.8} parent=0 // loop_body
    %s15 = ssub.s32 %s10, 1
    %s16 = ssub.s32 %s10, 2
    %s17 = sadd.s32 %s10, 1
    %s18 = ssub.s32 %s10, %s17
    %p19 = scmp.eq.s32.totalorder %s18, 0
    %s21 = sadd.s32 %s20, 1
    %s22 = scalar_select %p19, %s20, %s21
    %p25 = pneg %p19
    %p26 = scmp.eq.s32.totalorder %s10, 1
    %p27 = por %p25, %p26
    %p28 = scmp.ne.s32.totalorder %s20, %s23
    %p29 = scmp.eq.s32.totalorder %s10, 0
    %p30 = por %p28, %p29
    %p31 = scmp.ne.s32.totalorder %s20, %s23
    %p32 = scmp.eq.s32.totalorder %s15, 1
    %p33 = por %p31, %p32
    %p34 = scmp.ne.s32.totalorder %s23, %s24
    %p35 = scmp.eq.s32.totalorder %s15, 0
    %p36 = por %p34, %p35
    %p37 = scmp.ne.s32.totalorder %s23, %s24
    %p38 = scmp.eq.s32.totalorder %s16, 1
    %p39 = por %p37, %p38
    %p41 = scmp.ne.s32.totalorder %s24, %s40
    %p42 = scmp.eq.s32.totalorder %s16, 0
    %p43 = por %p41, %p42
    %s44 = ssub.s32 %s10, %s17
    %p45 = scmp.eq.s32.totalorder %s44, 0
    %s47 = sadd.s32 %s46, 1
    %s48 = scalar_select %p45, %s46, %s47
    %p51 = pneg %p45
    %p52 = scmp.eq.s32.totalorder %s10, 1
    %p53 = por %p51, %p52
    %p54 = scmp.ne.s32.totalorder %s46, %s49
    %p55 = scmp.eq.s32.totalorder %s10, 0
    %p56 = por %p54, %p55
    %p57 = scmp.ne.s32.totalorder %s46, %s49
    %p58 = scmp.eq.s32.totalorder %s15, 1
    %p59 = por %p57, %p58
    %p60 = scmp.ne.s32.totalorder %s49, %s50
    %p61 = scmp.eq.s32.totalorder %s15, 0
    %p62 = por %p60, %p61
    %p63 = scmp.ne.s32.totalorder %s49, %s50
    %p64 = scmp.eq.s32.totalorder %s16, 1
    %p65 = por %p63, %p64
    %p67 = scmp.ne.s32.totalorder %s50, %s66
    %p68 = scmp.eq.s32.totalorder %s16, 0
    %p69 = por %p67, %p68
    %s71 = sadd.s32 %s70, 1
    %p74 = scmp.eq.s32.totalorder %s10, 1
    %p75 = scmp.ne.s32.totalorder %s70, %s72
    %p76 = scmp.eq.s32.totalorder %s10, 0
    %p77 = por %p75, %p76
    %p78 = scmp.ne.s32.totalorder %s70, %s72
    %p79 = scmp.eq.s32.totalorder %s15, 1
    %p80 = por %p78, %p79
    %p81 = scmp.ne.s32.totalorder %s72, %s73
    %p82 = scmp.eq.s32.totalorder %s15, 0
    %p83 = por %p81, %p82
    %p84 = scmp.ne.s32.totalorder %s72, %s73
    %p85 = scmp.eq.s32.totalorder %s16, 1
    %p86 = por %p84, %p85
    %p88 = scmp.ne.s32.totalorder %s73, %s87
    %p89 = scmp.eq.s32.totalorder %s16, 0
    %p90 = por %p88, %p89
    %s92 = sadd.s32 %s91, 1
    %p95 = scmp.eq.s32.totalorder %s10, 1
    %p96 = scmp.ne.s32.totalorder %s91, %s93
    %p97 = scmp.eq.s32.totalorder %s10, 0
    %p98 = por %p96, %p97
    %p99 = scmp.ne.s32.totalorder %s91, %s93
    %p100 = scmp.eq.s32.totalorder %s15, 1
    %p101 = por %p99, %p100
    %p102 = scmp.ne.s32.totalorder %s93, %s94
    %p103 = scmp.eq.s32.totalorder %s15, 0
    %p104 = por %p102, %p103
    %p105 = scmp.ne.s32.totalorder %s93, %s94
    %p106 = scmp.eq.s32.totalorder %s16, 1
    %p107 = por %p105, %p106
    %p109 = scmp.ne.s32.totalorder %s94, %s108
    %p110 = scmp.eq.s32.totalorder %s16, 0
    %p111 = por %p109, %p110
    %s112 = ssub.s32 %s10, %s17
    %p113 = scmp.eq.s32.totalorder %s112, 0
    %s115 = sadd.s32 %s114, 1
    %s116 = scalar_select %p113, %s114, %s115
    %p119 = pneg %p113
    %p120 = scmp.eq.s32.totalorder %s10, 1
    %p121 = por %p119, %p120
    %p122 = scmp.ne.s32.totalorder %s114, %s117
    %p123 = scmp.eq.s32.totalorder %s10, 0
    %p124 = por %p122, %p123
    %p125 = scmp.ne.s32.totalorder %s114, %s117
    %p126 = scmp.eq.s32.totalorder %s15, 1
    %p127 = por %p125, %p126
    %p128 = scmp.ne.s32.totalorder %s117, %s118
    %p129 = scmp.eq.s32.totalorder %s15, 0
    %p130 = por %p128, %p129
    %p131 = scmp.ne.s32.totalorder %s117, %s118
    %p132 = scmp.eq.s32.totalorder %s16, 1
    %p133 = por %p131, %p132
    %p135 = scmp.ne.s32.totalorder %s118, %s134
    %p136 = scmp.eq.s32.totalorder %s16, 0
    %p137 = por %p135, %p136
    %p138 = scmp.le.s32.totalorder 1, %s10
    %p139 = scmp.lt.s32.totalorder %s10, 3
    %p140 = pnand %p138, %p139
    %p141 = pneg %p140
    // Predicated region
    $region9: #{deep_encoder.8} parent=5 // pred_check
      _
    $region10: #{deep_encoder.8} parent=5 // pred_check_branch
      %143 = sbr.rel (%p140) target = $region12
    $region11: #{deep_encoder.8} parent=5 // pred_region
      %s144 = ssub.s32 %s10, 1
      // Predicated region
      $region13: #{deep_encoder.8} parent=11 // pred_check
        %p145 = pneg %p83
      $region14: #{deep_encoder.8} parent=11 // pred_check_branch
        %147 = sbr.rel (%p145) target = $region16
      $region15: #{deep_encoder.8} parent=11 // pred_region
        _
      $region16: #{deep_encoder.8} parent=11 // pred_fallthru
        _
      // Predicated region
      $region17: #{deep_encoder.8} parent=11 // pred_check
        %p148 = pneg %p104
      $region18: #{deep_encoder.8} parent=11 // pred_check_branch
        %150 = sbr.rel (%p148) target = $region20
      $region19: #{deep_encoder.8} parent=11 // pred_region
        _
      $region20: #{deep_encoder.8} parent=11 // pred_fallthru
        _
    $region12: #{deep_encoder.8} parent=5 // pred_fallthru
      _
    %p151 = scmp.lt.s32.totalorder %s10, 2
    // Predicated region
    $region21: #{deep_encoder.8} parent=5 // pred_check
      %p152 = pneg %p151
    $region22: #{deep_encoder.8} parent=5 // pred_check_branch
      %154 = sbr.rel (%p152) target = $region24
    $region23: #{deep_encoder.8} parent=5 // pred_region
      // Predicated region
      $region25: #{deep_encoder.8} parent=23 // pred_check
        %p155 = pneg %p30
      $region26: #{deep_encoder.8} parent=23 // pred_check_branch
        %157 = sbr.rel (%p155) target = $region28
      $region27: #{deep_encoder.8} parent=23 // pred_region
        %p158 = scmp.lt.s32.totalorder %s10, 1
        %s159 = scalar_select %p158, %s10, 1
        %s160 = smul.addr %s159, 10
        %s161 = smul.addr %s160, 4
        %s162 = scalar_lea.vmem %s0, %s161
      $region28: #{deep_encoder.8} parent=23 // pred_fallthru
        _
      // Predicated region
      $region29: #{deep_encoder.8} parent=23 // pred_check
        %p163 = pneg %p56
      $region30: #{deep_encoder.8} parent=23 // pred_check_branch
        %165 = sbr.rel (%p163) target = $region32
      $region31: #{deep_encoder.8} parent=23 // pred_region
        %p166 = scmp.lt.s32.totalorder %s10, 1
        %s167 = scalar_select %p166, %s10, 1
        %s168 = smul.addr %s167, 10
        %s169 = smul.addr %s168, 4
        %s170 = scalar_lea.vmem %s1, %s169
      $region32: #{deep_encoder.8} parent=23 // pred_fallthru
        _
    $region24: #{deep_encoder.8} parent=5 // pred_fallthru
      _
    %p171 = scmp.le.s32.totalorder 1, %s10
    %p172 = scmp.lt.s32.totalorder %s10, 3
    %p173 = pnand %p171, %p172
    %p174 = pneg %p173
    // Predicated region
    $region33: #{deep_encoder.8} parent=5 // pred_check
      _
    $region34: #{deep_encoder.8} parent=5 // pred_check_branch
      %176 = sbr.rel (%p173) target = $region36
    $region35: #{deep_encoder.8} parent=5 // pred_region
      %s177 = ssub.s32 %s10, 1
      %p178 = scmp.lt.s32.totalorder %s15, 1
      %s179 = scalar_select %p178, %s15, 1
      %s180 = smul.addr %s179, 10
      %s181 = smul.addr %s180, 4
      %s182 = scalar_lea.vmem %s0, %s181
      %p183 = pneg %p36
      %p184 = pneg %p33
      %p185 = scmp.lt.s32.totalorder %s15, 1
      %s186 = scalar_select %p185, %s15, 1
      %s187 = smul.addr %s186, 10
      %s188 = smul.addr %s187, 4
      %s189 = scalar_lea.vmem %s1, %s188
      %p190 = pneg %p62
      %p191 = pneg %p59
      %p192 = pneg %p83
      %p193 = pneg %p80
      %p194 = pneg %p104
      %p195 = pneg %p101
      %p196 = pneg %p130
      %p197 = pneg %p127
      %p198 = scmp.lt.s32.totalorder %s15, 1
      %s199 = scalar_select %p198, %s15, 1
      %s200 = smul.addr %s199, 4
      %s201 = smul.addr %s200, 2
      %s202 = scalar_lea.vmem %s4, %s201
      %p203 = scmp.lt.s32.totalorder %s15, 1
      %s204 = scalar_select %p203, %s15, 1
      %s205 = smul.addr %s204, 10
      %s206 = smul.addr %s205, 4
      %s207 = scalar_lea.vmem %s0, %s206
      %p208 = scmp.lt.s32.totalorder %s15, 1
      %s209 = scalar_select %p208, %s15, 1
      %s210 = smul.addr %s209, 10
      %s211 = smul.addr %s210, 4
      %s212 = scalar_lea.vmem %s1, %s211
      %p213 = scmp.lt.s32.totalorder %s15, 1
      %s214 = scalar_select %p213, %s15, 1
      %s215 = smul.addr %s214, 4
      %s216 = smul.addr %s215, 2
      %s217 = scalar_lea.vmem %s4, %s216
      %v219 = vld [vmem:[%s3] sm:$0x1]
      loop: start=0, step=1, limit=4
      $region37: #{deep_encoder.8} parent=35 // loop_pre_header
        _
      $region38: #{deep_encoder.8} parent=35 // loop_header
        %s221 = sphi 0, %s225
        %p222 = scmp.ge.s32.totalorder %s221, 4
      $region39: #{deep_encoder.8} parent=35 // loop_header_branch
        %224 = sbr.rel (%p222) target = $region43
      $region40: #{deep_encoder.8} parent=35 // loop_body
        %s226 = smul.u32 %s221, 2
        %s227 = smul.addr %s226, 4
        %s228 = scalar_lea.vmem %s207, %s227
        %v229 = vld [vmem:[%s228] sm:$0x3]
        %v230 = vld [vmem:[%s2] sm:$0xf]
        %s231 = smul.addr %s226, 4
        %s232 = scalar_lea.vmem %s212, %s231
        %v233 = vld [vmem:[%s232] sm:$0x3]
        %s234 = scalar_lea.vmem %s2, 4
        %v235 = vld [vmem:[%s234] sm:$0xf]
        %vm236 = vcmask 64512
        %v238 = vsel %vm236, %v233, 0
        %vm240 = vcmask 1043456
        %v242 = vsel %vm240, %v235, 0
        %244 = vmatprep.subr.bf16.mxu0 0
        %245 = vmatpush1.bf16.msra.mxu0 %v242
        %246 = vmatprep.subr.bf16.mxu0 0
        %247 = vmatpush1.bf16.msra.mxu0 0
        %248 = vmatprep.subr.bf16.mxu0 0
        %249 = vmatpush1.bf16.msra.mxu0 0
        %250 = vmatprep.subr.bf16.mxu0 0
        %251 = vmatpush1.bf16.msra.mxu0 0
        %252 = vmatprep.subr.bf16.mxu0 0
        %253 = vmatpush1.bf16.msra.mxu0 0
        %254 = vmatprep.subr.bf16.mxu0 0
        %255 = vmatpush1.bf16.msra.mxu0 0
        %256 = vmatprep.subr.bf16.mxu0 0
        %257 = vmatpush1.bf16.msra.mxu0 0
        %258 = vmatprep.subr.bf16.mxu0 0
        %259 = vmatpush1.bf16.msra.mxu0 0
        %260 = vmatprep.subr.bf16.mxu0 0
        %261 = vmatpush1.bf16.msra.mxu0 0
        %262 = vmatprep.subr.bf16.mxu0 0
        %263 = vmatpush1.bf16.msra.mxu0 0
        %264 = vmatprep.subr.bf16.mxu0 0
        %265 = vmatpush1.bf16.msra.mxu0 0
        %266 = vmatprep.subr.bf16.mxu0 0
        %267 = vmatpush1.bf16.msra.mxu0 0
        %268 = vmatprep.subr.bf16.mxu0 0
        %269 = vmatpush1.bf16.msra.mxu0 0
        %270 = vmatprep.subr.bf16.mxu0 0
        %271 = vmatpush1.bf16.msra.mxu0 0
        %272 = vmatprep.subr.bf16.mxu0 0
        %273 = vmatpush1.bf16.msra.mxu0 0
        %274 = vmatprep.subr.bf16.mxu0 0
        %275 = vmatpush1.bf16.msra.mxu0 0
        %276 = vmatprep.mubr.bf16.mxu0 0
        %277 = vmatmul.mubr.bf16.gmra.mrb[0].mxu0 %v238
        %v278 = vpop.f32.mrb[0].mxu0
        %v279 = vadd.f32 0.0, %v278
        %v280 = vpop.f32.mrb[0].mxu0
        %v281 = vpop.f32.mrb[0].mxu0
        %v282 = vpop.f32.mrb[0].mxu0
        %283 = vdwg.mxu0
        %v285 = vsel %vm236, %v229, 0
        %v288 = vsel %vm240, %v230, 0
        %290 = vmatprep.subr.bf16.mxu0 0
        %291 = vmatpush1.bf16.msra.mxu0 %v288
        %292 = vmatprep.subr.bf16.mxu0 0
        %293 = vmatpush1.bf16.msra.mxu0 0
        %294 = vmatprep.subr.bf16.mxu0 0
        %295 = vmatpush1.bf16.msra.mxu0 0
        %296 = vmatprep.subr.bf16.mxu0 0
        %297 = vmatpush1.bf16.msra.mxu0 0
        %298 = vmatprep.subr.bf16.mxu0 0
        %299 = vmatpush1.bf16.msra.mxu0 0
        %300 = vmatprep.subr.bf16.mxu0 0
        %301 = vmatpush1.bf16.msra.mxu0 0
        %302 = vmatprep.subr.bf16.mxu0 0
        %303 = vmatpush1.bf16.msra.mxu0 0
        %304 = vmatprep.subr.bf16.mxu0 0
        %305 = vmatpush1.bf16.msra.mxu0 0
        %306 = vmatprep.subr.bf16.mxu0 0
        %307 = vmatpush1.bf16.msra.mxu0 0
        %308 = vmatprep.subr.bf16.mxu0 0
        %309 = vmatpush1.bf16.msra.mxu0 0
        %310 = vmatprep.subr.bf16.mxu0 0
        %311 = vmatpush1.bf16.msra.mxu0 0
        %312 = vmatprep.subr.bf16.mxu0 0
        %313 = vmatpush1.bf16.msra.mxu0 0
        %314 = vmatprep.subr.bf16.mxu0 0
        %315 = vmatpush1.bf16.msra.mxu0 0
        %316 = vmatprep.subr.bf16.mxu0 0
        %317 = vmatpush1.bf16.msra.mxu0 0
        %318 = vmatprep.subr.bf16.mxu0 0
        %319 = vmatpush1.bf16.msra.mxu0 0
        %320 = vmatprep.subr.bf16.mxu0 0
        %321 = vmatpush1.bf16.msra.mxu0 0
        %322 = vmatprep.mubr.bf16.mxu0 0
        %323 = vmatmul.mubr.bf16.gmra.mrb[0].mxu0 %v285
        %v324 = vpop.f32.mrb[0].mxu0
        %v325 = vadd.f32 %v279, %v324
        %v326 = vpop.f32.mrb[0].mxu0
        %v327 = vpop.f32.mrb[0].mxu0
        %v328 = vpop.f32.mrb[0].mxu0
        %329 = vdwg.mxu0
        %v330 = vld [vmem:[%s228] sm:$0x7]
        %s331 = scalar_lea.vmem %s2, 8
        %v332 = vld [vmem:[%s331] sm:$0xf]
        %v334 = vunpack.c.l.b16 %v330
        %v335 = vpack.c.b16 %v334, %v334
        %v337 = vshrl.u32 %v335, 16
        %v339 = vshll.u32 %v335, 16
        %v341 = vrot.slane %v339, 1
        %v342 = vor.u32 %v337, %v341
        %v344 = vsel %vm236, %v342, 0
        %v347 = vsel %vm240, %v332, 0
        %349 = vmatprep.subr.bf16.mxu0 0
        %350 = vmatpush1.bf16.msra.mxu0 %v347
        %351 = vmatprep.subr.bf16.mxu0 0
        %352 = vmatpush1.bf16.msra.mxu0 0
        %353 = vmatprep.subr.bf16.mxu0 0
        %354 = vmatpush1.bf16.msra.mxu0 0
        %355 = vmatprep.subr.bf16.mxu0 0
        %356 = vmatpush1.bf16.msra.mxu0 0
        %357 = vmatprep.subr.bf16.mxu0 0
        %358 = vmatpush1.bf16.msra.mxu0 0
        %359 = vmatprep.subr.bf16.mxu0 0
        %360 = vmatpush1.bf16.msra.mxu0 0
        %361 = vmatprep.subr.bf16.mxu0 0
        %362 = vmatpush1.bf16.msra.mxu0 0
        %363 = vmatprep.subr.bf16.mxu0 0
        %364 = vmatpush1.bf16.msra.mxu0 0
        %365 = vmatprep.subr.bf16.mxu0 0
        %366 = vmatpush1.bf16.msra.mxu0 0
        %367 = vmatprep.subr.bf16.mxu0 0
        %368 = vmatpush1.bf16.msra.mxu0 0
        %369 = vmatprep.subr.bf16.mxu0 0
        %370 = vmatpush1.bf16.msra.mxu0 0
        %371 = vmatprep.subr.bf16.mxu0 0
        %372 = vmatpush1.bf16.msra.mxu0 0
        %373 = vmatprep.subr.bf16.mxu0 0
        %374 = vmatpush1.bf16.msra.mxu0 0
        %375 = vmatprep.subr.bf16.mxu0 0
        %376 = vmatpush1.bf16.msra.mxu0 0
        %377 = vmatprep.subr.bf16.mxu0 0
        %378 = vmatpush1.bf16.msra.mxu0 0
        %379 = vmatprep.subr.bf16.mxu0 0
        %380 = vmatpush1.bf16.msra.mxu0 0
        %381 = vmatprep.mubr.bf16.mxu0 0
        %382 = vmatmul.mubr.bf16.gmra.mrb[0].mxu0 %v344
        %v383 = vpop.f32.mrb[0].mxu0
        %v384 = vadd.f32 0.0, %v383
        %v385 = vpop.f32.mrb[0].mxu0
        %v386 = vpop.f32.mrb[0].mxu0
        %v387 = vpop.f32.mrb[0].mxu0
        %388 = vdwg.mxu0
        %v389 = vadd.f32 %v325, %v384
        %s390 = sadd.s32 %s226, 1
        %s391 = smul.addr %s390, 4
        %s392 = scalar_lea.vmem %s207, %s391
        %v393 = vld [vmem:[%s392] sm:$0x3]
        %s394 = scalar_lea.vmem %s2, 12
        %v395 = vld [vmem:[%s394] sm:$0xf]
        %v397 = vsel %vm236, %v393, 0
        %v400 = vsel %vm240, %v395, 0
        %402 = vmatprep.subr.bf16.mxu0 0
        %403 = vmatpush1.bf16.msra.mxu0 %v400
        %404 = vmatprep.subr.bf16.mxu0 0
        %405 = vmatpush1.bf16.msra.mxu0 0
        %406 = vmatprep.subr.bf16.mxu0 0
        %407 = vmatpush1.bf16.msra.mxu0 0
        %408 = vmatprep.subr.bf16.mxu0 0
        %409 = vmatpush1.bf16.msra.mxu0 0
        %410 = vmatprep.subr.bf16.mxu0 0
        %411 = vmatpush1.bf16.msra.mxu0 0
        %412 = vmatprep.subr.bf16.mxu0 0
        %413 = vmatpush1.bf16.msra.mxu0 0
        %414 = vmatprep.subr.bf16.mxu0 0
        %415 = vmatpush1.bf16.msra.mxu0 0
        %416 = vmatprep.subr.bf16.mxu0 0
        %417 = vmatpush1.bf16.msra.mxu0 0
        %418 = vmatprep.subr.bf16.mxu0 0
        %419 = vmatpush1.bf16.msra.mxu0 0
        %420 = vmatprep.subr.bf16.mxu0 0
        %421 = vmatpush1.bf16.msra.mxu0 0
        %422 = vmatprep.subr.bf16.mxu0 0
        %423 = vmatpush1.bf16.msra.mxu0 0
        %424 = vmatprep.subr.bf16.mxu0 0
        %425 = vmatpush1.bf16.msra.mxu0 0
        %426 = vmatprep.subr.bf16.mxu0 0
        %427 = vmatpush1.bf16.msra.mxu0 0
        %428 = vmatprep.subr.bf16.mxu0 0
        %429 = vmatpush1.bf16.msra.mxu0 0
        %430 = vmatprep.subr.bf16.mxu0 0
        %431 = vmatpush1.bf16.msra.mxu0 0
        %432 = vmatprep.subr.bf16.mxu0 0
        %433 = vmatpush1.bf16.msra.mxu0 0
        %434 = vmatprep.mubr.bf16.mxu0 0
        %435 = vmatmul.mubr.bf16.gmra.mrb[0].mxu0 %v397
        %v436 = vpop.f32.mrb[0].mxu0
        %v437 = vadd.f32 0.0, %v436
        %v438 = vpop.f32.mrb[0].mxu0
        %v439 = vpop.f32.mrb[0].mxu0
        %v440 = vpop.f32.mrb[0].mxu0
        %441 = vdwg.mxu0
        %v442 = vadd.f32 %v389, %v437
        %s443 = smul.addr %s390, 4
        %s444 = scalar_lea.vmem %s212, %s443
        %v445 = vld [vmem:[%s444] sm:$0x3]
        %s446 = scalar_lea.vmem %s2, 16
        %v447 = vld [vmem:[%s446] sm:$0xf]
        %v449 = vsel %vm236, %v445, 0
        %v452 = vsel %vm240, %v447, 0
        %454 = vmatprep.subr.bf16.mxu0 0
        %455 = vmatpush1.bf16.msra.mxu0 %v452
        %456 = vmatprep.subr.bf16.mxu0 0
        %457 = vmatpush1.bf16.msra.mxu0 0
        %458 = vmatprep.subr.bf16.mxu0 0
        %459 = vmatpush1.bf16.msra.mxu0 0
        %460 = vmatprep.subr.bf16.mxu0 0
        %461 = vmatpush1.bf16.msra.mxu0 0
        %462 = vmatprep.subr.bf16.mxu0 0
        %463 = vmatpush1.bf16.msra.mxu0 0
        %464 = vmatprep.subr.bf16.mxu0 0
        %465 = vmatpush1.bf16.msra.mxu0 0
        %466 = vmatprep.subr.bf16.mxu0 0
        %467 = vmatpush1.bf16.msra.mxu0 0
        %468 = vmatprep.subr.bf16.mxu0 0
        %469 = vmatpush1.bf16.msra.mxu0 0
        %470 = vmatprep.subr.bf16.mxu0 0
        %471 = vmatpush1.bf16.msra.mxu0 0
        %472 = vmatprep.subr.bf16.mxu0 0
        %473 = vmatpush1.bf16.msra.mxu0 0
        %474 = vmatprep.subr.bf16.mxu0 0
        %475 = vmatpush1.bf16.msra.mxu0 0
        %476 = vmatprep.subr.bf16.mxu0 0
        %477 = vmatpush1.bf16.msra.mxu0 0
        %478 = vmatprep.subr.bf16.mxu0 0
        %479 = vmatpush1.bf16.msra.mxu0 0
        %480 = vmatprep.subr.bf16.mxu0 0
        %481 = vmatpush1.bf16.msra.mxu0 0
        %482 = vmatprep.subr.bf16.mxu0 0
        %483 = vmatpush1.bf16.msra.mxu0 0
        %484 = vmatprep.subr.bf16.mxu0 0
        %485 = vmatpush1.bf16.msra.mxu0 0
        %486 = vmatprep.mubr.bf16.mxu0 0
        %487 = vmatmul.mubr.bf16.gmra.mrb[0].mxu0 %v449
        %v488 = vpop.f32.mrb[0].mxu0
        %v489 = vadd.f32 0.0, %v488
        %v490 = vpop.f32.mrb[0].mxu0
        %v491 = vpop.f32.mrb[0].mxu0
        %v492 = vpop.f32.mrb[0].mxu0
        %493 = vdwg.mxu0
        %v494 = vadd.f32 %v442, %v489
        %v495 = vld [vmem:[%s392] sm:$0x7]
        %s496 = scalar_lea.vmem %s2, 20
        %v497 = vld [vmem:[%s496] sm:$0xf]
        %v499 = vunpack.c.l.b16 %v495
        %v500 = vpack.c.b16 %v499, %v499
        %v502 = vshrl.u32 %v500, 16
        %v504 = vshll.u32 %v500, 16
        %v506 = vrot.slane %v504, 1
        %v507 = vor.u32 %v502, %v506
        %v509 = vsel %vm236, %v507, 0
        %v512 = vsel %vm240, %v497, 0
        %514 = vmatprep.subr.bf16.mxu0 0
        %515 = vmatpush1.bf16.msra.mxu0 %v512
        %516 = vmatprep.subr.bf16.mxu0 0
        %517 = vmatpush1.bf16.msra.mxu0 0
        %518 = vmatprep.subr.bf16.mxu0 0
        %519 = vmatpush1.bf16.msra.mxu0 0
        %520 = vmatprep.subr.bf16.mxu0 0
        %521 = vmatpush1.bf16.msra.mxu0 0
        %522 = vmatprep.subr.bf16.mxu0 0
        %523 = vmatpush1.bf16.msra.mxu0 0
        %524 = vmatprep.subr.bf16.mxu0 0
        %525 = vmatpush1.bf16.msra.mxu0 0
        %526 = vmatprep.subr.bf16.mxu0 0
        %527 = vmatpush1.bf16.msra.mxu0 0
        %528 = vmatprep.subr.bf16.mxu0 0
        %529 = vmatpush1.bf16.msra.mxu0 0
        %530 = vmatprep.subr.bf16.mxu0 0
        %531 = vmatpush1.bf16.msra.mxu0 0
        %532 = vmatprep.subr.bf16.mxu0 0
        %533 = vmatpush1.bf16.msra.mxu0 0
        %534 = vmatprep.subr.bf16.mxu0 0
        %535 = vmatpush1.bf16.msra.mxu0 0
        %536 = vmatprep.subr.bf16.mxu0 0
        %537 = vmatpush1.bf16.msra.mxu0 0
        %538 = vmatprep.subr.bf16.mxu0 0
        %539 = vmatpush1.bf16.msra.mxu0 0
        %540 = vmatprep.subr.bf16.mxu0 0
        %541 = vmatpush1.bf16.msra.mxu0 0
        %542 = vmatprep.subr.bf16.mxu0 0
        %543 = vmatpush1.bf16.msra.mxu0 0
        %544 = vmatprep.subr.bf16.mxu0 0
        %545 = vmatpush1.bf16.msra.mxu0 0
        %546 = vmatprep.mubr.bf16.mxu0 0
        %547 = vmatmul.mubr.bf16.gmra.mrb[0].mxu0 %v509
        %v548 = vpop.f32.mrb[0].mxu0
        %v549 = vadd.f32 0.0, %v548
        %v550 = vpop.f32.mrb[0].mxu0
        %v551 = vpop.f32.mrb[0].mxu0
        %v552 = vpop.f32.mrb[0].mxu0
        %553 = vdwg.mxu0
        %v554 = vadd.f32 %v494, %v549
        %s555 = sadd.s32 %s226, 2
        %s556 = smul.addr %s555, 4
        %s557 = scalar_lea.vmem %s207, %s556
        %v558 = vld [vmem:[%s557] sm:$0x3]
        %s559 = scalar_lea.vmem %s2, 24
        %v560 = vld [vmem:[%s559] sm:$0xf]
        %v562 = vsel %vm236, %v558, 0
        %v565 = vsel %vm240, %v560, 0
        %567 = vmatprep.subr.bf16.mxu0 0
        %568 = vmatpush1.bf16.msra.mxu0 %v565
        %569 = vmatprep.subr.bf16.mxu0 0
        %570 = vmatpush1.bf16.msra.mxu0 0
        %571 = vmatprep.subr.bf16.mxu0 0
        %572 = vmatpush1.bf16.msra.mxu0 0
        %573 = vmatprep.subr.bf16.mxu0 0
        %574 = vmatpush1.bf16.msra.mxu0 0
        %575 = vmatprep.subr.bf16.mxu0 0
        %576 = vmatpush1.bf16.msra.mxu0 0
        %577 = vmatprep.subr.bf16.mxu0 0
        %578 = vmatpush1.bf16.msra.mxu0 0
        %579 = vmatprep.subr.bf16.mxu0 0
        %580 = vmatpush1.bf16.msra.mxu0 0
        %581 = vmatprep.subr.bf16.mxu0 0
        %582 = vmatpush1.bf16.msra.mxu0 0
        %583 = vmatprep.subr.bf16.mxu0 0
        %584 = vmatpush1.bf16.msra.mxu0 0
        %585 = vmatprep.subr.bf16.mxu0 0
        %586 = vmatpush1.bf16.msra.mxu0 0
        %587 = vmatprep.subr.bf16.mxu0 0
        %588 = vmatpush1.bf16.msra.mxu0 0
        %589 = vmatprep.subr.bf16.mxu0 0
        %590 = vmatpush1.bf16.msra.mxu0 0
        %591 = vmatprep.subr.bf16.mxu0 0
        %592 = vmatpush1.bf16.msra.mxu0 0
        %593 = vmatprep.subr.bf16.mxu0 0
        %594 = vmatpush1.bf16.msra.mxu0 0
        %595 = vmatprep.subr.bf16.mxu0 0
        %596 = vmatpush1.bf16.msra.mxu0 0
        %597 = vmatprep.subr.bf16.mxu0 0
        %598 = vmatpush1.bf16.msra.mxu0 0
        %599 = vmatprep.mubr.bf16.mxu0 0
        %600 = vmatmul.mubr.bf16.gmra.mrb[0].mxu0 %v562
        %v601 = vpop.f32.mrb[0].mxu0
        %v602 = vadd.f32 0.0, %v601
        %v603 = vpop.f32.mrb[0].mxu0
        %v604 = vpop.f32.mrb[0].mxu0
        %v605 = vpop.f32.mrb[0].mxu0
        %606 = vdwg.mxu0
        %v607 = vadd.f32 %v554, %v602
        %s608 = smul.addr %s555, 4
        %s609 = scalar_lea.vmem %s212, %s608
        %v610 = vld [vmem:[%s609] sm:$0x3]
        %s611 = scalar_lea.vmem %s2, 28
        %v612 = vld [vmem:[%s611] sm:$0xf]
        %v614 = vsel %vm236, %v610, 0
        %v617 = vsel %vm240, %v612, 0
        %619 = vmatprep.subr.bf16.mxu0 0
        %620 = vmatpush1.bf16.msra.mxu0 %v617
        %621 = vmatprep.subr.bf16.mxu0 0
        %622 = vmatpush1.bf16.msra.mxu0 0
        %623 = vmatprep.subr.bf16.mxu0 0
        %624 = vmatpush1.bf16.msra.mxu0 0
        %625 = vmatprep.subr.bf16.mxu0 0
        %626 = vmatpush1.bf16.msra.mxu0 0
        %627 = vmatprep.subr.bf16.mxu0 0
        %628 = vmatpush1.bf16.msra.mxu0 0
        %629 = vmatprep.subr.bf16.mxu0 0
        %630 = vmatpush1.bf16.msra.mxu0 0
        %631 = vmatprep.subr.bf16.mxu0 0
        %632 = vmatpush1.bf16.msra.mxu0 0
        %633 = vmatprep.subr.bf16.mxu0 0
        %634 = vmatpush1.bf16.msra.mxu0 0
        %635 = vmatprep.subr.bf16.mxu0 0
        %636 = vmatpush1.bf16.msra.mxu0 0
        %637 = vmatprep.subr.bf16.mxu0 0
        %638 = vmatpush1.bf16.msra.mxu0 0
        %639 = vmatprep.subr.bf16.mxu0 0
        %640 = vmatpush1.bf16.msra.mxu0 0
        %641 = vmatprep.subr.bf16.mxu0 0
        %642 = vmatpush1.bf16.msra.mxu0 0
        %643 = vmatprep.subr.bf16.mxu0 0
        %644 = vmatpush1.bf16.msra.mxu0 0
        %645 = vmatprep.subr.bf16.mxu0 0
        %646 = vmatpush1.bf16.msra.mxu0 0
        %647 = vmatprep.subr.bf16.mxu0 0
        %648 = vmatpush1.bf16.msra.mxu0 0
        %649 = vmatprep.subr.bf16.mxu0 0
        %650 = vmatpush1.bf16.msra.mxu0 0
        %651 = vmatprep.mubr.bf16.mxu0 0
        %652 = vmatmul.mubr.bf16.gmra.mrb[0].mxu0 %v614
        %v653 = vpop.f32.mrb[0].mxu0
        %v654 = vadd.f32 0.0, %v653
        %v655 = vpop.f32.mrb[0].mxu0
        %v656 = vpop.f32.mrb[0].mxu0
        %v657 = vpop.f32.mrb[0].mxu0
        %658 = vdwg.mxu0
        %v659 = vadd.f32 %v607, %v654
        %v660 = vld [vmem:[%s557] sm:$0x7]
        %s661 = scalar_lea.vmem %s2, 32
        %v662 = vld [vmem:[%s661] sm:$0xf]
        %v664 = vunpack.c.l.b16 %v660
        %v665 = vpack.c.b16 %v664, %v664
        %v667 = vshrl.u32 %v665, 16
        %v669 = vshll.u32 %v665, 16
        %v671 = vrot.slane %v669, 1
        %v672 = vor.u32 %v667, %v671
        %v674 = vsel %vm236, %v672, 0
        %v677 = vsel %vm240, %v662, 0
        %679 = vmatprep.subr.bf16.mxu0 0
        %680 = vmatpush1.bf16.msra.mxu0 %v677
        %681 = vmatprep.subr.bf16.mxu0 0
        %682 = vmatpush1.bf16.msra.mxu0 0
        %683 = vmatprep.subr.bf16.mxu0 0
        %684 = vmatpush1.bf16.msra.mxu0 0
        %685 = vmatprep.subr.bf16.mxu0 0
        %686 = vmatpush1.bf16.msra.mxu0 0
        %687 = vmatprep.subr.bf16.mxu0 0
        %688 = vmatpush1.bf16.msra.mxu0 0
        %689 = vmatprep.subr.bf16.mxu0 0
        %690 = vmatpush1.bf16.msra.mxu0 0
        %691 = vmatprep.subr.bf16.mxu0 0
        %692 = vmatpush1.bf16.msra.mxu0 0
        %693 = vmatprep.subr.bf16.mxu0 0
        %694 = vmatpush1.bf16.msra.mxu0 0
        %695 = vmatprep.subr.bf16.mxu0 0
        %696 = vmatpush1.bf16.msra.mxu0 0
        %697 = vmatprep.subr.bf16.mxu0 0
        %698 = vmatpush1.bf16.msra.mxu0 0
        %699 = vmatprep.subr.bf16.mxu0 0
        %700 = vmatpush1.bf16.msra.mxu0 0
        %701 = vmatprep.subr.bf16.mxu0 0
        %702 = vmatpush1.bf16.msra.mxu0 0
        %703 = vmatprep.subr.bf16.mxu0 0
        %704 = vmatpush1.bf16.msra.mxu0 0
        %705 = vmatprep.subr.bf16.mxu0 0
        %706 = vmatpush1.bf16.msra.mxu0 0
        %707 = vmatprep.subr.bf16.mxu0 0
        %708 = vmatpush1.bf16.msra.mxu0 0
        %709 = vmatprep.subr.bf16.mxu0 0
        %710 = vmatpush1.bf16.msra.mxu0 0
        %711 = vmatprep.mubr.bf16.mxu0 0
        %712 = vmatmul.mubr.bf16.gmra.mrb[0].mxu0 %v674
        %v713 = vpop.f32.mrb[0].mxu0
        %v714 = vadd.f32 0.0, %v713
        %v715 = vpop.f32.mrb[0].mxu0
        %v716 = vpop.f32.mrb[0].mxu0
        %v717 = vpop.f32.mrb[0].mxu0
        %718 = vdwg.mxu0
        %v719 = vadd.f32 %v659, %v714
        %v721 = vlaneseq
        %v722 = vshrl.u32 %v721, 7
        %v723 = vsub.s32 0, %v722
        %v724 = vrot.slane %v219, %v723
        %v726 = vadd.f32 %v719, %v724
        %v727 = vmul.f32 %v726, 0.5
        %v728 = vmul.f32 %v726, 0.044715
        %v729 = vmul.f32 %v728, %v726
        %v730 = vmul.f32 %v729, %v726
        %v731 = vadd.f32 %v726, %v730
        %v732 = vmul.f32 %v731, 0.7978846
        %v733 = vtanh.pop %v732
        %v734 = vadd.f32 %v733, 1.0
        %v735 = vmul.f32 %v727, %v734
        %v736 = vpack.c.bf16 %v735, %v735
        %s737 = smul.addr %s221, 2
        %s738 = scalar_lea.vmem %s217, %s737
        %vm739 = vcmask 123904
        %740 = vst.msk [vmem:[%s738] sm:$0x3] %vm739, %v736
      $region41: #{deep_encoder.8} parent=35 // loop_footer
        %s225 = sadd.s32 1, %s221
      $region42: #{deep_encoder.8} parent=35 // loop_footer_branch
        %220 = sbr.rel target = $region38
      $region43: #{deep_encoder.8} parent=35 // loop_exit
        _
      %p741 = scmp.lt.s32.totalorder %s15, 1
      %s742 = scalar_select %p741, %s15, 1
      %s743 = smul.addr %s742, 4
      %s744 = smul.addr %s743, 2
      %s745 = scalar_lea.vmem %s4, %s744
      // Predicated region
      $region44: #{deep_encoder.8} parent=35 // pred_check
        %p746 = pneg %p127
      $region45: #{deep_encoder.8} parent=35 // pred_check_branch
        %748 = sbr.rel (%p746) target = $region47
      $region46: #{deep_encoder.8} parent=35 // pred_region
        _
      $region47: #{deep_encoder.8} parent=35 // pred_fallthru
        _
    $region36: #{deep_encoder.8} parent=5 // pred_fallthru
      _
    %p749 = scmp.le.s32.totalorder 2, %s10
    // Predicated region
    $region48: #{deep_encoder.8} parent=5 // pred_check
      %p750 = pneg %p749
    $region49: #{deep_encoder.8} parent=5 // pred_check_branch
      %752 = sbr.rel (%p750) target = $region51
    $region50: #{deep_encoder.8} parent=5 // pred_region
      %s753 = ssub.s32 %s10, 2
      // Predicated region
      $region52: #{deep_encoder.8} parent=50 // pred_check
        %p754 = pneg %p133
      $region53: #{deep_encoder.8} parent=50 // pred_check_branch
        %756 = sbr.rel (%p754) target = $region55
      $region54: #{deep_encoder.8} parent=50 // pred_region
        %p757 = scmp.lt.s32.totalorder %s16, 1
        %s758 = scalar_select %p757, %s16, 1
        %s759 = smul.addr %s758, 4
        %s760 = smul.addr %s759, 2
        %s761 = scalar_lea.vmem %s4, %s760
      $region55: #{deep_encoder.8} parent=50 // pred_fallthru
        _
    $region51: #{deep_encoder.8} parent=5 // pred_fallthru
      _
  $region6: #{deep_encoder.8} parent=0 // loop_footer
    %s14 = sadd.s32 1, %s10
  $region7: #{deep_encoder.8} parent=0 // loop_footer_branch
    %9 = sbr.rel target = $region3
  $region8: #{deep_encoder.8} parent=0 // loop_exit
    _

// kernel: deep_encoder.9
$region0: #{deep_encoder.9}
  #allocation0 [shape = 'u32[]', space=smem, size = 0x4, offset = 0x4, fixed_abs, tag = 'smem constant byte address 0x4 - core index']
  #allocation1 [shape = 'u32[144,128]{1,0:T(1,128)}', space=vmem, size = 0x12000, scoped, tag = 'internal scratch']
  %s0 = inlined_call_operand.vmem [shape: bf16[2,6,6,16], index: 0, kind: input, shape index: {}]
  %s1 = inlined_call_operand.vmem [shape: bf16[9,16,16], index: 1, kind: input, shape index: {}]
  %s2 = inlined_call_operand.vmem [shape: f32[1,16], index: 2, kind: input, shape index: {}]
  %s3 = inlined_call_operand.vmem [shape: bf16[2,4,4,16], index: 3, kind: output, shape index: {}]
  %s4 = sld [smem:[#allocation0]]
  $region52: #{deep_encoder.9} parent=0
    _
  %s6 = ssub.s32 1, %s4
  %s7 = scalar_select 0, %s6, %s4
  loop: start=0, step=1, limit=4
  $region2: #{deep_encoder.9} parent=0 // loop_pre_header
    _
  $region3: #{deep_encoder.9} parent=0 // loop_header
    %s9 = sphi 0, %s13
    %p10 = scmp.ge.s32.totalorder %s9, 4
    %s19 = sphi 0, %s21
    %s22 = sphi 0, %s19
    %s23 = sphi 0, %s22
    %s39 = sphi 0, %s23
    %s43 = sphi 0, %s43
    %s45 = sphi 0, %s43
    %s46 = sphi 0, %s45
    %s60 = sphi 0, %s46
    %s64 = sphi 0, %s64
    %s66 = sphi 0, %s64
    %s67 = sphi 0, %s66
    %s81 = sphi 0, %s67
    %s87 = sphi 0, %s89
    %s90 = sphi 0, %s87
    %s91 = sphi 0, %s90
    %s107 = sphi 0, %s91
  $region4: #{deep_encoder.9} parent=0 // loop_header_branch
    %12 = sbr.rel (%p10) target = $region8
  $region5: #{deep_encoder.9} parent=0 // loop_body
    %s14 = ssub.s32 %s9, 1
    %s15 = ssub.s32 %s9, 2
    %s16 = sadd.s32 %s9, 1
    %s17 = ssub.s32 %s9, %s16
    %p18 = scmp.eq.s32.totalorder %s17, 0
    %s20 = sadd.s32 %s19, 1
    %s21 = scalar_select %p18, %s19, %s20
    %p24 = pneg %p18
    %p25 = scmp.eq.s32.totalorder %s9, 1
    %p26 = por %p24, %p25
    %p27 = scmp.ne.s32.totalorder %s19, %s22
    %p28 = scmp.eq.s32.totalorder %s9, 0
    %p29 = por %p27, %p28
    %p30 = scmp.ne.s32.totalorder %s19, %s22
    %p31 = scmp.eq.s32.totalorder %s14, 1
    %p32 = por %p30, %p31
    %p33 = scmp.ne.s32.totalorder %s22, %s23
    %p34 = scmp.eq.s32.totalorder %s14, 0
    %p35 = por %p33, %p34
    %p36 = scmp.ne.s32.totalorder %s22, %s23
    %p37 = scmp.eq.s32.totalorder %s15, 1
    %p38 = por %p36, %p37
    %p40 = scmp.ne.s32.totalorder %s23, %s39
    %p41 = scmp.eq.s32.totalorder %s15, 0
    %p42 = por %p40, %p41
    %s44 = sadd.s32 %s43, 1
    %p47 = scmp.eq.s32.totalorder %s9, 1
    %p48 = scmp.ne.s32.totalorder %s43, %s45
    %p49 = scmp.eq.s32.totalorder %s9, 0
    %p50 = por %p48, %p49
    %p51 = scmp.ne.s32.totalorder %s43, %s45
    %p52 = scmp.eq.s32.totalorder %s14, 1
    %p53 = por %p51, %p52
    %p54 = scmp.ne.s32.totalorder %s45, %s46
    %p55 = scmp.eq.s32.totalorder %s14, 0
    %p56 = por %p54, %p55
    %p57 = scmp.ne.s32.totalorder %s45, %s46
    %p58 = scmp.eq.s32.totalorder %s15, 1
    %p59 = por %p57, %p58
    %p61 = scmp.ne.s32.totalorder %s46, %s60
    %p62 = scmp.eq.s32.totalorder %s15, 0
    %p63 = por %p61, %p62
    %s65 = sadd.s32 %s64, 1
    %p68 = scmp.eq.s32.totalorder %s9, 1
    %p69 = scmp.ne.s32.totalorder %s64, %s66
    %p70 = scmp.eq.s32.totalorder %s9, 0
    %p71 = por %p69, %p70
    %p72 = scmp.ne.s32.totalorder %s64, %s66
    %p73 = scmp.eq.s32.totalorder %s14, 1
    %p74 = por %p72, %p73
    %p75 = scmp.ne.s32.totalorder %s66, %s67
    %p76 = scmp.eq.s32.totalorder %s14, 0
    %p77 = por %p75, %p76
    %p78 = scmp.ne.s32.totalorder %s66, %s67
    %p79 = scmp.eq.s32.totalorder %s15, 1
    %p80 = por %p78, %p79
    %p82 = scmp.ne.s32.totalorder %s67, %s81
    %p83 = scmp.eq.s32.totalorder %s15, 0
    %p84 = por %p82, %p83
    %s85 = ssub.s32 %s9, %s16
    %p86 = scmp.eq.s32.totalorder %s85, 0
    %s88 = sadd.s32 %s87, 1
    %s89 = scalar_select %p86, %s87, %s88
    %p92 = pneg %p86
    %p93 = scmp.eq.s32.totalorder %s9, 1
    %p94 = por %p92, %p93
    %p95 = scmp.ne.s32.totalorder %s87, %s90
    %p96 = scmp.eq.s32.totalorder %s9, 0
    %p97 = por %p95, %p96
    %p98 = scmp.ne.s32.totalorder %s87, %s90
    %p99 = scmp.eq.s32.totalorder %s14, 1
    %p100 = por %p98, %p99
    %p101 = scmp.ne.s32.totalorder %s90, %s91
    %p102 = scmp.eq.s32.totalorder %s14, 0
    %p103 = por %p101, %p102
    %p104 = scmp.ne.s32.totalorder %s90, %s91
    %p105 = scmp.eq.s32.totalorder %s15, 1
    %p106 = por %p104, %p105
    %p108 = scmp.ne.s32.totalorder %s91, %s107
    %p109 = scmp.eq.s32.totalorder %s15, 0
    %p110 = por %p108, %p109
    %p111 = scmp.le.s32.totalorder 1, %s9
    %p112 = scmp.lt.s32.totalorder %s9, 3
    %p113 = pnand %p111, %p112
    %p114 = pneg %p113
    // Predicated region
    $region9: #{deep_encoder.9} parent=5 // pred_check
      _
    $region10: #{deep_encoder.9} parent=5 // pred_check_branch
      %116 = sbr.rel (%p113) target = $region12
    $region11: #{deep_encoder.9} parent=5 // pred_region
      %s117 = ssub.s32 %s9, 1
      // Predicated region
      $region13: #{deep_encoder.9} parent=11 // pred_check
        %p118 = pneg %p56
      $region14: #{deep_encoder.9} parent=11 // pred_check_branch
        %120 = sbr.rel (%p118) target = $region16
      $region15: #{deep_encoder.9} parent=11 // pred_region
        _
      $region16: #{deep_encoder.9} parent=11 // pred_fallthru
        _
      // Predicated region
      $region17: #{deep_encoder.9} parent=11 // pred_check
        %p121 = pneg %p77
      $region18: #{deep_encoder.9} parent=11 // pred_check_branch
        %123 = sbr.rel (%p121) target = $region20
      $region19: #{deep_encoder.9} parent=11 // pred_region
        _
      $region20: #{deep_encoder.9} parent=11 // pred_fallthru
        _
    $region12: #{deep_encoder.9} parent=5 // pred_fallthru
      _
    %p124 = scmp.lt.s32.totalorder %s9, 2
    // Predicated region
    $region21: #{deep_encoder.9} parent=5 // pred_check
      %p125 = pneg %p124
    $region22: #{deep_encoder.9} parent=5 // pred_check_branch
      %127 = sbr.rel (%p125) target = $region24
    $region23: #{deep_encoder.9} parent=5 // pred_region
      // Predicated region
      $region25: #{deep_encoder.9} parent=23 // pred_check
        %p128 = pneg %p29
      $region26: #{deep_encoder.9} parent=23 // pred_check_branch
        %130 = sbr.rel (%p128) target = $region28
      $region27: #{deep_encoder.9} parent=23 // pred_region
        %p131 = scmp.lt.s32.totalorder %s9, 1
        %s132 = scalar_select %p131, %s9, 1
        %s133 = smul.addr %s132, 6
        %s134 = smul.addr %s133, 4
        %s135 = scalar_lea.vmem %s0, %s134
      $region28: #{deep_encoder.9} parent=23 // pred_fallthru
        _
    $region24: #{deep_encoder.9} parent=5 // pred_fallthru
      _
    %p136 = scmp.le.s32.totalorder 1, %s9
    %p137 = scmp.lt.s32.totalorder %s9, 3
    %p138 = pnand %p136, %p137
    %p139 = pneg %p138
    // Predicated region
    $region29: #{deep_encoder.9} parent=5 // pred_check
      _
    $region30: #{deep_encoder.9} parent=5 // pred_check_branch
      %141 = sbr.rel (%p138) target = $region32
    $region31: #{deep_encoder.9} parent=5 // pred_region
      %s142 = ssub.s32 %s9, 1
      %p143 = scmp.lt.s32.totalorder %s14, 1
      %s144 = scalar_select %p143, %s14, 1
      %s145 = smul.addr %s144, 6
      %s146 = smul.addr %s145, 4
      %s147 = scalar_lea.vmem %s0, %s146
      %p148 = pneg %p35
      %p149 = pneg %p32
      %p150 = pneg %p56
      %p151 = pneg %p53
      %p152 = pneg %p77
      %p153 = pneg %p74
      %p154 = pneg %p103
      %p155 = pneg %p100
      %p156 = scmp.lt.s32.totalorder %s14, 1
      %s157 = scalar_select %p156, %s14, 1
      %s158 = smul.addr %s157, 4
      %s159 = smul.addr %s158, 2
      %s160 = scalar_lea.vmem %s3, %s159
      %p161 = scmp.lt.s32.totalorder %s14, 1
      %s162 = scalar_select %p161, %s14, 1
      %s163 = smul.addr %s162, 6
      %s164 = smul.addr %s163, 4
      %s165 = scalar_lea.vmem %s0, %s164
      %p166 = scmp.lt.s32.totalorder %s14, 1
      %s167 = scalar_select %p166, %s14, 1
      %s168 = smul.addr %s167, 4
      %s169 = smul.addr %s168, 2
      %s170 = scalar_lea.vmem %s3, %s169
      %v172 = vld [vmem:[%s2] sm:$0x1]
      loop: start=0, step=1, limit=4
      $region33: #{deep_encoder.9} parent=31 // loop_pre_header
        _
      $region34: #{deep_encoder.9} parent=31 // loop_header
        %s174 = sphi 0, %s178
        %p175 = scmp.ge.s32.totalorder %s174, 4
      $region35: #{deep_encoder.9} parent=31 // loop_header_branch
        %177 = sbr.rel (%p175) target = $region39
      $region36: #{deep_encoder.9} parent=31 // loop_body
        %s179 = smul.addr %s174, 4
        %s180 = scalar_lea.vmem %s165, %s179
        %v181 = vld [vmem:[%s180] sm:$0x3]
        %v182 = vld [vmem:[%s1] sm:$0xf]
        %v183 = vld [vmem:[%s1 + $0x4] sm:$0xf]
        %v184 = vld [vmem:[%s180] sm:$0x7]
        %s185 = scalar_lea.vmem %s1, 8
        %v186 = vld [vmem:[%s185] sm:$0xf]
        %v187 = vld [vmem:[%s185 + $0x4] sm:$0xf]
        %v189 = vunpack.c.l.b16 %v184
        %v190 = vpack.c.b16 %v189, %v189
        %v192 = vshrl.u32 %v190, 16
        %v194 = vshll.u32 %v190, 16
        %v196 = vrot.slane %v194, 1
        %v197 = vor.u32 %v192, %v196
        %v200 = vunpack.c.l.b16 %v186
        %v201 = vunpack.c.l.b16 %v187
        %v202 = vpack.c.b16 %v201, %v200
        %vm204 = vcmask 130048
        %v206 = vsel %vm204, %v197, 0
        %208 = vmatprep.subr.bf16.mxu0 0
        %209 = vmatpush1.bf16.msra.mxu0 %v202
        %210 = vmatprep.subr.bf16.mxu0 0
        %211 = vmatpush1.bf16.msra.mxu0 0
        %212 = vmatprep.subr.bf16.mxu0 0
        %213 = vmatpush1.bf16.msra.mxu0 0
        %214 = vmatprep.subr.bf16.mxu0 0
        %215 = vmatpush1.bf16.msra.mxu0 0
        %216 = vmatprep.subr.bf16.mxu0 0
        %217 = vmatpush1.bf16.msra.mxu0 0
        %218 = vmatprep.subr.bf16.mxu0 0
        %219 = vmatpush1.bf16.msra.mxu0 0
        %220 = vmatprep.subr.bf16.mxu0 0
        %221 = vmatpush1.bf16.msra.mxu0 0
        %222 = vmatprep.subr.bf16.mxu0 0
        %223 = vmatpush1.bf16.msra.mxu0 0
        %224 = vmatprep.subr.bf16.mxu0 0
        %225 = vmatpush1.bf16.msra.mxu0 0
        %226 = vmatprep.subr.bf16.mxu0 0
        %227 = vmatpush1.bf16.msra.mxu0 0
        %228 = vmatprep.subr.bf16.mxu0 0
        %229 = vmatpush1.bf16.msra.mxu0 0
        %230 = vmatprep.subr.bf16.mxu0 0
        %231 = vmatpush1.bf16.msra.mxu0 0
        %232 = vmatprep.subr.bf16.mxu0 0
        %233 = vmatpush1.bf16.msra.mxu0 0
        %234 = vmatprep.subr.bf16.mxu0 0
        %235 = vmatpush1.bf16.msra.mxu0 0
        %236 = vmatprep.subr.bf16.mxu0 0
        %237 = vmatpush1.bf16.msra.mxu0 0
        %238 = vmatprep.subr.bf16.mxu0 0
        %239 = vmatpush1.bf16.msra.mxu0 0
        %240 = vmatprep.mubr.bf16.mxu0 0
        %241 = vmatmul.mubr.bf16.gmra.mrb[0].mxu0 %v206
        %v242 = vpop.f32.mrb[0].mxu0
        %v243 = vadd.f32 0.0, %v242
        %v244 = vpop.f32.mrb[0].mxu0
        %v245 = vpop.f32.mrb[0].mxu0
        %v246 = vpop.f32.mrb[0].mxu0
        %247 = vdwg.mxu0
        %v250 = vunpack.c.l.b16 %v182
        %v251 = vunpack.c.l.b16 %v183
        %v252 = vpack.c.b16 %v251, %v250
        %v255 = vsel %vm204, %v181, 0
        %257 = vmatprep.subr.bf16.mxu0 0
        %258 = vmatpush1.bf16.msra.mxu0 %v252
        %259 = vmatprep.subr.bf16.mxu0 0
        %260 = vmatpush1.bf16.msra.mxu0 0
        %261 = vmatprep.subr.bf16.mxu0 0
        %262 = vmatpush1.bf16.msra.mxu0 0
        %263 = vmatprep.subr.bf16.mxu0 0
        %264 = vmatpush1.bf16.msra.mxu0 0
        %265 = vmatprep.subr.bf16.mxu0 0
        %266 = vmatpush1.bf16.msra.mxu0 0
        %267 = vmatprep.subr.bf16.mxu0 0
        %268 = vmatpush1.bf16.msra.mxu0 0
        %269 = vmatprep.subr.bf16.mxu0 0
        %270 = vmatpush1.bf16.msra.mxu0 0
        %271 = vmatprep.subr.bf16.mxu0 0
        %272 = vmatpush1.bf16.msra.mxu0 0
        %273 = vmatprep.subr.bf16.mxu0 0
        %274 = vmatpush1.bf16.msra.mxu0 0
        %275 = vmatprep.subr.bf16.mxu0 0
        %276 = vmatpush1.bf16.msra.mxu0 0
        %277 = vmatprep.subr.bf16.mxu0 0
        %278 = vmatpush1.bf16.msra.mxu0 0
        %279 = vmatprep.subr.bf16.mxu0 0
        %280 = vmatpush1.bf16.msra.mxu0 0
        %281 = vmatprep.subr.bf16.mxu0 0
        %282 = vmatpush1.bf16.msra.mxu0 0
        %283 = vmatprep.subr.bf16.mxu0 0
        %284 = vmatpush1.bf16.msra.mxu0 0
        %285 = vmatprep.subr.bf16.mxu0 0
        %286 = vmatpush1.bf16.msra.mxu0 0
        %287 = vmatprep.subr.bf16.mxu0 0
        %288 = vmatpush1.bf16.msra.mxu0 0
        %289 = vmatprep.mubr.bf16.mxu0 0
        %290 = vmatmul.mubr.bf16.gmra.mrb[0].mxu0 %v255
        %v291 = vpop.f32.mrb[0].mxu0
        %v292 = vadd.f32 %v243, %v291
        %v293 = vpop.f32.mrb[0].mxu0
        %v294 = vpop.f32.mrb[0].mxu0
        %v295 = vpop.f32.mrb[0].mxu0
        %296 = vdwg.mxu0
        %v297 = vld [vmem:[%s180] sm:$0x6]
        %s298 = scalar_lea.vmem %s1, 16
        %v299 = vld [vmem:[%s298] sm:$0xf]
        %v300 = vld [vmem:[%s298 + $0x4] sm:$0xf]
        %v302 = vunpack.c.l.b16 %v297
        %v303 = vpack.c.b16 %v302, %v302
        %v304 = vrot.slane %v303, 1
        %v307 = vunpack.c.l.b16 %v299
        %v308 = vunpack.c.l.b16 %v300
        %v309 = vpack.c.b16 %v308, %v307
        %v312 = vsel %vm204, %v304, 0
        %314 = vmatprep.subr.bf16.mxu0 0
        %315 = vmatpush1.bf16.msra.mxu0 %v309
        %316 = vmatprep.subr.bf16.mxu0 0
        %317 = vmatpush1.bf16.msra.mxu0 0
        %318 = vmatprep.subr.bf16.mxu0 0
        %319 = vmatpush1.bf16.msra.mxu0 0
        %320 = vmatprep.subr.bf16.mxu0 0
        %321 = vmatpush1.bf16.msra.mxu0 0
        %322 = vmatprep.subr.bf16.mxu0 0
        %323 = vmatpush1.bf16.msra.mxu0 0
        %324 = vmatprep.subr.bf16.mxu0 0
        %325 = vmatpush1.bf16.msra.mxu0 0
        %326 = vmatprep.subr.bf16.mxu0 0
        %327 = vmatpush1.bf16.msra.mxu0 0
        %328 = vmatprep.subr.bf16.mxu0 0
        %329 = vmatpush1.bf16.msra.mxu0 0
        %330 = vmatprep.subr.bf16.mxu0 0
        %331 = vmatpush1.bf16.msra.mxu0 0
        %332 = vmatprep.subr.bf16.mxu0 0
        %333 = vmatpush1.bf16.msra.mxu0 0
        %334 = vmatprep.subr.bf16.mxu0 0
        %335 = vmatpush1.bf16.msra.mxu0 0
        %336 = vmatprep.subr.bf16.mxu0 0
        %337 = vmatpush1.bf16.msra.mxu0 0
        %338 = vmatprep.subr.bf16.mxu0 0
        %339 = vmatpush1.bf16.msra.mxu0 0
        %340 = vmatprep.subr.bf16.mxu0 0
        %341 = vmatpush1.bf16.msra.mxu0 0
        %342 = vmatprep.subr.bf16.mxu0 0
        %343 = vmatpush1.bf16.msra.mxu0 0
        %344 = vmatprep.subr.bf16.mxu0 0
        %345 = vmatpush1.bf16.msra.mxu0 0
        %346 = vmatprep.mubr.bf16.mxu0 0
        %347 = vmatmul.mubr.bf16.gmra.mrb[0].mxu0 %v312
        %v348 = vpop.f32.mrb[0].mxu0
        %v349 = vadd.f32 0.0, %v348
        %v350 = vpop.f32.mrb[0].mxu0
        %v351 = vpop.f32.mrb[0].mxu0
        %v352 = vpop.f32.mrb[0].mxu0
        %353 = vdwg.mxu0
        %v354 = vadd.f32 %v292, %v349
        %s355 = sadd.s32 %s174, 1
        %s356 = smul.addr %s355, 4
        %s357 = scalar_lea.vmem %s165, %s356
        %v358 = vld [vmem:[%s357] sm:$0x3]
        %s359 = scalar_lea.vmem %s1, 24
        %v360 = vld [vmem:[%s359] sm:$0xf]
        %v361 = vld [vmem:[%s359 + $0x4] sm:$0xf]
        %v364 = vunpack.c.l.b16 %v360
        %v365 = vunpack.c.l.b16 %v361
        %v366 = vpack.c.b16 %v365, %v364
        %v369 = vsel %vm204, %v358, 0
        %371 = vmatprep.subr.bf16.mxu0 0
        %372 = vmatpush1.bf16.msra.mxu0 %v366
        %373 = vmatprep.subr.bf16.mxu0 0
        %374 = vmatpush1.bf16.msra.mxu0 0
        %375 = vmatprep.subr.bf16.mxu0 0
        %376 = vmatpush1.bf16.msra.mxu0 0
        %377 = vmatprep.subr.bf16.mxu0 0
        %378 = vmatpush1.bf16.msra.mxu0 0
        %379 = vmatprep.subr.bf16.mxu0 0
        %380 = vmatpush1.bf16.msra.mxu0 0
        %381 = vmatprep.subr.bf16.mxu0 0
        %382 = vmatpush1.bf16.msra.mxu0 0
        %383 = vmatprep.subr.bf16.mxu0 0
        %384 = vmatpush1.bf16.msra.mxu0 0
        %385 = vmatprep.subr.bf16.mxu0 0
        %386 = vmatpush1.bf16.msra.mxu0 0
        %387 = vmatprep.subr.bf16.mxu0 0
        %388 = vmatpush1.bf16.msra.mxu0 0
        %389 = vmatprep.subr.bf16.mxu0 0
        %390 = vmatpush1.bf16.msra.mxu0 0
        %391 = vmatprep.subr.bf16.mxu0 0
        %392 = vmatpush1.bf16.msra.mxu0 0
        %393 = vmatprep.subr.bf16.mxu0 0
        %394 = vmatpush1.bf16.msra.mxu0 0
        %395 = vmatprep.subr.bf16.mxu0 0
        %396 = vmatpush1.bf16.msra.mxu0 0
        %397 = vmatprep.subr.bf16.mxu0 0
        %398 = vmatpush1.bf16.msra.mxu0 0
        %399 = vmatprep.subr.bf16.mxu0 0
        %400 = vmatpush1.bf16.msra.mxu0 0
        %401 = vmatprep.subr.bf16.mxu0 0
        %402 = vmatpush1.bf16.msra.mxu0 0
        %403 = vmatprep.mubr.bf16.mxu0 0
        %404 = vmatmul.mubr.bf16.gmra.mrb[0].mxu0 %v369
        %v405 = vpop.f32.mrb[0].mxu0
        %v406 = vadd.f32 0.0, %v405
        %v407 = vpop.f32.mrb[0].mxu0
        %v408 = vpop.f32.mrb[0].mxu0
        %v409 = vpop.f32.mrb[0].mxu0
        %410 = vdwg.mxu0
        %v411 = vadd.f32 %v354, %v406
        %v412 = vld [vmem:[%s357] sm:$0x7]
        %s413 = scalar_lea.vmem %s1, 32
        %v414 = vld [vmem:[%s413] sm:$0xf]
        %v415 = vld [vmem:[%s413 + $0x4] sm:$0xf]
        %v417 = vunpack.c.l.b16 %v412
        %v418 = vpack.c.b16 %v417, %v417
        %v420 = vshrl.u32 %v418, 16
        %v422 = vshll.u32 %v418, 16
        %v424 = vrot.slane %v422, 1
        %v425 = vor.u32 %v420, %v424
        %v428 = vunpack.c.l.b16 %v414
        %v429 = vunpack.c.l.b16 %v415
        %v430 = vpack.c.b16 %v429, %v428
        %v433 = vsel %vm204, %v425, 0
        %435 = vmatprep.subr.bf16.mxu0 0
        %436 = vmatpush1.bf16.msra.mxu0 %v430
        %437 = vmatprep.subr.bf16.mxu0 0
        %438 = vmatpush1.bf16.msra.mxu0 0
        %439 = vmatprep.subr.bf16.mxu0 0
        %440 = vmatpush1.bf16.msra.mxu0 0
        %441 = vmatprep.subr.bf16.mxu0 0
        %442 = vmatpush1.bf16.msra.mxu0 0
        %443 = vmatprep.subr.bf16.mxu0 0
        %444 = vmatpush1.bf16.msra.mxu0 0
        %445 = vmatprep.subr.bf16.mxu0 0
        %446 = vmatpush1.bf16.msra.mxu0 0
        %447 = vmatprep.subr.bf16.mxu0 0
        %448 = vmatpush1.bf16.msra.mxu0 0
        %449 = vmatprep.subr.bf16.mxu0 0
        %450 = vmatpush1.bf16.msra.mxu0 0
        %451 = vmatprep.subr.bf16.mxu0 0
        %452 = vmatpush1.bf16.msra.mxu0 0
        %453 = vmatprep.subr.bf16.mxu0 0
        %454 = vmatpush1.bf16.msra.mxu0 0
        %455 = vmatprep.subr.bf16.mxu0 0
        %456 = vmatpush1.bf16.msra.mxu0 0
        %457 = vmatprep.subr.bf16.mxu0 0
        %458 = vmatpush1.bf16.msra.mxu0 0
        %459 = vmatprep.subr.bf16.mxu0 0
        %460 = vmatpush1.bf16.msra.mxu0 0
        %461 = vmatprep.subr.bf16.mxu0 0
        %462 = vmatpush1.bf16.msra.mxu0 0
        %463 = vmatprep.subr.bf16.mxu0 0
        %464 = vmatpush1.bf16.msra.mxu0 0
        %465 = vmatprep.subr.bf16.mxu0 0
        %466 = vmatpush1.bf16.msra.mxu0 0
        %467 = vmatprep.mubr.bf16.mxu0 0
        %468 = vmatmul.mubr.bf16.gmra.mrb[0].mxu0 %v433
        %v469 = vpop.f32.mrb[0].mxu0
        %v470 = vadd.f32 0.0, %v469
        %v471 = vpop.f32.mrb[0].mxu0
        %v472 = vpop.f32.mrb[0].mxu0
        %v473 = vpop.f32.mrb[0].mxu0
        %474 = vdwg.mxu0
        %v475 = vadd.f32 %v411, %v470
        %v476 = vld [vmem:[%s357] sm:$0x6]
        %s477 = scalar_lea.vmem %s1, 40
        %v478 = vld [vmem:[%s477] sm:$0xf]
        %v479 = vld [vmem:[%s477 + $0x4] sm:$0xf]
        %v481 = vunpack.c.l.b16 %v476
        %v482 = vpack.c.b16 %v481, %v481
        %v483 = vrot.slane %v482, 1
        %v486 = vunpack.c.l.b16 %v478
        %v487 = vunpack.c.l.b16 %v479
        %v488 = vpack.c.b16 %v487, %v486
        %v491 = vsel %vm204, %v483, 0
        %493 = vmatprep.subr.bf16.mxu0 0
        %494 = vmatpush1.bf16.msra.mxu0 %v488
        %495 = vmatprep.subr.bf16.mxu0 0
        %496 = vmatpush1.bf16.msra.mxu0 0
        %497 = vmatprep.subr.bf16.mxu0 0
        %498 = vmatpush1.bf16.msra.mxu0 0
        %499 = vmatprep.subr.bf16.mxu0 0
        %500 = vmatpush1.bf16.msra.mxu0 0
        %501 = vmatprep.subr.bf16.mxu0 0
        %502 = vmatpush1.bf16.msra.mxu0 0
        %503 = vmatprep.subr.bf16.mxu0 0
        %504 = vmatpush1.bf16.msra.mxu0 0
        %505 = vmatprep.subr.bf16.mxu0 0
        %506 = vmatpush1.bf16.msra.mxu0 0
        %507 = vmatprep.subr.bf16.mxu0 0
        %508 = vmatpush1.bf16.msra.mxu0 0
        %509 = vmatprep.subr.bf16.mxu0 0
        %510 = vmatpush1.bf16.msra.mxu0 0
        %511 = vmatprep.subr.bf16.mxu0 0
        %512 = vmatpush1.bf16.msra.mxu0 0
        %513 = vmatprep.subr.bf16.mxu0 0
        %514 = vmatpush1.bf16.msra.mxu0 0
        %515 = vmatprep.subr.bf16.mxu0 0
        %516 = vmatpush1.bf16.msra.mxu0 0
        %517 = vmatprep.subr.bf16.mxu0 0
        %518 = vmatpush1.bf16.msra.mxu0 0
        %519 = vmatprep.subr.bf16.mxu0 0
        %520 = vmatpush1.bf16.msra.mxu0 0
        %521 = vmatprep.subr.bf16.mxu0 0
        %522 = vmatpush1.bf16.msra.mxu0 0
        %523 = vmatprep.subr.bf16.mxu0 0
        %524 = vmatpush1.bf16.msra.mxu0 0
        %525 = vmatprep.mubr.bf16.mxu0 0
        %526 = vmatmul.mubr.bf16.gmra.mrb[0].mxu0 %v491
        %v527 = vpop.f32.mrb[0].mxu0
        %v528 = vadd.f32 0.0, %v527
        %v529 = vpop.f32.mrb[0].mxu0
        %v530 = vpop.f32.mrb[0].mxu0
        %v531 = vpop.f32.mrb[0].mxu0
        %532 = vdwg.mxu0
        %v533 = vadd.f32 %v475, %v528
        %s534 = sadd.s32 %s174, 2
        %s535 = smul.addr %s534, 4
        %s536 = scalar_lea.vmem %s165, %s535
        %v537 = vld [vmem:[%s536] sm:$0x3]
        %s538 = scalar_lea.vmem %s1, 48
        %v539 = vld [vmem:[%s538] sm:$0xf]
        %v540 = vld [vmem:[%s538 + $0x4] sm:$0xf]
        %v543 = vunpack.c.l.b16 %v539
        %v544 = vunpack.c.l.b16 %v540
        %v545 = vpack.c.b16 %v544, %v543
        %v548 = vsel %vm204, %v537, 0
        %550 = vmatprep.subr.bf16.mxu0 0
        %551 = vmatpush1.bf16.msra.mxu0 %v545
        %552 = vmatprep.subr.bf16.mxu0 0
        %553 = vmatpush1.bf16.msra.mxu0 0
        %554 = vmatprep.subr.bf16.mxu0 0
        %555 = vmatpush1.bf16.msra.mxu0 0
        %556 = vmatprep.subr.bf16.mxu0 0
        %557 = vmatpush1.bf16.msra.mxu0 0
        %558 = vmatprep.subr.bf16.mxu0 0
        %559 = vmatpush1.bf16.msra.mxu0 0
        %560 = vmatprep.subr.bf16.mxu0 0
        %561 = vmatpush1.bf16.msra.mxu0 0
        %562 = vmatprep.subr.bf16.mxu0 0
        %563 = vmatpush1.bf16.msra.mxu0 0
        %564 = vmatprep.subr.bf16.mxu0 0
        %565 = vmatpush1.bf16.msra.mxu0 0
        %566 = vmatprep.subr.bf16.mxu0 0
        %567 = vmatpush1.bf16.msra.mxu0 0
        %568 = vmatprep.subr.bf16.mxu0 0
        %569 = vmatpush1.bf16.msra.mxu0 0
        %570 = vmatprep.subr.bf16.mxu0 0
        %571 = vmatpush1.bf16.msra.mxu0 0
        %572 = vmatprep.subr.bf16.mxu0 0
        %573 = vmatpush1.bf16.msra.mxu0 0
        %574 = vmatprep.subr.bf16.mxu0 0
        %575 = vmatpush1.bf16.msra.mxu0 0
        %576 = vmatprep.subr.bf16.mxu0 0
        %577 = vmatpush1.bf16.msra.mxu0 0
        %578 = vmatprep.subr.bf16.mxu0 0
        %579 = vmatpush1.bf16.msra.mxu0 0
        %580 = vmatprep.subr.bf16.mxu0 0
        %581 = vmatpush1.bf16.msra.mxu0 0
        %582 = vmatprep.mubr.bf16.mxu0 0
        %583 = vmatmul.mubr.bf16.gmra.mrb[0].mxu0 %v548
        %v584 = vpop.f32.mrb[0].mxu0
        %v585 = vadd.f32 0.0, %v584
        %v586 = vpop.f32.mrb[0].mxu0
        %v587 = vpop.f32.mrb[0].mxu0
        %v588 = vpop.f32.mrb[0].mxu0
        %589 = vdwg.mxu0
        %v590 = vadd.f32 %v533, %v585
        %v591 = vld [vmem:[%s536] sm:$0x7]
        %s592 = scalar_lea.vmem %s1, 56
        %v593 = vld [vmem:[%s592] sm:$0xf]
        %v594 = vld [vmem:[%s592 + $0x4] sm:$0xf]
        %v596 = vunpack.c.l.b16 %v591
        %v597 = vpack.c.b16 %v596, %v596
        %v599 = vshrl.u32 %v597, 16
        %v601 = vshll.u32 %v597, 16
        %v603 = vrot.slane %v601, 1
        %v604 = vor.u32 %v599, %v603
        %v607 = vunpack.c.l.b16 %v593
        %v608 = vunpack.c.l.b16 %v594
        %v609 = vpack.c.b16 %v608, %v607
        %v612 = vsel %vm204, %v604, 0
        %614 = vmatprep.subr.bf16.mxu0 0
        %615 = vmatpush1.bf16.msra.mxu0 %v609
        %616 = vmatprep.subr.bf16.mxu0 0
        %617 = vmatpush1.bf16.msra.mxu0 0
        %618 = vmatprep.subr.bf16.mxu0 0
        %619 = vmatpush1.bf16.msra.mxu0 0
        %620 = vmatprep.subr.bf16.mxu0 0
        %621 = vmatpush1.bf16.msra.mxu0 0
        %622 = vmatprep.subr.bf16.mxu0 0
        %623 = vmatpush1.bf16.msra.mxu0 0
        %624 = vmatprep.subr.bf16.mxu0 0
        %625 = vmatpush1.bf16.msra.mxu0 0
        %626 = vmatprep.subr.bf16.mxu0 0
        %627 = vmatpush1.bf16.msra.mxu0 0
        %628 = vmatprep.subr.bf16.mxu0 0
        %629 = vmatpush1.bf16.msra.mxu0 0
        %630 = vmatprep.subr.bf16.mxu0 0
        %631 = vmatpush1.bf16.msra.mxu0 0
        %632 = vmatprep.subr.bf16.mxu0 0
        %633 = vmatpush1.bf16.msra.mxu0 0
        %634 = vmatprep.subr.bf16.mxu0 0
        %635 = vmatpush1.bf16.msra.mxu0 0
        %636 = vmatprep.subr.bf16.mxu0 0
        %637 = vmatpush1.bf16.msra.mxu0 0
        %638 = vmatprep.subr.bf16.mxu0 0
        %639 = vmatpush1.bf16.msra.mxu0 0
        %640 = vmatprep.subr.bf16.mxu0 0
        %641 = vmatpush1.bf16.msra.mxu0 0
        %642 = vmatprep.subr.bf16.mxu0 0
        %643 = vmatpush1.bf16.msra.mxu0 0
        %644 = vmatprep.subr.bf16.mxu0 0
        %645 = vmatpush1.bf16.msra.mxu0 0
        %646 = vmatprep.mubr.bf16.mxu0 0
        %647 = vmatmul.mubr.bf16.gmra.mrb[0].mxu0 %v612
        %v648 = vpop.f32.mrb[0].mxu0
        %v649 = vadd.f32 0.0, %v648
        %v650 = vpop.f32.mrb[0].mxu0
        %v651 = vpop.f32.mrb[0].mxu0
        %v652 = vpop.f32.mrb[0].mxu0
        %653 = vdwg.mxu0
        %v654 = vadd.f32 %v590, %v649
        %v655 = vld [vmem:[%s536] sm:$0x6]
        %s656 = scalar_lea.vmem %s1, 64
        %v657 = vld [vmem:[%s656] sm:$0xf]
        %v658 = vld [vmem:[%s656 + $0x4] sm:$0xf]
        %v660 = vunpack.c.l.b16 %v655
        %v661 = vpack.c.b16 %v660, %v660
        %v662 = vrot.slane %v661, 1
        %v665 = vunpack.c.l.b16 %v657
        %v666 = vunpack.c.l.b16 %v658
        %v667 = vpack.c.b16 %v666, %v665
        %v670 = vsel %vm204, %v662, 0
        %672 = vmatprep.subr.bf16.mxu0 0
        %673 = vmatpush1.bf16.msra.mxu0 %v667
        %674 = vmatprep.subr.bf16.mxu0 0
        %675 = vmatpush1.bf16.msra.mxu0 0
        %676 = vmatprep.subr.bf16.mxu0 0
        %677 = vmatpush1.bf16.msra.mxu0 0
        %678 = vmatprep.subr.bf16.mxu0 0
        %679 = vmatpush1.bf16.msra.mxu0 0
        %680 = vmatprep.subr.bf16.mxu0 0
        %681 = vmatpush1.bf16.msra.mxu0 0
        %682 = vmatprep.subr.bf16.mxu0 0
        %683 = vmatpush1.bf16.msra.mxu0 0
        %684 = vmatprep.subr.bf16.mxu0 0
        %685 = vmatpush1.bf16.msra.mxu0 0
        %686 = vmatprep.subr.bf16.mxu0 0
        %687 = vmatpush1.bf16.msra.mxu0 0
        %688 = vmatprep.subr.bf16.mxu0 0
        %689 = vmatpush1.bf16.msra.mxu0 0
        %690 = vmatprep.subr.bf16.mxu0 0
        %691 = vmatpush1.bf16.msra.mxu0 0
        %692 = vmatprep.subr.bf16.mxu0 0
        %693 = vmatpush1.bf16.msra.mxu0 0
        %694 = vmatprep.subr.bf16.mxu0 0
        %695 = vmatpush1.bf16.msra.mxu0 0
        %696 = vmatprep.subr.bf16.mxu0 0
        %697 = vmatpush1.bf16.msra.mxu0 0
        %698 = vmatprep.subr.bf16.mxu0 0
        %699 = vmatpush1.bf16.msra.mxu0 0
        %700 = vmatprep.subr.bf16.mxu0 0
        %701 = vmatpush1.bf16.msra.mxu0 0
        %702 = vmatprep.subr.bf16.mxu0 0
        %703 = vmatpush1.bf16.msra.mxu0 0
        %704 = vmatprep.mubr.bf16.mxu0 0
        %705 = vmatmul.mubr.bf16.gmra.mrb[0].mxu0 %v670
        %v706 = vpop.f32.mrb[0].mxu0
        %v707 = vadd.f32 0.0, %v706
        %v708 = vpop.f32.mrb[0].mxu0
        %v709 = vpop.f32.mrb[0].mxu0
        %v710 = vpop.f32.mrb[0].mxu0
        %711 = vdwg.mxu0
        %v712 = vadd.f32 %v654, %v707
        %v714 = vlaneseq
        %v715 = vshrl.u32 %v714, 7
        %v716 = vsub.s32 0, %v715
        %v717 = vrot.slane %v172, %v716
        %v719 = vadd.f32 %v712, %v717
        %v720 = vmul.f32 %v719, 0.5
        %v721 = vmul.f32 %v719, 0.044715
        %v722 = vmul.f32 %v721, %v719
        %v723 = vmul.f32 %v722, %v719
        %v724 = vadd.f32 %v719, %v723
        %v725 = vmul.f32 %v724, 0.7978846
        %v726 = vtanh.pop %v725
        %v727 = vadd.f32 %v726, 1.0
        %v728 = vmul.f32 %v720, %v727
        %v729 = vpack.c.bf16 %v728, %v728
        %s730 = smul.addr %s174, 2
        %s731 = scalar_lea.vmem %s170, %s730
        %vm732 = vcmask 123904
        %733 = vst.msk [vmem:[%s731] sm:$0x3] %vm732, %v729
      $region37: #{deep_encoder.9} parent=31 // loop_footer
        %s178 = sadd.s32 1, %s174
      $region38: #{deep_encoder.9} parent=31 // loop_footer_branch
        %173 = sbr.rel target = $region34
      $region39: #{deep_encoder.9} parent=31 // loop_exit
        _
      %p734 = scmp.lt.s32.totalorder %s14, 1
      %s735 = scalar_select %p734, %s14, 1
      %s736 = smul.addr %s735, 4
      %s737 = smul.addr %s736, 2
      %s738 = scalar_lea.vmem %s3, %s737
      // Predicated region
      $region40: #{deep_encoder.9} parent=31 // pred_check
        %p739 = pneg %p100
      $region41: #{deep_encoder.9} parent=31 // pred_check_branch
        %741 = sbr.rel (%p739) target = $region43
      $region42: #{deep_encoder.9} parent=31 // pred_region
        _
      $region43: #{deep_encoder.9} parent=31 // pred_fallthru
        _
    $region32: #{deep_encoder.9} parent=5 // pred_fallthru
      _
    %p742 = scmp.le.s32.totalorder 2, %s9
    // Predicated region
    $region44: #{deep_encoder.9} parent=5 // pred_check
      %p743 = pneg %p742
    $region45: #{deep_encoder.9} parent=5 // pred_check_branch
      %745 = sbr.rel (%p743) target = $region47
    $region46: #{deep_encoder.9} parent=5 // pred_region
      %s746 = ssub.s32 %s9, 2
      // Predicated region
      $region48: #{deep_encoder.9} parent=46 // pred_check
        %p747 = pneg %p106
      $region49: #{deep_encoder.9} parent=46 // pred_check_branch
        %749 = sbr.rel (%p747) target = $region51
      $region50: #{deep_encoder.9} parent=46 // pred_region
        %p750 = scmp.lt.s32.totalorder %s15, 1
        %s751 = scalar_select %p750, %s15, 1
        %s752 = smul.addr %s751, 4
        %s753 = smul.addr %s752, 2
        %s754 = scalar_lea.vmem %s3, %s753
      $region51: #{deep_encoder.9} parent=46 // pred_fallthru
        _
    $region47: #{deep_encoder.9} parent=5 // pred_fallthru
      _
  $region6: #{deep_encoder.9} parent=0 // loop_footer
    %s13 = sadd.s32 1, %s9
  $region7: #{deep_encoder.9} parent=0 // loop_footer_branch
    %8 = sbr.rel target = $region3
  $region8: #{deep_encoder.9} parent=0 // loop_exit
    _

// kernel: deep_encoder.11
$region0: #{deep_encoder.11}
  #allocation0 [shape = 'u32[]', space=smem, size = 0x4, offset = 0x4, fixed_abs, tag = 'smem constant byte address 0x4 - core index']
  #allocation1 [shape = 'u32[144,128]{1,0:T(1,128)}', space=vmem, size = 0x12000, scoped, tag = 'internal scratch']
  %s0 = inlined_call_operand.vmem [shape: bf16[2,64], index: 0, kind: input, shape index: {}]
  %s1 = inlined_call_operand.vmem [shape: bf16[64,32], index: 1, kind: input, shape index: {}]
  %s2 = inlined_call_operand.vmem [shape: f32[1,32], index: 2, kind: input, shape index: {}]
  %s3 = inlined_call_operand.hbm [shape: f32[2,32], index: 3, kind: output, shape index: {}]
  %s4 = sld [smem:[#allocation0]]
  $region22: #{deep_encoder.11} parent=0
    _
  %s6 = ssub.s32 1, %s4
  %s7 = scalar_select 0, %s6, %s4
  $region1: #{deep_encoder.11} parent=0
    #allocation2 [shape = 'u8[1024]{0}', space=vmem, size = 0x400, scoped, tag = 'output window, operand 0, single buffered']
    #allocation3 [shape = 's32[1]{0}', space=sflag, size = 0x4, scoped, tag = 'scoped memory for deep_encoder.11']
    %8 = vsyncpa [#allocation3], 0
    // Predicated region
    $region2: #{deep_encoder.11} parent=1 // pred_check
      _
    $region3: #{deep_encoder.11} parent=1 // pred_check_branch
      %10 = sbr.rel (0) target = $region5
    $region4: #{deep_encoder.11} parent=1 // pred_region
      _
    $region5: #{deep_encoder.11} parent=1 // pred_fallthru
      _
    // Predicated region
    $region6: #{deep_encoder.11} parent=1 // pred_check
      _
    $region7: #{deep_encoder.11} parent=1 // pred_check_branch
      %12 = sbr.rel (0) target = $region9
    $region8: #{deep_encoder.11} parent=1 // pred_region
      _
    $region9: #{deep_encoder.11} parent=1 // pred_fallthru
      _
    // Predicated region
    $region10: #{deep_encoder.11} parent=1 // pred_check
      _
    $region11: #{deep_encoder.11} parent=1 // pred_check_branch
      %14 = sbr.rel (0) target = $region13
    $region12: #{deep_encoder.11} parent=1 // pred_region
      _
    $region13: #{deep_encoder.11} parent=1 // pred_fallthru
      _
    %v16 = vld [vmem:[%s2] sm:$0x1]
    %v17 = vld [vmem:[%s0] sm:$0x1]
    %v18 = vld [vmem:[%s1] sm:$0xf]
    %v19 = vld [vmem:[%s1 + $0x4] sm:$0xf]
    %v20 = vld [vmem:[%s1 + $0x8] sm:$0xf]
    %v21 = vld [vmem:[%s1 + $0xc] sm:$0xf]
    %v22 = vld [vmem:[%s1 + $0x10] sm:$0xf]
    %v23 = vld [vmem:[%s1 + $0x14] sm:$0xf]
    %v24 = vld [vmem:[%s1 + $0x18] sm:$0xf]
    %v25 = vld [vmem:[%s1 + $0x1c] sm:$0xf]
    %v34 = vunpack.c.l.b16 %v18
    %v35 = vunpack.c.l.b16 %v19
    %v36 = vunpack.c.l.b16 %v20
    %v37 = vunpack.c.l.b16 %v21
    %v38 = vunpack.c.l.b16 %v22
    %v39 = vunpack.c.l.b16 %v23
    %v40 = vunpack.c.l.b16 %v24
    %v41 = vunpack.c.l.b16 %v25
    %v42 = vpack.c.b16 %v35, %v34
    %v43 = vpack.c.b16 %v37, %v36
    %v44 = vpack.c.b16 %v39, %v38
    %v45 = vpack.c.b16 %v41, %v40
    %vm50 = vcmask 523264
    %v52 = vsel %vm50, %v17, 0
    %54 = vmatprep.subr.bf16.mxu0 0
    %55 = vmatpush1.bf16.msra.mxu0 %v42
    %56 = vmatprep.subr.bf16.mxu0 0
    %57 = vmatpush1.bf16.msra.mxu0 %v43
    %58 = vmatprep.subr.bf16.mxu0 0
    %59 = vmatpush1.bf16.msra.mxu0 %v44
    %60 = vmatprep.subr.bf16.mxu0 0
    %61 = vmatpush1.bf16.msra.mxu0 %v45
    %62 = vmatprep.subr.bf16.mxu0 0
    %63 = vmatpush1.bf16.msra.mxu0 0
    %64 = vmatprep.subr.bf16.mxu0 0
    %65 = vmatpush1.bf16.msra.mxu0 0
    %66 = vmatprep.subr.bf16.mxu0 0
    %67 = vmatpush1.bf16.msra.mxu0 0
    %68 = vmatprep.subr.bf16.mxu0 0
    %69 = vmatpush1.bf16.msra.mxu0 0
    %70 = vmatprep.subr.bf16.mxu0 0
    %71 = vmatpush1.bf16.msra.mxu0 0
    %72 = vmatprep.subr.bf16.mxu0 0
    %73 = vmatpush1.bf16.msra.mxu0 0
    %74 = vmatprep.subr.bf16.mxu0 0
    %75 = vmatpush1.bf16.msra.mxu0 0
    %76 = vmatprep.subr.bf16.mxu0 0
    %77 = vmatpush1.bf16.msra.mxu0 0
    %78 = vmatprep.subr.bf16.mxu0 0
    %79 = vmatpush1.bf16.msra.mxu0 0
    %80 = vmatprep.subr.bf16.mxu0 0
    %81 = vmatpush1.bf16.msra.mxu0 0
    %82 = vmatprep.subr.bf16.mxu0 0
    %83 = vmatpush1.bf16.msra.mxu0 0
    %84 = vmatprep.subr.bf16.mxu0 0
    %85 = vmatpush1.bf16.msra.mxu0 0
    %86 = vmatprep.mubr.bf16.mxu0 0
    %87 = vmatmul.mubr.bf16.gmra.mrb[0].mxu0 %v52
    %v88 = vpop.f32.mrb[0].mxu0
    %v89 = vadd.f32 0.0, %v88
    %v90 = vpop.f32.mrb[0].mxu0
    %v91 = vpop.f32.mrb[0].mxu0
    %v92 = vpop.f32.mrb[0].mxu0
    %93 = vdwg.mxu0
    %v95 = vlaneseq
    %v96 = vshrl.u32 %v95, 7
    %v97 = vsub.s32 0, %v96
    %v98 = vrot.slane %v16, %v97
    %v100 = vadd.f32 %v98, %v89
    %vm101 = vcmask 254976
    %102 = vst.msk [vmem:[#allocation2] sm:$0x3] %vm101, %v100
    // Predicated region
    $region14: #{deep_encoder.11} parent=1 // pred_check
      _
    $region15: #{deep_encoder.11} parent=1 // pred_check_branch
      %104 = sbr.rel (0) target = $region17
    $region16: #{deep_encoder.11} parent=1 // pred_region
      %s106 = ssub.s32 32, 32
      %107 = vsyncadd [#allocation3], %s106
      %s109 = sshll.u32 [#allocation2], 4
      %s110 = int_to_ptr.vmem [resolvable:$true] %s109
      %112 = dma.vmem_to_hbm [thread:$0]  %s110, 32, %s3, [#allocation3]
    $region17: #{deep_encoder.11} parent=1 // pred_fallthru
      _
    // Predicated region
    $region18: #{deep_encoder.11} parent=1 // pred_check
      _
    $region19: #{deep_encoder.11} parent=1 // pred_check_branch
      %114 = sbr.rel (0) target = $region21
    $region20: #{deep_encoder.11} parent=1 // pred_region
      %115 = dma.done [#allocation3], 32
    $region21: #{deep_encoder.11} parent=1 // pred_fallthru
      _
    %116 = vsyncpa [#allocation3], 1

// kernel: deep_encoder.10
$region0: #{deep_encoder.10}
  #allocation0 [shape = 'u32[]', space=smem, size = 0x4, offset = 0x4, fixed_abs, tag = 'smem constant byte address 0x4 - core index']
  #allocation1 [shape = 'u32[144,128]{1,0:T(1,128)}', space=vmem, size = 0x12000, scoped, tag = 'internal scratch']
  %s0 = inlined_call_operand.vmem [shape: bf16[2,6,3,16], index: 0, kind: input, shape index: {}]
  %s1 = inlined_call_operand.vmem [shape: bf16[2,6,3,16], index: 1, kind: input, shape index: {}]
  %s2 = inlined_call_operand.vmem [shape: bf16[9,16,16], index: 2, kind: input, shape index: {}]
  %s3 = inlined_call_operand.vmem [shape: f32[1,16], index: 3, kind: input, shape index: {}]
  %s4 = inlined_call_operand.vmem [shape: bf16[2,2,2,16], index: 4, kind: output, shape index: {}]
  %s5 = sld [smem:[#allocation0]]
  $region56: #{deep_encoder.10} parent=0
    _
  %s7 = ssub.s32 1, %s5
  %s8 = scalar_select 0, %s7, %s5
  loop: start=0, step=1, limit=4
  $region2: #{deep_encoder.10} parent=0 // loop_pre_header
    _
  $region3: #{deep_encoder.10} parent=0 // loop_header
    %s10 = sphi 0, %s14
    %p11 = scmp.ge.s32.totalorder %s10, 4
    %s20 = sphi 0, %s22
    %s23 = sphi 0, %s20
    %s24 = sphi 0, %s23
    %s40 = sphi 0, %s24
    %s46 = sphi 0, %s48
    %s49 = sphi 0, %s46
    %s50 = sphi 0, %s49
    %s66 = sphi 0, %s50
    %s70 = sphi 0, %s70
    %s72 = sphi 0, %s70
    %s73 = sphi 0, %s72
    %s87 = sphi 0, %s73
    %s91 = sphi 0, %s91
    %s93 = sphi 0, %s91
    %s94 = sphi 0, %s93
    %s108 = sphi 0, %s94
    %s114 = sphi 0, %s116
    %s117 = sphi 0, %s114
    %s118 = sphi 0, %s117
    %s134 = sphi 0, %s118
  $region4: #{deep_encoder.10} parent=0 // loop_header_branch
    %13 = sbr.rel (%p11) target = $region8
  $region5: #{deep_encoder.10} parent=0 // loop_body
    %s15 = ssub.s32 %s10, 1
    %s16 = ssub.s32 %s10, 2
    %s17 = sadd.s32 %s10, 1
    %s18 = ssub.s32 %s10, %s17
    %p19 = scmp.eq.s32.totalorder %s18, 0
    %s21 = sadd.s32 %s20, 1
    %s22 = scalar_select %p19, %s20, %s21
    %p25 = pneg %p19
    %p26 = scmp.eq.s32.totalorder %s10, 1
    %p27 = por %p25, %p26
    %p28 = scmp.ne.s32.totalorder %s20, %s23
    %p29 = scmp.eq.s32.totalorder %s10, 0
    %p30 = por %p28, %p29
    %p31 = scmp.ne.s32.totalorder %s20, %s23
    %p32 = scmp.eq.s32.totalorder %s15, 1
    %p33 = por %p31, %p32
    %p34 = scmp.ne.s32.totalorder %s23, %s24
    %p35 = scmp.eq.s32.totalorder %s15, 0
    %p36 = por %p34, %p35
    %p37 = scmp.ne.s32.totalorder %s23, %s24
    %p38 = scmp.eq.s32.totalorder %s16, 1
    %p39 = por %p37, %p38
    %p41 = scmp.ne.s32.totalorder %s24, %s40
    %p42 = scmp.eq.s32.totalorder %s16, 0
    %p43 = por %p41, %p42
    %s44 = ssub.s32 %s10, %s17
    %p45 = scmp.eq.s32.totalorder %s44, 0
    %s47 = sadd.s32 %s46, 1
    %s48 = scalar_select %p45, %s46, %s47
    %p51 = pneg %p45
    %p52 = scmp.eq.s32.totalorder %s10, 1
    %p53 = por %p51, %p52
    %p54 = scmp.ne.s32.totalorder %s46, %s49
    %p55 = scmp.eq.s32.totalorder %s10, 0
    %p56 = por %p54, %p55
    %p57 = scmp.ne.s32.totalorder %s46, %s49
    %p58 = scmp.eq.s32.totalorder %s15, 1
    %p59 = por %p57, %p58
    %p60 = scmp.ne.s32.totalorder %s49, %s50
    %p61 = scmp.eq.s32.totalorder %s15, 0
    %p62 = por %p60, %p61
    %p63 = scmp.ne.s32.totalorder %s49, %s50
    %p64 = scmp.eq.s32.totalorder %s16, 1
    %p65 = por %p63, %p64
    %p67 = scmp.ne.s32.totalorder %s50, %s66
    %p68 = scmp.eq.s32.totalorder %s16, 0
    %p69 = por %p67, %p68
    %s71 = sadd.s32 %s70, 1
    %p74 = scmp.eq.s32.totalorder %s10, 1
    %p75 = scmp.ne.s32.totalorder %s70, %s72
    %p76 = scmp.eq.s32.totalorder %s10, 0
    %p77 = por %p75, %p76
    %p78 = scmp.ne.s32.totalorder %s70, %s72
    %p79 = scmp.eq.s32.totalorder %s15, 1
    %p80 = por %p78, %p79
    %p81 = scmp.ne.s32.totalorder %s72, %s73
    %p82 = scmp.eq.s32.totalorder %s15, 0
    %p83 = por %p81, %p82
    %p84 = scmp.ne.s32.totalorder %s72, %s73
    %p85 = scmp.eq.s32.totalorder %s16, 1
    %p86 = por %p84, %p85
    %p88 = scmp.ne.s32.totalorder %s73, %s87
    %p89 = scmp.eq.s32.totalorder %s16, 0
    %p90 = por %p88, %p89
    %s92 = sadd.s32 %s91, 1
    %p95 = scmp.eq.s32.totalorder %s10, 1
    %p96 = scmp.ne.s32.totalorder %s91, %s93
    %p97 = scmp.eq.s32.totalorder %s10, 0
    %p98 = por %p96, %p97
    %p99 = scmp.ne.s32.totalorder %s91, %s93
    %p100 = scmp.eq.s32.totalorder %s15, 1
    %p101 = por %p99, %p100
    %p102 = scmp.ne.s32.totalorder %s93, %s94
    %p103 = scmp.eq.s32.totalorder %s15, 0
    %p104 = por %p102, %p103
    %p105 = scmp.ne.s32.totalorder %s93, %s94
    %p106 = scmp.eq.s32.totalorder %s16, 1
    %p107 = por %p105, %p106
    %p109 = scmp.ne.s32.totalorder %s94, %s108
    %p110 = scmp.eq.s32.totalorder %s16, 0
    %p111 = por %p109, %p110
    %s112 = ssub.s32 %s10, %s17
    %p113 = scmp.eq.s32.totalorder %s112, 0
    %s115 = sadd.s32 %s114, 1
    %s116 = scalar_select %p113, %s114, %s115
    %p119 = pneg %p113
    %p120 = scmp.eq.s32.totalorder %s10, 1
    %p121 = por %p119, %p120
    %p122 = scmp.ne.s32.totalorder %s114, %s117
    %p123 = scmp.eq.s32.totalorder %s10, 0
    %p124 = por %p122, %p123
    %p125 = scmp.ne.s32.totalorder %s114, %s117
    %p126 = scmp.eq.s32.totalorder %s15, 1
    %p127 = por %p125, %p126
    %p128 = scmp.ne.s32.totalorder %s117, %s118
    %p129 = scmp.eq.s32.totalorder %s15, 0
    %p130 = por %p128, %p129
    %p131 = scmp.ne.s32.totalorder %s117, %s118
    %p132 = scmp.eq.s32.totalorder %s16, 1
    %p133 = por %p131, %p132
    %p135 = scmp.ne.s32.totalorder %s118, %s134
    %p136 = scmp.eq.s32.totalorder %s16, 0
    %p137 = por %p135, %p136
    %p138 = scmp.le.s32.totalorder 1, %s10
    %p139 = scmp.lt.s32.totalorder %s10, 3
    %p140 = pnand %p138, %p139
    %p141 = pneg %p140
    // Predicated region
    $region9: #{deep_encoder.10} parent=5 // pred_check
      _
    $region10: #{deep_encoder.10} parent=5 // pred_check_branch
      %143 = sbr.rel (%p140) target = $region12
    $region11: #{deep_encoder.10} parent=5 // pred_region
      %s144 = ssub.s32 %s10, 1
      // Predicated region
      $region13: #{deep_encoder.10} parent=11 // pred_check
        %p145 = pneg %p83
      $region14: #{deep_encoder.10} parent=11 // pred_check_branch
        %147 = sbr.rel (%p145) target = $region16
      $region15: #{deep_encoder.10} parent=11 // pred_region
        _
      $region16: #{deep_encoder.10} parent=11 // pred_fallthru
        _
      // Predicated region
      $region17: #{deep_encoder.10} parent=11 // pred_check
        %p148 = pneg %p104
      $region18: #{deep_encoder.10} parent=11 // pred_check_branch
        %150 = sbr.rel (%p148) target = $region20
      $region19: #{deep_encoder.10} parent=11 // pred_region
        _
      $region20: #{deep_encoder.10} parent=11 // pred_fallthru
        _
    $region12: #{deep_encoder.10} parent=5 // pred_fallthru
      _
    %p151 = scmp.lt.s32.totalorder %s10, 2
    // Predicated region
    $region21: #{deep_encoder.10} parent=5 // pred_check
      %p152 = pneg %p151
    $region22: #{deep_encoder.10} parent=5 // pred_check_branch
      %154 = sbr.rel (%p152) target = $region24
    $region23: #{deep_encoder.10} parent=5 // pred_region
      // Predicated region
      $region25: #{deep_encoder.10} parent=23 // pred_check
        %p155 = pneg %p30
      $region26: #{deep_encoder.10} parent=23 // pred_check_branch
        %157 = sbr.rel (%p155) target = $region28
      $region27: #{deep_encoder.10} parent=23 // pred_region
        %p158 = scmp.lt.s32.totalorder %s10, 1
        %s159 = scalar_select %p158, %s10, 1
        %s160 = smul.addr %s159, 6
        %s161 = smul.addr %s160, 2
        %s162 = scalar_lea.vmem %s0, %s161
      $region28: #{deep_encoder.10} parent=23 // pred_fallthru
        _
      // Predicated region
      $region29: #{deep_encoder.10} parent=23 // pred_check
        %p163 = pneg %p56
      $region30: #{deep_encoder.10} parent=23 // pred_check_branch
        %165 = sbr.rel (%p163) target = $region32
      $region31: #{deep_encoder.10} parent=23 // pred_region
        %p166 = scmp.lt.s32.totalorder %s10, 1
        %s167 = scalar_select %p166, %s10, 1
        %s168 = smul.addr %s167, 6
        %s169 = smul.addr %s168, 2
        %s170 = scalar_lea.vmem %s1, %s169
      $region32: #{deep_encoder.10} parent=23 // pred_fallthru
        _
    $region24: #{deep_encoder.10} parent=5 // pred_fallthru
      _
    %p171 = scmp.le.s32.totalorder 1, %s10
    %p172 = scmp.lt.s32.totalorder %s10, 3
    %p173 = pnand %p171, %p172
    %p174 = pneg %p173
    // Predicated region
    $region33: #{deep_encoder.10} parent=5 // pred_check
      _
    $region34: #{deep_encoder.10} parent=5 // pred_check_branch
      %176 = sbr.rel (%p173) target = $region36
    $region35: #{deep_encoder.10} parent=5 // pred_region
      %s177 = ssub.s32 %s10, 1
      %p178 = scmp.lt.s32.totalorder %s15, 1
      %s179 = scalar_select %p178, %s15, 1
      %s180 = smul.addr %s179, 6
      %s181 = smul.addr %s180, 2
      %s182 = scalar_lea.vmem %s0, %s181
      %p183 = pneg %p36
      %p184 = pneg %p33
      %p185 = scmp.lt.s32.totalorder %s15, 1
      %s186 = scalar_select %p185, %s15, 1
      %s187 = smul.addr %s186, 6
      %s188 = smul.addr %s187, 2
      %s189 = scalar_lea.vmem %s1, %s188
      %p190 = pneg %p62
      %p191 = pneg %p59
      %p192 = pneg %p83
      %p193 = pneg %p80
      %p194 = pneg %p104
      %p195 = pneg %p101
      %p196 = pneg %p130
      %p197 = pneg %p127
      %p198 = scmp.lt.s32.totalorder %s15, 1
      %s199 = scalar_select %p198, %s15, 1
      %s200 = smul.addr %s199, 2
      %s201 = scalar_lea.vmem %s4, %s200
      %p202 = scmp.lt.s32.totalorder %s15, 1
      %s203 = scalar_select %p202, %s15, 1
      %s204 = smul.addr %s203, 6
      %s205 = smul.addr %s204, 2
      %s206 = scalar_lea.vmem %s0, %s205
      %p207 = scmp.lt.s32.totalorder %s15, 1
      %s208 = scalar_select %p207, %s15, 1
      %s209 = smul.addr %s208, 6
      %s210 = smul.addr %s209, 2
      %s211 = scalar_lea.vmem %s1, %s210
      %p212 = scmp.lt.s32.totalorder %s15, 1
      %s213 = scalar_select %p212, %s15, 1
      %s214 = smul.addr %s213, 2
      %s215 = scalar_lea.vmem %s4, %s214
      %v217 = vld [vmem:[%s3] sm:$0x1]
      loop: start=0, step=1, limit=2
      $region37: #{deep_encoder.10} parent=35 // loop_pre_header
        _
      $region38: #{deep_encoder.10} parent=35 // loop_header
        %s219 = sphi 0, %s223
        %p220 = scmp.ge.s32.totalorder %s219, 2
      $region39: #{deep_encoder.10} parent=35 // loop_header_branch
        %222 = sbr.rel (%p220) target = $region43
      $region40: #{deep_encoder.10} parent=35 // loop_body
        %s224 = smul.u32 %s219, 2
        %s225 = smul.addr %s224, 2
        %s226 = scalar_lea.vmem %s206, %s225
        %v227 = vld [vmem:[%s226] sm:$0x1]
        %v228 = vld [vmem:[%s2] sm:$0xf]
        %v229 = vld [vmem:[%s2 + $0x4] sm:$0xf]
        %s230 = smul.addr %s224, 2
        %s231 = scalar_lea.vmem %s211, %s230
        %v232 = vld [vmem:[%s231] sm:$0x1]
        %s233 = scalar_lea.vmem %s2, 8
        %v234 = vld [vmem:[%s233] sm:$0xf]
        %v235 = vld [vmem:[%s233 + $0x4] sm:$0xf]
        %v238 = vunpack.c.l.b16 %v234
        %v239 = vunpack.c.l.b16 %v235
        %v240 = vpack.c.b16 %v239, %v238
        %vm242 = vcmask 130048
        %v244 = vsel %vm242, %v232, 0
        %246 = vmatprep.subr.bf16.mxu0 0
        %247 = vmatpush1.bf16.msra.mxu0 %v240
        %248 = vmatprep.subr.bf16.mxu0 0
        %249 = vmatpush1.bf16.msra.mxu0 0
        %250 = vmatprep.subr.bf16.mxu0 0
        %251 = vmatpush1.bf16.msra.mxu0 0
        %252 = vmatprep.subr.bf16.mxu0 0
        %253 = vmatpush1.bf16.msra.mxu0 0
        %254 = vmatprep.subr.bf16.mxu0 0
        %255 = vmatpush1.bf16.msra.mxu0 0
        %256 = vmatprep.subr.bf16.mxu0 0
        %257 = vmatpush1.bf16.msra.mxu0 0
        %258 = vmatprep.subr.bf16.mxu0 0
        %259 = vmatpush1.bf16.msra.mxu0 0
        %260 = vmatprep.subr.bf16.mxu0 0
        %261 = vmatpush1.bf16.msra.mxu0 0
        %262 = vmatprep.subr.bf16.mxu0 0
        %263 = vmatpush1.bf16.msra.mxu0 0
        %264 = vmatprep.subr.bf16.mxu0 0
        %265 = vmatpush1.bf16.msra.mxu0 0
        %266 = vmatprep.subr.bf16.mxu0 0
        %267 = vmatpush1.bf16.msra.mxu0 0
        %268 = vmatprep.subr.bf16.mxu0 0
        %269 = vmatpush1.bf16.msra.mxu0 0
        %270 = vmatprep.subr.bf16.mxu0 0
        %271 = vmatpush1.bf16.msra.mxu0 0
        %272 = vmatprep.subr.bf16.mxu0 0
        %273 = vmatpush1.bf16.msra.mxu0 0
        %274 = vmatprep.subr.bf16.mxu0 0
        %275 = vmatpush1.bf16.msra.mxu0 0
        %276 = vmatprep.subr.bf16.mxu0 0
        %277 = vmatpush1.bf16.msra.mxu0 0
        %278 = vmatprep.mubr.bf16.mxu0 0
        %279 = vmatmul.mubr.bf16.gmra.mrb[0].mxu0 %v244
        %v280 = vpop.f32.mrb[0].mxu0
        %v281 = vadd.f32 0.0, %v280
        %v282 = vpop.f32.mrb[0].mxu0
        %v283 = vpop.f32.mrb[0].mxu0
        %v284 = vpop.f32.mrb[0].mxu0
        %285 = vdwg.mxu0
        %v288 = vunpack.c.l.b16 %v228
        %v289 = vunpack.c.l.b16 %v229
        %v290 = vpack.c.b16 %v289, %v288
        %v293 = vsel %vm242, %v227, 0
        %295 = vmatprep.subr.bf16.mxu0 0
        %296 = vmatpush1.bf16.msra.mxu0 %v290
        %297 = vmatprep.subr.bf16.mxu0 0
        %298 = vmatpush1.bf16.msra.mxu0 0
        %299 = vmatprep.subr.bf16.mxu0 0
        %300 = vmatpush1.bf16.msra.mxu0 0
        %301 = vmatprep.subr.bf16.mxu0 0
        %302 = vmatpush1.bf16.msra.mxu0 0
        %303 = vmatprep.subr.bf16.mxu0 0
        %304 = vmatpush1.bf16.msra.mxu0 0
        %305 = vmatprep.subr.bf16.mxu0 0
        %306 = vmatpush1.bf16.msra.mxu0 0
        %307 = vmatprep.subr.bf16.mxu0 0
        %308 = vmatpush1.bf16.msra.mxu0 0
        %309 = vmatprep.subr.bf16.mxu0 0
        %310 = vmatpush1.bf16.msra.mxu0 0
        %311 = vmatprep.subr.bf16.mxu0 0
        %312 = vmatpush1.bf16.msra.mxu0 0
        %313 = vmatprep.subr.bf16.mxu0 0
        %314 = vmatpush1.bf16.msra.mxu0 0
        %315 = vmatprep.subr.bf16.mxu0 0
        %316 = vmatpush1.bf16.msra.mxu0 0
        %317 = vmatprep.subr.bf16.mxu0 0
        %318 = vmatpush1.bf16.msra.mxu0 0
        %319 = vmatprep.subr.bf16.mxu0 0
        %320 = vmatpush1.bf16.msra.mxu0 0
        %321 = vmatprep.subr.bf16.mxu0 0
        %322 = vmatpush1.bf16.msra.mxu0 0
        %323 = vmatprep.subr.bf16.mxu0 0
        %324 = vmatpush1.bf16.msra.mxu0 0
        %325 = vmatprep.subr.bf16.mxu0 0
        %326 = vmatpush1.bf16.msra.mxu0 0
        %327 = vmatprep.mubr.bf16.mxu0 0
        %328 = vmatmul.mubr.bf16.gmra.mrb[0].mxu0 %v293
        %v329 = vpop.f32.mrb[0].mxu0
        %v330 = vadd.f32 %v281, %v329
        %v331 = vpop.f32.mrb[0].mxu0
        %v332 = vpop.f32.mrb[0].mxu0
        %v333 = vpop.f32.mrb[0].mxu0
        %334 = vdwg.mxu0
        %v335 = vld [vmem:[%s226] sm:$0x3]
        %s336 = scalar_lea.vmem %s2, 16
        %v337 = vld [vmem:[%s336] sm:$0xf]
        %v338 = vld [vmem:[%s336 + $0x4] sm:$0xf]
        %v341 = vunpack.c.l.s4 1983009808
        %v342 = vunpack.c.0.s8 %v341
        %v343 = vlaneseq
        %v344 = vshrl.u32 %v343, 7
        %v345 = vsub.s32 %v342, %v344
        %v346 = vrot.slane %v335, %v345
        %v348 = vshrl.u32 %v346, 16
        %v350 = vshll.u32 %v346, 16
        %v352 = vrot.slane %v350, 1
        %v353 = vor.u32 %v348, %v352
        %v356 = vunpack.c.l.b16 %v337
        %v357 = vunpack.c.l.b16 %v338
        %v358 = vpack.c.b16 %v357, %v356
        %v361 = vsel %vm242, %v353, 0
        %363 = vmatprep.subr.bf16.mxu0 0
        %364 = vmatpush1.bf16.msra.mxu0 %v358
        %365 = vmatprep.subr.bf16.mxu0 0
        %366 = vmatpush1.bf16.msra.mxu0 0
        %367 = vmatprep.subr.bf16.mxu0 0
        %368 = vmatpush1.bf16.msra.mxu0 0
        %369 = vmatprep.subr.bf16.mxu0 0
        %370 = vmatpush1.bf16.msra.mxu0 0
        %371 = vmatprep.subr.bf16.mxu0 0
        %372 = vmatpush1.bf16.msra.mxu0 0
        %373 = vmatprep.subr.bf16.mxu0 0
        %374 = vmatpush1.bf16.msra.mxu0 0
        %375 = vmatprep.subr.bf16.mxu0 0
        %376 = vmatpush1.bf16.msra.mxu0 0
        %377 = vmatprep.subr.bf16.mxu0 0
        %378 = vmatpush1.bf16.msra.mxu0 0
        %379 = vmatprep.subr.bf16.mxu0 0
        %380 = vmatpush1.bf16.msra.mxu0 0
        %381 = vmatprep.subr.bf16.mxu0 0
        %382 = vmatpush1.bf16.msra.mxu0 0
        %383 = vmatprep.subr.bf16.mxu0 0
        %384 = vmatpush1.bf16.msra.mxu0 0
        %385 = vmatprep.subr.bf16.mxu0 0
        %386 = vmatpush1.bf16.msra.mxu0 0
        %387 = vmatprep.subr.bf16.mxu0 0
        %388 = vmatpush1.bf16.msra.mxu0 0
        %389 = vmatprep.subr.bf16.mxu0 0
        %390 = vmatpush1.bf16.msra.mxu0 0
        %391 = vmatprep.subr.bf16.mxu0 0
        %392 = vmatpush1.bf16.msra.mxu0 0
        %393 = vmatprep.subr.bf16.mxu0 0
        %394 = vmatpush1.bf16.msra.mxu0 0
        %395 = vmatprep.mubr.bf16.mxu0 0
        %396 = vmatmul.mubr.bf16.gmra.mrb[0].mxu0 %v361
        %v397 = vpop.f32.mrb[0].mxu0
        %v398 = vadd.f32 0.0, %v397
        %v399 = vpop.f32.mrb[0].mxu0
        %v400 = vpop.f32.mrb[0].mxu0
        %v401 = vpop.f32.mrb[0].mxu0
        %402 = vdwg.mxu0
        %v403 = vadd.f32 %v330, %v398
        %s404 = sadd.s32 %s224, 1
        %s405 = smul.addr %s404, 2
        %s406 = scalar_lea.vmem %s206, %s405
        %v407 = vld [vmem:[%s406] sm:$0x1]
        %s408 = scalar_lea.vmem %s2, 24
        %v409 = vld [vmem:[%s408] sm:$0xf]
        %v410 = vld [vmem:[%s408 + $0x4] sm:$0xf]
        %v413 = vunpack.c.l.b16 %v409
        %v414 = vunpack.c.l.b16 %v410
        %v415 = vpack.c.b16 %v414, %v413
        %v418 = vsel %vm242, %v407, 0
        %420 = vmatprep.subr.bf16.mxu0 0
        %421 = vmatpush1.bf16.msra.mxu0 %v415
        %422 = vmatprep.subr.bf16.mxu0 0
        %423 = vmatpush1.bf16.msra.mxu0 0
        %424 = vmatprep.subr.bf16.mxu0 0
        %425 = vmatpush1.bf16.msra.mxu0 0
        %426 = vmatprep.subr.bf16.mxu0 0
        %427 = vmatpush1.bf16.msra.mxu0 0
        %428 = vmatprep.subr.bf16.mxu0 0
        %429 = vmatpush1.bf16.msra.mxu0 0
        %430 = vmatprep.subr.bf16.mxu0 0
        %431 = vmatpush1.bf16.msra.mxu0 0
        %432 = vmatprep.subr.bf16.mxu0 0
        %433 = vmatpush1.bf16.msra.mxu0 0
        %434 = vmatprep.subr.bf16.mxu0 0
        %435 = vmatpush1.bf16.msra.mxu0 0
        %436 = vmatprep.subr.bf16.mxu0 0
        %437 = vmatpush1.bf16.msra.mxu0 0
        %438 = vmatprep.subr.bf16.mxu0 0
        %439 = vmatpush1.bf16.msra.mxu0 0
        %440 = vmatprep.subr.bf16.mxu0 0
        %441 = vmatpush1.bf16.msra.mxu0 0
        %442 = vmatprep.subr.bf16.mxu0 0
        %443 = vmatpush1.bf16.msra.mxu0 0
        %444 = vmatprep.subr.bf16.mxu0 0
        %445 = vmatpush1.bf16.msra.mxu0 0
        %446 = vmatprep.subr.bf16.mxu0 0
        %447 = vmatpush1.bf16.msra.mxu0 0
        %448 = vmatprep.subr.bf16.mxu0 0
        %449 = vmatpush1.bf16.msra.mxu0 0
        %450 = vmatprep.subr.bf16.mxu0 0
        %451 = vmatpush1.bf16.msra.mxu0 0
        %452 = vmatprep.mubr.bf16.mxu0 0
        %453 = vmatmul.mubr.bf16.gmra.mrb[0].mxu0 %v418
        %v454 = vpop.f32.mrb[0].mxu0
        %v455 = vadd.f32 0.0, %v454
        %v456 = vpop.f32.mrb[0].mxu0
        %v457 = vpop.f32.mrb[0].mxu0
        %v458 = vpop.f32.mrb[0].mxu0
        %459 = vdwg.mxu0
        %v460 = vadd.f32 %v403, %v455
        %s461 = smul.addr %s404, 2
        %s462 = scalar_lea.vmem %s211, %s461
        %v463 = vld [vmem:[%s462] sm:$0x1]
        %s464 = scalar_lea.vmem %s2, 32
        %v465 = vld [vmem:[%s464] sm:$0xf]
        %v466 = vld [vmem:[%s464 + $0x4] sm:$0xf]
        %v469 = vunpack.c.l.b16 %v465
        %v470 = vunpack.c.l.b16 %v466
        %v471 = vpack.c.b16 %v470, %v469
        %v474 = vsel %vm242, %v463, 0
        %476 = vmatprep.subr.bf16.mxu0 0
        %477 = vmatpush1.bf16.msra.mxu0 %v471
        %478 = vmatprep.subr.bf16.mxu0 0
        %479 = vmatpush1.bf16.msra.mxu0 0
        %480 = vmatprep.subr.bf16.mxu0 0
        %481 = vmatpush1.bf16.msra.mxu0 0
        %482 = vmatprep.subr.bf16.mxu0 0
        %483 = vmatpush1.bf16.msra.mxu0 0
        %484 = vmatprep.subr.bf16.mxu0 0
        %485 = vmatpush1.bf16.msra.mxu0 0
        %486 = vmatprep.subr.bf16.mxu0 0
        %487 = vmatpush1.bf16.msra.mxu0 0
        %488 = vmatprep.subr.bf16.mxu0 0
        %489 = vmatpush1.bf16.msra.mxu0 0
        %490 = vmatprep.subr.bf16.mxu0 0
        %491 = vmatpush1.bf16.msra.mxu0 0
        %492 = vmatprep.subr.bf16.mxu0 0
        %493 = vmatpush1.bf16.msra.mxu0 0
        %494 = vmatprep.subr.bf16.mxu0 0
        %495 = vmatpush1.bf16.msra.mxu0 0
        %496 = vmatprep.subr.bf16.mxu0 0
        %497 = vmatpush1.bf16.msra.mxu0 0
        %498 = vmatprep.subr.bf16.mxu0 0
        %499 = vmatpush1.bf16.msra.mxu0 0
        %500 = vmatprep.subr.bf16.mxu0 0
        %501 = vmatpush1.bf16.msra.mxu0 0
        %502 = vmatprep.subr.bf16.mxu0 0
        %503 = vmatpush1.bf16.msra.mxu0 0
        %504 = vmatprep.subr.bf16.mxu0 0
        %505 = vmatpush1.bf16.msra.mxu0 0
        %506 = vmatprep.subr.bf16.mxu0 0
        %507 = vmatpush1.bf16.msra.mxu0 0
        %508 = vmatprep.mubr.bf16.mxu0 0
        %509 = vmatmul.mubr.bf16.gmra.mrb[0].mxu0 %v474
        %v510 = vpop.f32.mrb[0].mxu0
        %v511 = vadd.f32 0.0, %v510
        %v512 = vpop.f32.mrb[0].mxu0
        %v513 = vpop.f32.mrb[0].mxu0
        %v514 = vpop.f32.mrb[0].mxu0
        %515 = vdwg.mxu0
        %v516 = vadd.f32 %v460, %v511
        %v517 = vld [vmem:[%s406] sm:$0x3]
        %s518 = scalar_lea.vmem %s2, 40
        %v519 = vld [vmem:[%s518] sm:$0xf]
        %v520 = vld [vmem:[%s518 + $0x4] sm:$0xf]
        %v523 = vunpack.c.l.s4 1983009808
        %v524 = vunpack.c.0.s8 %v523
        %v525 = vlaneseq
        %v526 = vshrl.u32 %v525, 7
        %v527 = vsub.s32 %v524, %v526
        %v528 = vrot.slane %v517, %v527
        %v530 = vshrl.u32 %v528, 16
        %v532 = vshll.u32 %v528, 16
        %v534 = vrot.slane %v532, 1
        %v535 = vor.u32 %v530, %v534
        %v538 = vunpack.c.l.b16 %v519
        %v539 = vunpack.c.l.b16 %v520
        %v540 = vpack.c.b16 %v539, %v538
        %v543 = vsel %vm242, %v535, 0
        %545 = vmatprep.subr.bf16.mxu0 0
        %546 = vmatpush1.bf16.msra.mxu0 %v540
        %547 = vmatprep.subr.bf16.mxu0 0
        %548 = vmatpush1.bf16.msra.mxu0 0
        %549 = vmatprep.subr.bf16.mxu0 0
        %550 = vmatpush1.bf16.msra.mxu0 0
        %551 = vmatprep.subr.bf16.mxu0 0
        %552 = vmatpush1.bf16.msra.mxu0 0
        %553 = vmatprep.subr.bf16.mxu0 0
        %554 = vmatpush1.bf16.msra.mxu0 0
        %555 = vmatprep.subr.bf16.mxu0 0
        %556 = vmatpush1.bf16.msra.mxu0 0
        %557 = vmatprep.subr.bf16.mxu0 0
        %558 = vmatpush1.bf16.msra.mxu0 0
        %559 = vmatprep.subr.bf16.mxu0 0
        %560 = vmatpush1.bf16.msra.mxu0 0
        %561 = vmatprep.subr.bf16.mxu0 0
        %562 = vmatpush1.bf16.msra.mxu0 0
        %563 = vmatprep.subr.bf16.mxu0 0
        %564 = vmatpush1.bf16.msra.mxu0 0
        %565 = vmatprep.subr.bf16.mxu0 0
        %566 = vmatpush1.bf16.msra.mxu0 0
        %567 = vmatprep.subr.bf16.mxu0 0
        %568 = vmatpush1.bf16.msra.mxu0 0
        %569 = vmatprep.subr.bf16.mxu0 0
        %570 = vmatpush1.bf16.msra.mxu0 0
        %571 = vmatprep.subr.bf16.mxu0 0
        %572 = vmatpush1.bf16.msra.mxu0 0
        %573 = vmatprep.subr.bf16.mxu0 0
        %574 = vmatpush1.bf16.msra.mxu0 0
        %575 = vmatprep.subr.bf16.mxu0 0
        %576 = vmatpush1.bf16.msra.mxu0 0
        %577 = vmatprep.mubr.bf16.mxu0 0
        %578 = vmatmul.mubr.bf16.gmra.mrb[0].mxu0 %v543
        %v579 = vpop.f32.mrb[0].mxu0
        %v580 = vadd.f32 0.0, %v579
        %v581 = vpop.f32.mrb[0].mxu0
        %v582 = vpop.f32.mrb[0].mxu0
        %v583 = vpop.f32.mrb[0].mxu0
        %584 = vdwg.mxu0
        %v585 = vadd.f32 %v516, %v580
        %s586 = sadd.s32 %s224, 2
        %s587 = smul.addr %s586, 2
        %s588 = scalar_lea.vmem %s206, %s587
        %v589 = vld [vmem:[%s588] sm:$0x1]
        %s590 = scalar_lea.vmem %s2, 48
        %v591 = vld [vmem:[%s590] sm:$0xf]
        %v592 = vld [vmem:[%s590 + $0x4] sm:$0xf]
        %v595 = vunpack.c.l.b16 %v591
        %v596 = vunpack.c.l.b16 %v592
        %v597 = vpack.c.b16 %v596, %v595
        %v600 = vsel %vm242, %v589, 0
        %602 = vmatprep.subr.bf16.mxu0 0
        %603 = vmatpush1.bf16.msra.mxu0 %v597
        %604 = vmatprep.subr.bf16.mxu0 0
        %605 = vmatpush1.bf16.msra.mxu0 0
        %606 = vmatprep.subr.bf16.mxu0 0
        %607 = vmatpush1.bf16.msra.mxu0 0
        %608 = vmatprep.subr.bf16.mxu0 0
        %609 = vmatpush1.bf16.msra.mxu0 0
        %610 = vmatprep.subr.bf16.mxu0 0
        %611 = vmatpush1.bf16.msra.mxu0 0
        %612 = vmatprep.subr.bf16.mxu0 0
        %613 = vmatpush1.bf16.msra.mxu0 0
        %614 = vmatprep.subr.bf16.mxu0 0
        %615 = vmatpush1.bf16.msra.mxu0 0
        %616 = vmatprep.subr.bf16.mxu0 0
        %617 = vmatpush1.bf16.msra.mxu0 0
        %618 = vmatprep.subr.bf16.mxu0 0
        %619 = vmatpush1.bf16.msra.mxu0 0
        %620 = vmatprep.subr.bf16.mxu0 0
        %621 = vmatpush1.bf16.msra.mxu0 0
        %622 = vmatprep.subr.bf16.mxu0 0
        %623 = vmatpush1.bf16.msra.mxu0 0
        %624 = vmatprep.subr.bf16.mxu0 0
        %625 = vmatpush1.bf16.msra.mxu0 0
        %626 = vmatprep.subr.bf16.mxu0 0
        %627 = vmatpush1.bf16.msra.mxu0 0
        %628 = vmatprep.subr.bf16.mxu0 0
        %629 = vmatpush1.bf16.msra.mxu0 0
        %630 = vmatprep.subr.bf16.mxu0 0
        %631 = vmatpush1.bf16.msra.mxu0 0
        %632 = vmatprep.subr.bf16.mxu0 0
        %633 = vmatpush1.bf16.msra.mxu0 0
        %634 = vmatprep.mubr.bf16.mxu0 0
        %635 = vmatmul.mubr.bf16.gmra.mrb[0].mxu0 %v600
        %v636 = vpop.f32.mrb[0].mxu0
        %v637 = vadd.f32 0.0, %v636
        %v638 = vpop.f32.mrb[0].mxu0
        %v639 = vpop.f32.mrb[0].mxu0
        %v640 = vpop.f32.mrb[0].mxu0
        %641 = vdwg.mxu0
        %v642 = vadd.f32 %v585, %v637
        %s643 = smul.addr %s586, 2
        %s644 = scalar_lea.vmem %s211, %s643
        %v645 = vld [vmem:[%s644] sm:$0x1]
        %s646 = scalar_lea.vmem %s2, 56
        %v647 = vld [vmem:[%s646] sm:$0xf]
        %v648 = vld [vmem:[%s646 + $0x4] sm:$0xf]
        %v651 = vunpack.c.l.b16 %v647
        %v652 = vunpack.c.l.b16 %v648
        %v653 = vpack.c.b16 %v652, %v651
        %v656 = vsel %vm242, %v645, 0
        %658 = vmatprep.subr.bf16.mxu0 0
        %659 = vmatpush1.bf16.msra.mxu0 %v653
        %660 = vmatprep.subr.bf16.mxu0 0
        %661 = vmatpush1.bf16.msra.mxu0 0
        %662 = vmatprep.subr.bf16.mxu0 0
        %663 = vmatpush1.bf16.msra.mxu0 0
        %664 = vmatprep.subr.bf16.mxu0 0
        %665 = vmatpush1.bf16.msra.mxu0 0
        %666 = vmatprep.subr.bf16.mxu0 0
        %667 = vmatpush1.bf16.msra.mxu0 0
        %668 = vmatprep.subr.bf16.mxu0 0
        %669 = vmatpush1.bf16.msra.mxu0 0
        %670 = vmatprep.subr.bf16.mxu0 0
        %671 = vmatpush1.bf16.msra.mxu0 0
        %672 = vmatprep.subr.bf16.mxu0 0
        %673 = vmatpush1.bf16.msra.mxu0 0
        %674 = vmatprep.subr.bf16.mxu0 0
        %675 = vmatpush1.bf16.msra.mxu0 0
        %676 = vmatprep.subr.bf16.mxu0 0
        %677 = vmatpush1.bf16.msra.mxu0 0
        %678 = vmatprep.subr.bf16.mxu0 0
        %679 = vmatpush1.bf16.msra.mxu0 0
        %680 = vmatprep.subr.bf16.mxu0 0
        %681 = vmatpush1.bf16.msra.mxu0 0
        %682 = vmatprep.subr.bf16.mxu0 0
        %683 = vmatpush1.bf16.msra.mxu0 0
        %684 = vmatprep.subr.bf16.mxu0 0
        %685 = vmatpush1.bf16.msra.mxu0 0
        %686 = vmatprep.subr.bf16.mxu0 0
        %687 = vmatpush1.bf16.msra.mxu0 0
        %688 = vmatprep.subr.bf16.mxu0 0
        %689 = vmatpush1.bf16.msra.mxu0 0
        %690 = vmatprep.mubr.bf16.mxu0 0
        %691 = vmatmul.mubr.bf16.gmra.mrb[0].mxu0 %v656
        %v692 = vpop.f32.mrb[0].mxu0
        %v693 = vadd.f32 0.0, %v692
        %v694 = vpop.f32.mrb[0].mxu0
        %v695 = vpop.f32.mrb[0].mxu0
        %v696 = vpop.f32.mrb[0].mxu0
        %697 = vdwg.mxu0
        %v698 = vadd.f32 %v642, %v693
        %v699 = vld [vmem:[%s588] sm:$0x3]
        %s700 = scalar_lea.vmem %s2, 64
        %v701 = vld [vmem:[%s700] sm:$0xf]
        %v702 = vld [vmem:[%s700 + $0x4] sm:$0xf]
        %v705 = vunpack.c.l.s4 1983009808
        %v706 = vunpack.c.0.s8 %v705
        %v707 = vlaneseq
        %v708 = vshrl.u32 %v707, 7
        %v709 = vsub.s32 %v706, %v708
        %v710 = vrot.slane %v699, %v709
        %v712 = vshrl.u32 %v710, 16
        %v714 = vshll.u32 %v710, 16
        %v716 = vrot.slane %v714, 1
        %v717 = vor.u32 %v712, %v716
        %v720 = vunpack.c.l.b16 %v701
        %v721 = vunpack.c.l.b16 %v702
        %v722 = vpack.c.b16 %v721, %v720
        %v725 = vsel %vm242, %v717, 0
        %727 = vmatprep.subr.bf16.mxu0 0
        %728 = vmatpush1.bf16.msra.mxu0 %v722
        %729 = vmatprep.subr.bf16.mxu0 0
        %730 = vmatpush1.bf16.msra.mxu0 0
        %731 = vmatprep.subr.bf16.mxu0 0
        %732 = vmatpush1.bf16.msra.mxu0 0
        %733 = vmatprep.subr.bf16.mxu0 0
        %734 = vmatpush1.bf16.msra.mxu0 0
        %735 = vmatprep.subr.bf16.mxu0 0
        %736 = vmatpush1.bf16.msra.mxu0 0
        %737 = vmatprep.subr.bf16.mxu0 0
        %738 = vmatpush1.bf16.msra.mxu0 0
        %739 = vmatprep.subr.bf16.mxu0 0
        %740 = vmatpush1.bf16.msra.mxu0 0
        %741 = vmatprep.subr.bf16.mxu0 0
        %742 = vmatpush1.bf16.msra.mxu0 0
        %743 = vmatprep.subr.bf16.mxu0 0
        %744 = vmatpush1.bf16.msra.mxu0 0
        %745 = vmatprep.subr.bf16.mxu0 0
        %746 = vmatpush1.bf16.msra.mxu0 0
        %747 = vmatprep.subr.bf16.mxu0 0
        %748 = vmatpush1.bf16.msra.mxu0 0
        %749 = vmatprep.subr.bf16.mxu0 0
        %750 = vmatpush1.bf16.msra.mxu0 0
        %751 = vmatprep.subr.bf16.mxu0 0
        %752 = vmatpush1.bf16.msra.mxu0 0
        %753 = vmatprep.subr.bf16.mxu0 0
        %754 = vmatpush1.bf16.msra.mxu0 0
        %755 = vmatprep.subr.bf16.mxu0 0
        %756 = vmatpush1.bf16.msra.mxu0 0
        %757 = vmatprep.subr.bf16.mxu0 0
        %758 = vmatpush1.bf16.msra.mxu0 0
        %759 = vmatprep.mubr.bf16.mxu0 0
        %760 = vmatmul.mubr.bf16.gmra.mrb[0].mxu0 %v725
        %v761 = vpop.f32.mrb[0].mxu0
        %v762 = vadd.f32 0.0, %v761
        %v763 = vpop.f32.mrb[0].mxu0
        %v764 = vpop.f32.mrb[0].mxu0
        %v765 = vpop.f32.mrb[0].mxu0
        %766 = vdwg.mxu0
        %v767 = vadd.f32 %v698, %v762
        %v769 = vlaneseq
        %v770 = vshrl.u32 %v769, 7
        %v771 = vsub.s32 0, %v770
        %v772 = vrot.slane %v217, %v771
        %v774 = vadd.f32 %v767, %v772
        %v775 = vmul.f32 %v774, 0.5
        %v776 = vmul.f32 %v774, 0.044715
        %v777 = vmul.f32 %v776, %v774
        %v778 = vmul.f32 %v777, %v774
        %v779 = vadd.f32 %v774, %v778
        %v780 = vmul.f32 %v779, 0.7978846
        %v781 = vtanh.pop %v780
        %v782 = vadd.f32 %v781, 1.0
        %v783 = vmul.f32 %v775, %v782
        %v784 = vpack.c.bf16 %v783, %v783
        %s785 = scalar_lea.vmem %s215, %s219
        %vm786 = vcmask 122880
        %787 = vst.msk [vmem:[%s785] sm:$0x1] %vm786, %v784
      $region41: #{deep_encoder.10} parent=35 // loop_footer
        %s223 = sadd.s32 1, %s219
      $region42: #{deep_encoder.10} parent=35 // loop_footer_branch
        %218 = sbr.rel target = $region38
      $region43: #{deep_encoder.10} parent=35 // loop_exit
        _
      %p788 = scmp.lt.s32.totalorder %s15, 1
      %s789 = scalar_select %p788, %s15, 1
      %s790 = smul.addr %s789, 2
      %s791 = scalar_lea.vmem %s4, %s790
      // Predicated region
      $region44: #{deep_encoder.10} parent=35 // pred_check
        %p792 = pneg %p127
      $region45: #{deep_encoder.10} parent=35 // pred_check_branch
        %794 = sbr.rel (%p792) target = $region47
      $region46: #{deep_encoder.10} parent=35 // pred_region
        _
      $region47: #{deep_encoder.10} parent=35 // pred_fallthru
        _
    $region36: #{deep_encoder.10} parent=5 // pred_fallthru
      _
    %p795 = scmp.le.s32.totalorder 2, %s10
    // Predicated region
    $region48: #{deep_encoder.10} parent=5 // pred_check
      %p796 = pneg %p795
    $region49: #{deep_encoder.10} parent=5 // pred_check_branch
      %798 = sbr.rel (%p796) target = $region51
    $region50: #{deep_encoder.10} parent=5 // pred_region
      %s799 = ssub.s32 %s10, 2
      // Predicated region
      $region52: #{deep_encoder.10} parent=50 // pred_check
        %p800 = pneg %p133
      $region53: #{deep_encoder.10} parent=50 // pred_check_branch
        %802 = sbr.rel (%p800) target = $region55
      $region54: #{deep_encoder.10} parent=50 // pred_region
        %p803 = scmp.lt.s32.totalorder %s16, 1
        %s804 = scalar_select %p803, %s16, 1
        %s805 = smul.addr %s804, 2
        %s806 = scalar_lea.vmem %s4, %s805
      $region55: #{deep_encoder.10} parent=50 // pred_fallthru
        _
    $region51: #{deep_encoder.10} parent=5 // pred_fallthru
      _
  $region6: #{deep_encoder.10} parent=0 // loop_footer
    %s14 = sadd.s32 1, %s10
  $region7: #{deep_encoder.10} parent=0 // loop_footer_branch
    %9 = sbr.rel target = $region3
  $region8: #{deep_encoder.10} parent=0 // loop_exit
    _

</llo_original>
